<compile_context>
chip_gen: v6e
topology: v6e:2x2x1
jax: 0.10.0
libtpu: 0.0.40
codegen_flags: <defaults>
</compile_context>

<pallas_src>
import math

import numpy as np
import jax
import jax.numpy as jnp
from jax.experimental import pallas as pl
from jax.experimental.pallas import tpu as pltpu  # noqa: F401  (TPU backend)

HIDDEN_DIM = 64
INPUT_DIM = 51
LATENT_DIM = 16
NUM_LAYERS = 2
SEQUENCE_LENGTH = 5

PAD_IN = 64          # input feature dim 51 zero-padded to 64 (matmul K alignment)
PAD_LANE = 128       # lane-dense width for bottleneck / output blocks
GATES = 4 * HIDDEN_DIM   # 256


# --------------------------------------------------------------------------
# Packed-parameter layout: one (TOTAL_ROWS, 256) f32 buffer, 8-aligned rows.
# --------------------------------------------------------------------------
def _build_layout():
    layout, row = {}, 0

    def add(name, nrows):
        nonlocal row
        layout[name] = row
        row += nrows

    add("enc0_wih", PAD_IN)        # (51->64, 256)   x @ W_ih  (encoder layer 0)
    add("enc0_whh", HIDDEN_DIM)    # (64, 256)
    add("enc1_wih", HIDDEN_DIM)    # (64, 256)
    add("enc1_whh", HIDDEN_DIM)    # (64, 256)
    add("dec0_whh", HIDDEN_DIM)    # (64, 256)   decoder L0 input is zero -> no W_ih
    add("dec1_wih", HIDDEN_DIM)    # (64, 256)
    add("dec1_whh", HIDDEN_DIM)    # (64, 256)
    add("w1", HIDDEN_DIM)          # (64, 128)   hidden_to_latent Linear 1
    add("w2", 2 * HIDDEN_DIM)      # (128, 16->128)  hidden_to_latent Linear 2
    add("w3", PAD_LANE)            # (16->128, 64)   latent_to_hidden
    add("wout", HIDDEN_DIM)        # (64, 51->128)   output Linear
    for name in ("b_e0", "b_e1", "b_d0", "b_d1", "b1", "b2", "b3", "b_out"):
        add(name, 8)               # each bias in its own sublane-aligned 8-row slot
    return layout, row


_LAYOUT, _TOTAL_ROWS = _build_layout()      # _TOTAL_ROWS == 896


# --------------------------------------------------------------------------
# Fused Pallas kernel
# --------------------------------------------------------------------------
def _lstm_cell(gates, c_prev):
    """gates: (B, 4H), column order (i, f, o | g)."""
    H = c_prev.shape[-1]
    sig = jax.nn.sigmoid(gates[:, :3 * H])           # one EUP pass for i, f, o
    i_g = sig[:, 0 * H:1 * H]
    f_g = sig[:, 1 * H:2 * H]
    o_g = sig[:, 2 * H:3 * H]
    g_g = jnp.tanh(gates[:, 3 * H:4 * H])
    c_new = f_g * c_prev + i_g * g_g
    h_new = o_g * jnp.tanh(c_new)
    return h_new, c_new


def _make_fused_kernel(T, B, H):
    G = 4 * H
    L = _LAYOUT

    def kernel(x_ref, p_ref, out_ref):
        f32 = jnp.float32

        def w(name, nrows, ncols):                       # static packed-buffer view
            r = L[name]
            return p_ref[r:r + nrows, :ncols]

        def bias(name, ncols):
            r = L[name]
            return p_ref[r:r + 1, :ncols]

        # ---------------- encoder ----------------
        # Hoisted layer-0 input projection; bias folded in ONCE (not per step).
        xg_all = (jnp.dot(x_ref[...], w("enc0_wih", PAD_IN, G),
                          preferred_element_type=f32)
                  + jnp.broadcast_to(bias("b_e0", G), (T * B, G)))        # (T*B, 4H)

        b_e1 = jnp.broadcast_to(bias("b_e1", G), (B, G))                  # hoisted

        h0 = jnp.zeros((B, H), f32); c0 = jnp.zeros((B, H), f32)
        h1 = jnp.zeros((B, H), f32); c1 = jnp.zeros((B, H), f32)
        for t in range(T):                               # fully unrolled, T = 5
            g0 = (xg_all[t * B:(t + 1) * B, :]
                  + jnp.dot(h0, w("enc0_whh", H, G), preferred_element_type=f32))
            h0, c0 = _lstm_cell(g0, c0)
            # two matmuls instead of concat([h0, h1]) @ W_cat (no per-step lane concat)
            g1 = (jnp.dot(h0, w("enc1_wih", H, G), preferred_element_type=f32)
                  + jnp.dot(h1, w("enc1_whh", H, G), preferred_element_type=f32)
                  + b_e1)
            h1, c1 = _lstm_cell(g1, c1)
        h_enc = h1                                        # hidden[-1] : (B, H)

        # ---------------- bottleneck ----------------
        z = jnp.maximum(
            jnp.dot(h_enc, w("w1", H, 2 * H), preferred_element_type=f32)
            + bias("b1", 2 * H), 0.0)                                     # (B, 128)
        latent = (jnp.dot(z, w("w2", 2 * H, PAD_LANE),
                          preferred_element_type=f32)
                  + bias("b2", PAD_LANE))                 # (B, 128), cols >= 16 are 0
        dec_h = jnp.maximum(
            jnp.dot(latent, w("w3", PAD_LANE, H), preferred_element_type=f32)
            + bias("b3", H), 0.0)                                         # (B, 64)

        # ---------------- decoder ----------------
        b_d0 = jnp.broadcast_to(bias("b_d0", G), (B, G))                  # hoisted
        b_d1 = jnp.broadcast_to(bias("b_d1", G), (B, G))

        hd0, cd0 = dec_h, jnp.zeros((B, H), f32)          # both layers start at dec_h
        hd1, cd1 = dec_h, jnp.zeros((B, H), f32)
        hs = []
        for t in range(T):
            # decoder input sequence is identically zero -> x @ W_ih dropped
            gd0 = jnp.dot(hd0, w("dec0_whh", H, G),
                          preferred_element_type=f32) + b_d0
            hd0, cd0 = _lstm_cell(gd0, cd0)
            gd1 = (jnp.dot(hd0, w("dec1_wih", H, G), preferred_element_type=f32)
                   + jnp.dot(hd1, w("dec1_whh", H, G), preferred_element_type=f32)
                   + b_d1)
            hd1, cd1 = _lstm_cell(gd1, cd1)
            hs.append(hd1)

        # Hoisted output Linear: ONE (T*B,H)@(H,128) matmul + ONE lane-dense store.
        h_stack = jnp.concatenate(hs, axis=0)                             # (T*B, H)
        out_ref[...] = (jnp.dot(h_stack, w("wout", H, PAD_LANE),
                                preferred_element_type=f32)
                        + jnp.broadcast_to(bias("b_out", PAD_LANE),
                                           (T * B, PAD_LANE)))

    return kernel


def lstm_autoencoder_forward(packed_params, x):
    """x: (B, T, input_dim) batch-first (as PyTorch). Returns (B, T, input_dim)."""
    B, T, D = x.shape
    H = HIDDEN_DIM
    # time-major flat (row = t*B + b), features zero-padded to PAD_IN
    x_tm = jnp.transpose(x, (1, 0, 2)).reshape(T * B, D)
    x_pad = jnp.pad(x_tm, ((0, 0), (0, PAD_IN - D)))

    kernel = _make_fused_kernel(T, B, H)
    out_flat = pl.pallas_call(
        kernel,
        out_shape=jax.ShapeDtypeStruct((T * B, PAD_LANE), jnp.float32),
    )(x_pad, packed_params)

    out = out_flat[:, :D].reshape(T, B, D)
    return jnp.transpose(out, (1, 0, 2))


# --------------------------------------------------------------------------
# Parameter init (PyTorch-style uniform bounds) + packing into one buffer
# --------------------------------------------------------------------------
def _uniform(key, shape, bound):
    return jax.random.uniform(key, shape, jnp.float32, -bound, bound)


def _gate_perm(h):
    # PyTorch gate row order (i, f, g, o) -> kernel column order (i, f, o, g)
    idx = np.arange(h)
    return np.concatenate([idx, h + idx, 3 * h + idx, 2 * h + idx])


def _raw_lstm_layer(key, d_in, h):
    k = 1.0 / math.sqrt(h)
    k0, k1, k2, k3 = jax.random.split(key, 4)
    return dict(w_ih=_uniform(k0, (4 * h, d_in), k),   # PyTorch layout (4H, D_in)
                w_hh=_uniform(k1, (4 * h, h), k),
                b_ih=_uniform(k2, (4 * h,), k),
                b_hh=_uniform(k3, (4 * h,), k))


def _raw_linear(key, d_in, d_out):
    k = 1.0 / math.sqrt(d_in)
    k0, k1 = jax.random.split(key, 2)
    return dict(w=_uniform(k0, (d_out, d_in), k),      # PyTorch layout (out, in)
                b=_uniform(k1, (d_out,), k))


def _place(buf, row, mat):
    r, c = mat.shape
    return buf.at[row:row + r, :c].set(mat)


def pack_params(raw):
    H, G = HIDDEN_DIM, GATES
    perm = _gate_perm(H)

    def lstm_math(layer):
        w_ih_t = layer["w_ih"][perm].T                 # (d_in, 4H), gate-permuted cols
        w_hh_t = layer["w_hh"][perm].T                 # (H, 4H)
        b = (layer["b_ih"] + layer["b_hh"])[perm].reshape(1, G)
        return w_ih_t, w_hh_t, b

    e0_wih, e0_whh, b_e0 = lstm_math(raw["enc0"])
    e1_wih, e1_whh, b_e1 = lstm_math(raw["enc1"])
    _,      d0_whh, b_d0 = lstm_math(raw["dec0"])      # decoder L0 W_ih unused (zero input)
    d1_wih, d1_whh, b_d1 = lstm_math(raw["dec1"])

    L = _LAYOUT
    buf = jnp.zeros((_TOTAL_ROWS, G), jnp.float32)
    buf = _place(buf, L["enc0_wih"], e0_wih)           # rows 51..63 stay zero
    buf = _place(buf, L["enc0_whh"], e0_whh)
    buf = _place(buf, L["enc1_wih"], e1_wih)
    buf = _place(buf, L["enc1_whh"], e1_whh)
    buf = _place(buf, L["dec0_whh"], d0_whh)
    buf = _place(buf, L["dec1_wih"], d1_wih)
    buf = _place(buf, L["dec1_whh"], d1_whh)
    buf = _place(buf, L["w1"], raw["h2l1"]["w"].T)     # (64, 128)
    buf = _place(buf, L["w2"], raw["h2l2"]["w"].T)     # (128, 16)
    buf = _place(buf, L["w3"], raw["l2h"]["w"].T)      # (16, 64)
    buf = _place(buf, L["wout"], raw["out"]["w"].T)    # (64, 51)
    buf = _place(buf, L["b_e0"], b_e0)
    buf = _place(buf, L["b_e1"], b_e1)
    buf = _place(buf, L["b_d0"], b_d0)
    buf = _place(buf, L["b_d1"], b_d1)
    buf = _place(buf, L["b1"], raw["h2l1"]["b"].reshape(1, -1))
    buf = _place(buf, L["b2"], raw["h2l2"]["b"].reshape(1, -1))
    buf = _place(buf, L["b3"], raw["l2h"]["b"].reshape(1, -1))
    buf = _place(buf, L["b_out"], raw["out"]["b"].reshape(1, -1))
    return buf


def init_params(key):
    keys = jax.random.split(key, 8)
    raw = dict(
        enc0=_raw_lstm_layer(keys[0], INPUT_DIM, HIDDEN_DIM),
        enc1=_raw_lstm_layer(keys[1], HIDDEN_DIM, HIDDEN_DIM),
        dec0=_raw_lstm_layer(keys[2], HIDDEN_DIM, HIDDEN_DIM),
        dec1=_raw_lstm_layer(keys[3], HIDDEN_DIM, HIDDEN_DIM),
        h2l1=_raw_linear(keys[4], HIDDEN_DIM, 2 * HIDDEN_DIM),
        h2l2=_raw_linear(keys[5], 2 * HIDDEN_DIM, LATENT_DIM),
        l2h=_raw_linear(keys[6], LATENT_DIM, HIDDEN_DIM),
        out=_raw_linear(keys[7], HIDDEN_DIM, INPUT_DIM),
    )
    return raw, pack_params(raw)


# --------------------------------------------------------------------------
# Pure-NumPy reference (PyTorch semantics, eval mode) for correctness check
# --------------------------------------------------------------------------
def _np_lstm(x_seq, layers, h0, c0):
    def sigmoid(v):
        return 1.0 / (1.0 + np.exp(-v))
    T, B, _ = x_seq.shape
    H = np.asarray(layers[0]["w_hh"]).shape[1]
    h = [np.array(h0[l], np.float32) for l in range(len(layers))]
    c = [np.array(c0[l], np.float32) for l in range(len(layers))]
    outs = []
    for t in range(T):
        inp = x_seq[t]
        for l, lay in enumerate(layers):
            w_ih = np.asarray(lay["w_ih"]); w_hh = np.asarray(lay["w_hh"])
            b = np.asarray(lay["b_ih"]) + np.asarray(lay["b_hh"])
            gates = inp @ w_ih.T + h[l] @ w_hh.T + b
            i = sigmoid(gates[:, 0 * H:1 * H]); f = sigmoid(gates[:, 1 * H:2 * H])
            g = np.tanh(gates[:, 2 * H:3 * H]); o = sigmoid(gates[:, 3 * H:4 * H])
            c[l] = f * c[l] + i * g
            h[l] = o * np.tanh(c[l])
            inp = h[l]
        outs.append(inp)
    return np.stack(outs, 0), np.stack(h, 0)


def reference_forward(raw, x):
    x = np.asarray(x, np.float32)
    B, T, _ = x.shape
    H = HIDDEN_DIM
    x_tm = np.transpose(x, (1, 0, 2))
    zeros2 = np.zeros((NUM_LAYERS, B, H), np.float32)
    _, h_enc = _np_lstm(x_tm, [raw["enc0"], raw["enc1"]], zeros2, zeros2)
    h_last = h_enc[-1]
    z = np.maximum(h_last @ np.asarray(raw["h2l1"]["w"]).T + np.asarray(raw["h2l1"]["b"]), 0.0)
    latent = z @ np.asarray(raw["h2l2"]["w"]).T + np.asarray(raw["h2l2"]["b"])
    dec_h = np.maximum(latent @ np.asarray(raw["l2h"]["w"]).T + np.asarray(raw["l2h"]["b"]), 0.0)
    dec_h0 = np.broadcast_to(dec_h, (NUM_LAYERS, B, H)).copy()
    dec_in = np.zeros((T, B, H), np.float32)
    dec_out, _ = _np_lstm(dec_in, [raw["dec0"], raw["dec1"]], dec_h0, np.zeros_like(dec_h0))
    y = dec_out @ np.asarray(raw["out"]["w"]).T + np.asarray(raw["out"]["b"])
    return np.transpose(y, (1, 0, 2))


if __name__ == "__main__":
    key = jax.random.PRNGKey(0)
    k_param, k_x = jax.random.split(key)
    raw_params, packed_params = init_params(k_param)
    x = jax.random.normal(k_x, (2, SEQUENCE_LENGTH, INPUT_DIM), jnp.float32)

    fwd = jax.jit(lstm_autoencoder_forward)
    y = fwd(packed_params, x)
    jax.block_until_ready(y)
    assert y.shape == (2, SEQUENCE_LENGTH, INPUT_DIM)
    assert y.dtype == jnp.float32

    y_ref = reference_forward(raw_params, x)
    max_err = float(np.max(np.abs(np.asarray(y) - y_ref)))
    assert max_err < 1e-2, f"kernel/reference mismatch: max abs err {max_err}"

    print("KERNEL_OK")
</pallas_src>

<mosaic_0001>
module attributes {stable_mosaic.version = 11 : i64} {
  func.func @kernel(%arg0: memref<10x64xf32, #tpu.memory_space<vmem>>, %arg1: memref<896x256xf32, #tpu.memory_space<vmem>>, %arg2: memref<10x128xf32, #tpu.memory_space<vmem>>) attributes {dimension_semantics = [], scalar_prefetch = 0 : i64, scratch_operands = 0 : i64, tpu.core_type = #tpu.core_type<tc>} {
    %c0 = arith.constant 0 : index
    %c0_0 = arith.constant 0 : index
    %0 = vector.load %arg0[%c0, %c0_0] : memref<10x64xf32, #tpu.memory_space<vmem>>, vector<10x64xf32>
    %c0_1 = arith.constant 0 : index
    %c0_2 = arith.constant 0 : index
    %1 = vector.load %arg1[%c0_1, %c0_2] : memref<896x256xf32, #tpu.memory_space<vmem>>, vector<64x256xf32>
    %cst = arith.constant dense<0.000000e+00> : vector<10x256xf32>
    %2 = tpu.matmul %0, %1, %cst {dimension_numbers = #tpu.dot_dimension_numbers<[1], [0], [0], [1], [0, 0, 1, 1], [], []>} : vector<10x64xf32>, vector<64x256xf32>, vector<10x256xf32> -> vector<10x256xf32>
    %c832 = arith.constant 832 : index
    %c0_3 = arith.constant 0 : index
    %3 = vector.load %arg1[%c832, %c0_3] : memref<896x256xf32, #tpu.memory_space<vmem>>, vector<1x256xf32>
    %4 = vector.shape_cast %3 : vector<1x256xf32> to vector<1x256xf32>
    %5 = vector.broadcast %4 : vector<1x256xf32> to vector<10x256xf32>
    %6 = arith.addf %2, %5 : vector<10x256xf32>
    %c840 = arith.constant 840 : index
    %c0_4 = arith.constant 0 : index
    %7 = vector.load %arg1[%c840, %c0_4] : memref<896x256xf32, #tpu.memory_space<vmem>>, vector<1x256xf32>
    %8 = vector.shape_cast %7 : vector<1x256xf32> to vector<1x256xf32>
    %9 = vector.broadcast %8 : vector<1x256xf32> to vector<2x256xf32>
    %cst_5 = arith.constant 0.000000e+00 : f32
    %10 = vector.broadcast %cst_5 : f32 to vector<2x64xf32>
    %cst_6 = arith.constant 0.000000e+00 : f32
    %11 = vector.broadcast %cst_6 : f32 to vector<2x64xf32>
    %cst_7 = arith.constant 0.000000e+00 : f32
    %12 = vector.broadcast %cst_7 : f32 to vector<2x64xf32>
    %cst_8 = arith.constant 0.000000e+00 : f32
    %13 = vector.broadcast %cst_8 : f32 to vector<2x64xf32>
    %14 = vector.extract_strided_slice %6 {offsets = [0, 0], sizes = [2, 256], strides = [1, 1]} : vector<10x256xf32> to vector<2x256xf32>
    %c64 = arith.constant 64 : index
    %c0_9 = arith.constant 0 : index
    %15 = vector.load %arg1[%c64, %c0_9] : memref<896x256xf32, #tpu.memory_space<vmem>>, vector<64x256xf32>
    %cst_10 = arith.constant dense<0.000000e+00> : vector<2x256xf32>
    %16 = tpu.matmul %10, %15, %cst_10 {dimension_numbers = #tpu.dot_dimension_numbers<[1], [0], [0], [1], [0, 0, 1, 1], [], []>} : vector<2x64xf32>, vector<64x256xf32>, vector<2x256xf32> -> vector<2x256xf32>
    %17 = arith.addf %14, %16 : vector<2x256xf32>
    %18 = vector.extract_strided_slice %17 {offsets = [0, 0], sizes = [2, 192], strides = [1, 1]} : vector<2x256xf32> to vector<2x192xf32>
    %19 = arith.negf %18 : vector<2x192xf32>
    %20 = math.exp %19 : vector<2x192xf32>
    %cst_11 = arith.constant 1.000000e+00 : f32
    %21 = vector.broadcast %cst_11 : f32 to vector<2x192xf32>
    %22 = arith.addf %21, %20 : vector<2x192xf32>
    %23 = arith.divf %21, %22 : vector<2x192xf32>
    %24 = vector.extract_strided_slice %23 {offsets = [0, 0], sizes = [2, 64], strides = [1, 1]} : vector<2x192xf32> to vector<2x64xf32>
    %25 = vector.extract_strided_slice %23 {offsets = [0, 64], sizes = [2, 64], strides = [1, 1]} : vector<2x192xf32> to vector<2x64xf32>
    %26 = vector.extract_strided_slice %23 {offsets = [0, 128], sizes = [2, 64], strides = [1, 1]} : vector<2x192xf32> to vector<2x64xf32>
    %27 = vector.extract_strided_slice %17 {offsets = [0, 192], sizes = [2, 64], strides = [1, 1]} : vector<2x256xf32> to vector<2x64xf32>
    %28 = math.tanh %27 : vector<2x64xf32>
    %29 = arith.mulf %25, %11 : vector<2x64xf32>
    %30 = arith.mulf %24, %28 : vector<2x64xf32>
    %31 = arith.addf %29, %30 : vector<2x64xf32>
    %32 = math.tanh %31 : vector<2x64xf32>
    %33 = arith.mulf %26, %32 : vector<2x64xf32>
    %c128 = arith.constant 128 : index
    %c0_12 = arith.constant 0 : index
    %34 = vector.load %arg1[%c128, %c0_12] : memref<896x256xf32, #tpu.memory_space<vmem>>, vector<64x256xf32>
    %cst_13 = arith.constant dense<0.000000e+00> : vector<2x256xf32>
    %35 = tpu.matmul %33, %34, %cst_13 {dimension_numbers = #tpu.dot_dimension_numbers<[1], [0], [0], [1], [0, 0, 1, 1], [], []>} : vector<2x64xf32>, vector<64x256xf32>, vector<2x256xf32> -> vector<2x256xf32>
    %c192 = arith.constant 192 : index
    %c0_14 = arith.constant 0 : index
    %36 = vector.load %arg1[%c192, %c0_14] : memref<896x256xf32, #tpu.memory_space<vmem>>, vector<64x256xf32>
    %cst_15 = arith.constant dense<0.000000e+00> : vector<2x256xf32>
    %37 = tpu.matmul %12, %36, %cst_15 {dimension_numbers = #tpu.dot_dimension_numbers<[1], [0], [0], [1], [0, 0, 1, 1], [], []>} : vector<2x64xf32>, vector<64x256xf32>, vector<2x256xf32> -> vector<2x256xf32>
    %38 = arith.addf %35, %37 : vector<2x256xf32>
    %39 = arith.addf %38, %9 : vector<2x256xf32>
    %40 = vector.extract_strided_slice %39 {offsets = [0, 0], sizes = [2, 192], strides = [1, 1]} : vector<2x256xf32> to vector<2x192xf32>
    %41 = arith.negf %40 : vector<2x192xf32>
    %42 = math.exp %41 : vector<2x192xf32>
    %cst_16 = arith.constant 1.000000e+00 : f32
    %43 = vector.broadcast %cst_16 : f32 to vector<2x192xf32>
    %44 = arith.addf %43, %42 : vector<2x192xf32>
    %45 = arith.divf %43, %44 : vector<2x192xf32>
    %46 = vector.extract_strided_slice %45 {offsets = [0, 0], sizes = [2, 64], strides = [1, 1]} : vector<2x192xf32> to vector<2x64xf32>
    %47 = vector.extract_strided_slice %45 {offsets = [0, 64], sizes = [2, 64], strides = [1, 1]} : vector<2x192xf32> to vector<2x64xf32>
    %48 = vector.extract_strided_slice %45 {offsets = [0, 128], sizes = [2, 64], strides = [1, 1]} : vector<2x192xf32> to vector<2x64xf32>
    %49 = vector.extract_strided_slice %39 {offsets = [0, 192], sizes = [2, 64], strides = [1, 1]} : vector<2x256xf32> to vector<2x64xf32>
    %50 = math.tanh %49 : vector<2x64xf32>
    %51 = arith.mulf %47, %13 : vector<2x64xf32>
    %52 = arith.mulf %46, %50 : vector<2x64xf32>
    %53 = arith.addf %51, %52 : vector<2x64xf32>
    %54 = math.tanh %53 : vector<2x64xf32>
    %55 = arith.mulf %48, %54 : vector<2x64xf32>
    %56 = vector.extract_strided_slice %6 {offsets = [2, 0], sizes = [2, 256], strides = [1, 1]} : vector<10x256xf32> to vector<2x256xf32>
    %c64_17 = arith.constant 64 : index
    %c0_18 = arith.constant 0 : index
    %57 = vector.load %arg1[%c64_17, %c0_18] : memref<896x256xf32, #tpu.memory_space<vmem>>, vector<64x256xf32>
    %cst_19 = arith.constant dense<0.000000e+00> : vector<2x256xf32>
    %58 = tpu.matmul %33, %57, %cst_19 {dimension_numbers = #tpu.dot_dimension_numbers<[1], [0], [0], [1], [0, 0, 1, 1], [], []>} : vector<2x64xf32>, vector<64x256xf32>, vector<2x256xf32> -> vector<2x256xf32>
    %59 = arith.addf %56, %58 : vector<2x256xf32>
    %60 = vector.extract_strided_slice %59 {offsets = [0, 0], sizes = [2, 192], strides = [1, 1]} : vector<2x256xf32> to vector<2x192xf32>
    %61 = arith.negf %60 : vector<2x192xf32>
    %62 = math.exp %61 : vector<2x192xf32>
    %cst_20 = arith.constant 1.000000e+00 : f32
    %63 = vector.broadcast %cst_20 : f32 to vector<2x192xf32>
    %64 = arith.addf %63, %62 : vector<2x192xf32>
    %65 = arith.divf %63, %64 : vector<2x192xf32>
    %66 = vector.extract_strided_slice %65 {offsets = [0, 0], sizes = [2, 64], strides = [1, 1]} : vector<2x192xf32> to vector<2x64xf32>
    %67 = vector.extract_strided_slice %65 {offsets = [0, 64], sizes = [2, 64], strides = [1, 1]} : vector<2x192xf32> to vector<2x64xf32>
    %68 = vector.extract_strided_slice %65 {offsets = [0, 128], sizes = [2, 64], strides = [1, 1]} : vector<2x192xf32> to vector<2x64xf32>
    %69 = vector.extract_strided_slice %59 {offsets = [0, 192], sizes = [2, 64], strides = [1, 1]} : vector<2x256xf32> to vector<2x64xf32>
    %70 = math.tanh %69 : vector<2x64xf32>
    %71 = arith.mulf %67, %31 : vector<2x64xf32>
    %72 = arith.mulf %66, %70 : vector<2x64xf32>
    %73 = arith.addf %71, %72 : vector<2x64xf32>
    %74 = math.tanh %73 : vector<2x64xf32>
    %75 = arith.mulf %68, %74 : vector<2x64xf32>
    %c128_21 = arith.constant 128 : index
    %c0_22 = arith.constant 0 : index
    %76 = vector.load %arg1[%c128_21, %c0_22] : memref<896x256xf32, #tpu.memory_space<vmem>>, vector<64x256xf32>
    %cst_23 = arith.constant dense<0.000000e+00> : vector<2x256xf32>
    %77 = tpu.matmul %75, %76, %cst_23 {dimension_numbers = #tpu.dot_dimension_numbers<[1], [0], [0], [1], [0, 0, 1, 1], [], []>} : vector<2x64xf32>, vector<64x256xf32>, vector<2x256xf32> -> vector<2x256xf32>
    %c192_24 = arith.constant 192 : index
    %c0_25 = arith.constant 0 : index
    %78 = vector.load %arg1[%c192_24, %c0_25] : memref<896x256xf32, #tpu.memory_space<vmem>>, vector<64x256xf32>
    %cst_26 = arith.constant dense<0.000000e+00> : vector<2x256xf32>
    %79 = tpu.matmul %55, %78, %cst_26 {dimension_numbers = #tpu.dot_dimension_numbers<[1], [0], [0], [1], [0, 0, 1, 1], [], []>} : vector<2x64xf32>, vector<64x256xf32>, vector<2x256xf32> -> vector<2x256xf32>
    %80 = arith.addf %77, %79 : vector<2x256xf32>
    %81 = arith.addf %80, %9 : vector<2x256xf32>
    %82 = vector.extract_strided_slice %81 {offsets = [0, 0], sizes = [2, 192], strides = [1, 1]} : vector<2x256xf32> to vector<2x192xf32>
    %83 = arith.negf %82 : vector<2x192xf32>
    %84 = math.exp %83 : vector<2x192xf32>
    %cst_27 = arith.constant 1.000000e+00 : f32
    %85 = vector.broadcast %cst_27 : f32 to vector<2x192xf32>
    %86 = arith.addf %85, %84 : vector<2x192xf32>
    %87 = arith.divf %85, %86 : vector<2x192xf32>
    %88 = vector.extract_strided_slice %87 {offsets = [0, 0], sizes = [2, 64], strides = [1, 1]} : vector<2x192xf32> to vector<2x64xf32>
    %89 = vector.extract_strided_slice %87 {offsets = [0, 64], sizes = [2, 64], strides = [1, 1]} : vector<2x192xf32> to vector<2x64xf32>
    %90 = vector.extract_strided_slice %87 {offsets = [0, 128], sizes = [2, 64], strides = [1, 1]} : vector<2x192xf32> to vector<2x64xf32>
    %91 = vector.extract_strided_slice %81 {offsets = [0, 192], sizes = [2, 64], strides = [1, 1]} : vector<2x256xf32> to vector<2x64xf32>
    %92 = math.tanh %91 : vector<2x64xf32>
    %93 = arith.mulf %89, %53 : vector<2x64xf32>
    %94 = arith.mulf %88, %92 : vector<2x64xf32>
    %95 = arith.addf %93, %94 : vector<2x64xf32>
    %96 = math.tanh %95 : vector<2x64xf32>
    %97 = arith.mulf %90, %96 : vector<2x64xf32>
    %98 = vector.extract_strided_slice %6 {offsets = [4, 0], sizes = [2, 256], strides = [1, 1]} : vector<10x256xf32> to vector<2x256xf32>
    %c64_28 = arith.constant 64 : index
    %c0_29 = arith.constant 0 : index
    %99 = vector.load %arg1[%c64_28, %c0_29] : memref<896x256xf32, #tpu.memory_space<vmem>>, vector<64x256xf32>
    %cst_30 = arith.constant dense<0.000000e+00> : vector<2x256xf32>
    %100 = tpu.matmul %75, %99, %cst_30 {dimension_numbers = #tpu.dot_dimension_numbers<[1], [0], [0], [1], [0, 0, 1, 1], [], []>} : vector<2x64xf32>, vector<64x256xf32>, vector<2x256xf32> -> vector<2x256xf32>
    %101 = arith.addf %98, %100 : vector<2x256xf32>
    %102 = vector.extract_strided_slice %101 {offsets = [0, 0], sizes = [2, 192], strides = [1, 1]} : vector<2x256xf32> to vector<2x192xf32>
    %103 = arith.negf %102 : vector<2x192xf32>
    %104 = math.exp %103 : vector<2x192xf32>
    %cst_31 = arith.constant 1.000000e+00 : f32
    %105 = vector.broadcast %cst_31 : f32 to vector<2x192xf32>
    %106 = arith.addf %105, %104 : vector<2x192xf32>
    %107 = arith.divf %105, %106 : vector<2x192xf32>
    %108 = vector.extract_strided_slice %107 {offsets = [0, 0], sizes = [2, 64], strides = [1, 1]} : vector<2x192xf32> to vector<2x64xf32>
    %109 = vector.extract_strided_slice %107 {offsets = [0, 64], sizes = [2, 64], strides = [1, 1]} : vector<2x192xf32> to vector<2x64xf32>
    %110 = vector.extract_strided_slice %107 {offsets = [0, 128], sizes = [2, 64], strides = [1, 1]} : vector<2x192xf32> to vector<2x64xf32>
    %111 = vector.extract_strided_slice %101 {offsets = [0, 192], sizes = [2, 64], strides = [1, 1]} : vector<2x256xf32> to vector<2x64xf32>
    %112 = math.tanh %111 : vector<2x64xf32>
    %113 = arith.mulf %109, %73 : vector<2x64xf32>
    %114 = arith.mulf %108, %112 : vector<2x64xf32>
    %115 = arith.addf %113, %114 : vector<2x64xf32>
    %116 = math.tanh %115 : vector<2x64xf32>
    %117 = arith.mulf %110, %116 : vector<2x64xf32>
    %c128_32 = arith.constant 128 : index
    %c0_33 = arith.constant 0 : index
    %118 = vector.load %arg1[%c128_32, %c0_33] : memref<896x256xf32, #tpu.memory_space<vmem>>, vector<64x256xf32>
    %cst_34 = arith.constant dense<0.000000e+00> : vector<2x256xf32>
    %119 = tpu.matmul %117, %118, %cst_34 {dimension_numbers = #tpu.dot_dimension_numbers<[1], [0], [0], [1], [0, 0, 1, 1], [], []>} : vector<2x64xf32>, vector<64x256xf32>, vector<2x256xf32> -> vector<2x256xf32>
    %c192_35 = arith.constant 192 : index
    %c0_36 = arith.constant 0 : index
    %120 = vector.load %arg1[%c192_35, %c0_36] : memref<896x256xf32, #tpu.memory_space<vmem>>, vector<64x256xf32>
    %cst_37 = arith.constant dense<0.000000e+00> : vector<2x256xf32>
    %121 = tpu.matmul %97, %120, %cst_37 {dimension_numbers = #tpu.dot_dimension_numbers<[1], [0], [0], [1], [0, 0, 1, 1], [], []>} : vector<2x64xf32>, vector<64x256xf32>, vector<2x256xf32> -> vector<2x256xf32>
    %122 = arith.addf %119, %121 : vector<2x256xf32>
    %123 = arith.addf %122, %9 : vector<2x256xf32>
    %124 = vector.extract_strided_slice %123 {offsets = [0, 0], sizes = [2, 192], strides = [1, 1]} : vector<2x256xf32> to vector<2x192xf32>
    %125 = arith.negf %124 : vector<2x192xf32>
    %126 = math.exp %125 : vector<2x192xf32>
    %cst_38 = arith.constant 1.000000e+00 : f32
    %127 = vector.broadcast %cst_38 : f32 to vector<2x192xf32>
    %128 = arith.addf %127, %126 : vector<2x192xf32>
    %129 = arith.divf %127, %128 : vector<2x192xf32>
    %130 = vector.extract_strided_slice %129 {offsets = [0, 0], sizes = [2, 64], strides = [1, 1]} : vector<2x192xf32> to vector<2x64xf32>
    %131 = vector.extract_strided_slice %129 {offsets = [0, 64], sizes = [2, 64], strides = [1, 1]} : vector<2x192xf32> to vector<2x64xf32>
    %132 = vector.extract_strided_slice %129 {offsets = [0, 128], sizes = [2, 64], strides = [1, 1]} : vector<2x192xf32> to vector<2x64xf32>
    %133 = vector.extract_strided_slice %123 {offsets = [0, 192], sizes = [2, 64], strides = [1, 1]} : vector<2x256xf32> to vector<2x64xf32>
    %134 = math.tanh %133 : vector<2x64xf32>
    %135 = arith.mulf %131, %95 : vector<2x64xf32>
    %136 = arith.mulf %130, %134 : vector<2x64xf32>
    %137 = arith.addf %135, %136 : vector<2x64xf32>
    %138 = math.tanh %137 : vector<2x64xf32>
    %139 = arith.mulf %132, %138 : vector<2x64xf32>
    %140 = vector.extract_strided_slice %6 {offsets = [6, 0], sizes = [2, 256], strides = [1, 1]} : vector<10x256xf32> to vector<2x256xf32>
    %c64_39 = arith.constant 64 : index
    %c0_40 = arith.constant 0 : index
    %141 = vector.load %arg1[%c64_39, %c0_40] : memref<896x256xf32, #tpu.memory_space<vmem>>, vector<64x256xf32>
    %cst_41 = arith.constant dense<0.000000e+00> : vector<2x256xf32>
    %142 = tpu.matmul %117, %141, %cst_41 {dimension_numbers = #tpu.dot_dimension_numbers<[1], [0], [0], [1], [0, 0, 1, 1], [], []>} : vector<2x64xf32>, vector<64x256xf32>, vector<2x256xf32> -> vector<2x256xf32>
    %143 = arith.addf %140, %142 : vector<2x256xf32>
    %144 = vector.extract_strided_slice %143 {offsets = [0, 0], sizes = [2, 192], strides = [1, 1]} : vector<2x256xf32> to vector<2x192xf32>
    %145 = arith.negf %144 : vector<2x192xf32>
    %146 = math.exp %145 : vector<2x192xf32>
    %cst_42 = arith.constant 1.000000e+00 : f32
    %147 = vector.broadcast %cst_42 : f32 to vector<2x192xf32>
    %148 = arith.addf %147, %146 : vector<2x192xf32>
    %149 = arith.divf %147, %148 : vector<2x192xf32>
    %150 = vector.extract_strided_slice %149 {offsets = [0, 0], sizes = [2, 64], strides = [1, 1]} : vector<2x192xf32> to vector<2x64xf32>
    %151 = vector.extract_strided_slice %149 {offsets = [0, 64], sizes = [2, 64], strides = [1, 1]} : vector<2x192xf32> to vector<2x64xf32>
    %152 = vector.extract_strided_slice %149 {offsets = [0, 128], sizes = [2, 64], strides = [1, 1]} : vector<2x192xf32> to vector<2x64xf32>
    %153 = vector.extract_strided_slice %143 {offsets = [0, 192], sizes = [2, 64], strides = [1, 1]} : vector<2x256xf32> to vector<2x64xf32>
    %154 = math.tanh %153 : vector<2x64xf32>
    %155 = arith.mulf %151, %115 : vector<2x64xf32>
    %156 = arith.mulf %150, %154 : vector<2x64xf32>
    %157 = arith.addf %155, %156 : vector<2x64xf32>
    %158 = math.tanh %157 : vector<2x64xf32>
    %159 = arith.mulf %152, %158 : vector<2x64xf32>
    %c128_43 = arith.constant 128 : index
    %c0_44 = arith.constant 0 : index
    %160 = vector.load %arg1[%c128_43, %c0_44] : memref<896x256xf32, #tpu.memory_space<vmem>>, vector<64x256xf32>
    %cst_45 = arith.constant dense<0.000000e+00> : vector<2x256xf32>
    %161 = tpu.matmul %159, %160, %cst_45 {dimension_numbers = #tpu.dot_dimension_numbers<[1], [0], [0], [1], [0, 0, 1, 1], [], []>} : vector<2x64xf32>, vector<64x256xf32>, vector<2x256xf32> -> vector<2x256xf32>
    %c192_46 = arith.constant 192 : index
    %c0_47 = arith.constant 0 : index
    %162 = vector.load %arg1[%c192_46, %c0_47] : memref<896x256xf32, #tpu.memory_space<vmem>>, vector<64x256xf32>
    %cst_48 = arith.constant dense<0.000000e+00> : vector<2x256xf32>
    %163 = tpu.matmul %139, %162, %cst_48 {dimension_numbers = #tpu.dot_dimension_numbers<[1], [0], [0], [1], [0, 0, 1, 1], [], []>} : vector<2x64xf32>, vector<64x256xf32>, vector<2x256xf32> -> vector<2x256xf32>
    %164 = arith.addf %161, %163 : vector<2x256xf32>
    %165 = arith.addf %164, %9 : vector<2x256xf32>
    %166 = vector.extract_strided_slice %165 {offsets = [0, 0], sizes = [2, 192], strides = [1, 1]} : vector<2x256xf32> to vector<2x192xf32>
    %167 = arith.negf %166 : vector<2x192xf32>
    %168 = math.exp %167 : vector<2x192xf32>
    %cst_49 = arith.constant 1.000000e+00 : f32
    %169 = vector.broadcast %cst_49 : f32 to vector<2x192xf32>
    %170 = arith.addf %169, %168 : vector<2x192xf32>
    %171 = arith.divf %169, %170 : vector<2x192xf32>
    %172 = vector.extract_strided_slice %171 {offsets = [0, 0], sizes = [2, 64], strides = [1, 1]} : vector<2x192xf32> to vector<2x64xf32>
    %173 = vector.extract_strided_slice %171 {offsets = [0, 64], sizes = [2, 64], strides = [1, 1]} : vector<2x192xf32> to vector<2x64xf32>
    %174 = vector.extract_strided_slice %171 {offsets = [0, 128], sizes = [2, 64], strides = [1, 1]} : vector<2x192xf32> to vector<2x64xf32>
    %175 = vector.extract_strided_slice %165 {offsets = [0, 192], sizes = [2, 64], strides = [1, 1]} : vector<2x256xf32> to vector<2x64xf32>
    %176 = math.tanh %175 : vector<2x64xf32>
    %177 = arith.mulf %173, %137 : vector<2x64xf32>
    %178 = arith.mulf %172, %176 : vector<2x64xf32>
    %179 = arith.addf %177, %178 : vector<2x64xf32>
    %180 = math.tanh %179 : vector<2x64xf32>
    %181 = arith.mulf %174, %180 : vector<2x64xf32>
    %182 = vector.extract_strided_slice %6 {offsets = [8, 0], sizes = [2, 256], strides = [1, 1]} : vector<10x256xf32> to vector<2x256xf32>
    %c64_50 = arith.constant 64 : index
    %c0_51 = arith.constant 0 : index
    %183 = vector.load %arg1[%c64_50, %c0_51] : memref<896x256xf32, #tpu.memory_space<vmem>>, vector<64x256xf32>
    %cst_52 = arith.constant dense<0.000000e+00> : vector<2x256xf32>
    %184 = tpu.matmul %159, %183, %cst_52 {dimension_numbers = #tpu.dot_dimension_numbers<[1], [0], [0], [1], [0, 0, 1, 1], [], []>} : vector<2x64xf32>, vector<64x256xf32>, vector<2x256xf32> -> vector<2x256xf32>
    %185 = arith.addf %182, %184 : vector<2x256xf32>
    %186 = vector.extract_strided_slice %185 {offsets = [0, 0], sizes = [2, 192], strides = [1, 1]} : vector<2x256xf32> to vector<2x192xf32>
    %187 = arith.negf %186 : vector<2x192xf32>
    %188 = math.exp %187 : vector<2x192xf32>
    %cst_53 = arith.constant 1.000000e+00 : f32
    %189 = vector.broadcast %cst_53 : f32 to vector<2x192xf32>
    %190 = arith.addf %189, %188 : vector<2x192xf32>
    %191 = arith.divf %189, %190 : vector<2x192xf32>
    %192 = vector.extract_strided_slice %191 {offsets = [0, 0], sizes = [2, 64], strides = [1, 1]} : vector<2x192xf32> to vector<2x64xf32>
    %193 = vector.extract_strided_slice %191 {offsets = [0, 64], sizes = [2, 64], strides = [1, 1]} : vector<2x192xf32> to vector<2x64xf32>
    %194 = vector.extract_strided_slice %191 {offsets = [0, 128], sizes = [2, 64], strides = [1, 1]} : vector<2x192xf32> to vector<2x64xf32>
    %195 = vector.extract_strided_slice %185 {offsets = [0, 192], sizes = [2, 64], strides = [1, 1]} : vector<2x256xf32> to vector<2x64xf32>
    %196 = math.tanh %195 : vector<2x64xf32>
    %197 = arith.mulf %193, %157 : vector<2x64xf32>
    %198 = arith.mulf %192, %196 : vector<2x64xf32>
    %199 = arith.addf %197, %198 : vector<2x64xf32>
    %200 = math.tanh %199 : vector<2x64xf32>
    %201 = arith.mulf %194, %200 : vector<2x64xf32>
    %c128_54 = arith.constant 128 : index
    %c0_55 = arith.constant 0 : index
    %202 = vector.load %arg1[%c128_54, %c0_55] : memref<896x256xf32, #tpu.memory_space<vmem>>, vector<64x256xf32>
    %cst_56 = arith.constant dense<0.000000e+00> : vector<2x256xf32>
    %203 = tpu.matmul %201, %202, %cst_56 {dimension_numbers = #tpu.dot_dimension_numbers<[1], [0], [0], [1], [0, 0, 1, 1], [], []>} : vector<2x64xf32>, vector<64x256xf32>, vector<2x256xf32> -> vector<2x256xf32>
    %c192_57 = arith.constant 192 : index
    %c0_58 = arith.constant 0 : index
    %204 = vector.load %arg1[%c192_57, %c0_58] : memref<896x256xf32, #tpu.memory_space<vmem>>, vector<64x256xf32>
    %cst_59 = arith.constant dense<0.000000e+00> : vector<2x256xf32>
    %205 = tpu.matmul %181, %204, %cst_59 {dimension_numbers = #tpu.dot_dimension_numbers<[1], [0], [0], [1], [0, 0, 1, 1], [], []>} : vector<2x64xf32>, vector<64x256xf32>, vector<2x256xf32> -> vector<2x256xf32>
    %206 = arith.addf %203, %205 : vector<2x256xf32>
    %207 = arith.addf %206, %9 : vector<2x256xf32>
    %208 = vector.extract_strided_slice %207 {offsets = [0, 0], sizes = [2, 192], strides = [1, 1]} : vector<2x256xf32> to vector<2x192xf32>
    %209 = arith.negf %208 : vector<2x192xf32>
    %210 = math.exp %209 : vector<2x192xf32>
    %cst_60 = arith.constant 1.000000e+00 : f32
    %211 = vector.broadcast %cst_60 : f32 to vector<2x192xf32>
    %212 = arith.addf %211, %210 : vector<2x192xf32>
    %213 = arith.divf %211, %212 : vector<2x192xf32>
    %214 = vector.extract_strided_slice %213 {offsets = [0, 0], sizes = [2, 64], strides = [1, 1]} : vector<2x192xf32> to vector<2x64xf32>
    %215 = vector.extract_strided_slice %213 {offsets = [0, 64], sizes = [2, 64], strides = [1, 1]} : vector<2x192xf32> to vector<2x64xf32>
    %216 = vector.extract_strided_slice %213 {offsets = [0, 128], sizes = [2, 64], strides = [1, 1]} : vector<2x192xf32> to vector<2x64xf32>
    %217 = vector.extract_strided_slice %207 {offsets = [0, 192], sizes = [2, 64], strides = [1, 1]} : vector<2x256xf32> to vector<2x64xf32>
    %218 = math.tanh %217 : vector<2x64xf32>
    %219 = arith.mulf %215, %179 : vector<2x64xf32>
    %220 = arith.mulf %214, %218 : vector<2x64xf32>
    %221 = arith.addf %219, %220 : vector<2x64xf32>
    %222 = math.tanh %221 : vector<2x64xf32>
    %223 = arith.mulf %216, %222 : vector<2x64xf32>
    %c448 = arith.constant 448 : index
    %c0_61 = arith.constant 0 : index
    %224 = vector.load %arg1[%c448, %c0_61] : memref<896x256xf32, #tpu.memory_space<vmem>>, vector<64x128xf32>
    %cst_62 = arith.constant dense<0.000000e+00> : vector<2x128xf32>
    %225 = tpu.matmul %223, %224, %cst_62 {dimension_numbers = #tpu.dot_dimension_numbers<[1], [0], [0], [1], [0, 0, 1, 1], [], []>} : vector<2x64xf32>, vector<64x128xf32>, vector<2x128xf32> -> vector<2x128xf32>
    %c864 = arith.constant 864 : index
    %c0_63 = arith.constant 0 : index
    %226 = vector.load %arg1[%c864, %c0_63] : memref<896x256xf32, #tpu.memory_space<vmem>>, vector<1x128xf32>
    %227 = vector.broadcast %226 : vector<1x128xf32> to vector<2x128xf32>
    %228 = arith.addf %225, %227 : vector<2x128xf32>
    %cst_64 = arith.constant 0.000000e+00 : f32
    %229 = vector.broadcast %cst_64 : f32 to vector<2x128xf32>
    %230 = arith.maximumf %228, %229 : vector<2x128xf32>
    %c512 = arith.constant 512 : index
    %c0_65 = arith.constant 0 : index
    %231 = vector.load %arg1[%c512, %c0_65] : memref<896x256xf32, #tpu.memory_space<vmem>>, vector<128x128xf32>
    %cst_66 = arith.constant dense<0.000000e+00> : vector<2x128xf32>
    %232 = tpu.matmul %230, %231, %cst_66 {dimension_numbers = #tpu.dot_dimension_numbers<[1], [0], [0], [1], [0, 0, 1, 1], [], []>} : vector<2x128xf32>, vector<128x128xf32>, vector<2x128xf32> -> vector<2x128xf32>
    %c872 = arith.constant 872 : index
    %c0_67 = arith.constant 0 : index
    %233 = vector.load %arg1[%c872, %c0_67] : memref<896x256xf32, #tpu.memory_space<vmem>>, vector<1x128xf32>
    %234 = vector.broadcast %233 : vector<1x128xf32> to vector<2x128xf32>
    %235 = arith.addf %232, %234 : vector<2x128xf32>
    %c640 = arith.constant 640 : index
    %c0_68 = arith.constant 0 : index
    %236 = vector.load %arg1[%c640, %c0_68] : memref<896x256xf32, #tpu.memory_space<vmem>>, vector<128x64xf32>
    %cst_69 = arith.constant dense<0.000000e+00> : vector<2x64xf32>
    %237 = tpu.matmul %235, %236, %cst_69 {dimension_numbers = #tpu.dot_dimension_numbers<[1], [0], [0], [1], [0, 0, 1, 1], [], []>} : vector<2x128xf32>, vector<128x64xf32>, vector<2x64xf32> -> vector<2x64xf32>
    %c880 = arith.constant 880 : index
    %c0_70 = arith.constant 0 : index
    %238 = vector.load %arg1[%c880, %c0_70] : memref<896x256xf32, #tpu.memory_space<vmem>>, vector<1x64xf32>
    %239 = vector.broadcast %238 : vector<1x64xf32> to vector<2x64xf32>
    %240 = arith.addf %237, %239 : vector<2x64xf32>
    %cst_71 = arith.constant 0.000000e+00 : f32
    %241 = vector.broadcast %cst_71 : f32 to vector<2x64xf32>
    %242 = arith.maximumf %240, %241 : vector<2x64xf32>
    %c848 = arith.constant 848 : index
    %c0_72 = arith.constant 0 : index
    %243 = vector.load %arg1[%c848, %c0_72] : memref<896x256xf32, #tpu.memory_space<vmem>>, vector<1x256xf32>
    %244 = vector.shape_cast %243 : vector<1x256xf32> to vector<1x256xf32>
    %245 = vector.broadcast %244 : vector<1x256xf32> to vector<2x256xf32>
    %c856 = arith.constant 856 : index
    %c0_73 = arith.constant 0 : index
    %246 = vector.load %arg1[%c856, %c0_73] : memref<896x256xf32, #tpu.memory_space<vmem>>, vector<1x256xf32>
    %247 = vector.shape_cast %246 : vector<1x256xf32> to vector<1x256xf32>
    %248 = vector.broadcast %247 : vector<1x256xf32> to vector<2x256xf32>
    %cst_74 = arith.constant 0.000000e+00 : f32
    %249 = vector.broadcast %cst_74 : f32 to vector<2x64xf32>
    %cst_75 = arith.constant 0.000000e+00 : f32
    %250 = vector.broadcast %cst_75 : f32 to vector<2x64xf32>
    %c256 = arith.constant 256 : index
    %c0_76 = arith.constant 0 : index
    %251 = vector.load %arg1[%c256, %c0_76] : memref<896x256xf32, #tpu.memory_space<vmem>>, vector<64x256xf32>
    %cst_77 = arith.constant dense<0.000000e+00> : vector<2x256xf32>
    %252 = tpu.matmul %242, %251, %cst_77 {dimension_numbers = #tpu.dot_dimension_numbers<[1], [0], [0], [1], [0, 0, 1, 1], [], []>} : vector<2x64xf32>, vector<64x256xf32>, vector<2x256xf32> -> vector<2x256xf32>
    %253 = arith.addf %252, %245 : vector<2x256xf32>
    %254 = vector.extract_strided_slice %253 {offsets = [0, 0], sizes = [2, 192], strides = [1, 1]} : vector<2x256xf32> to vector<2x192xf32>
    %255 = arith.negf %254 : vector<2x192xf32>
    %256 = math.exp %255 : vector<2x192xf32>
    %cst_78 = arith.constant 1.000000e+00 : f32
    %257 = vector.broadcast %cst_78 : f32 to vector<2x192xf32>
    %258 = arith.addf %257, %256 : vector<2x192xf32>
    %259 = arith.divf %257, %258 : vector<2x192xf32>
    %260 = vector.extract_strided_slice %259 {offsets = [0, 0], sizes = [2, 64], strides = [1, 1]} : vector<2x192xf32> to vector<2x64xf32>
    %261 = vector.extract_strided_slice %259 {offsets = [0, 64], sizes = [2, 64], strides = [1, 1]} : vector<2x192xf32> to vector<2x64xf32>
    %262 = vector.extract_strided_slice %259 {offsets = [0, 128], sizes = [2, 64], strides = [1, 1]} : vector<2x192xf32> to vector<2x64xf32>
    %263 = vector.extract_strided_slice %253 {offsets = [0, 192], sizes = [2, 64], strides = [1, 1]} : vector<2x256xf32> to vector<2x64xf32>
    %264 = math.tanh %263 : vector<2x64xf32>
    %265 = arith.mulf %261, %249 : vector<2x64xf32>
    %266 = arith.mulf %260, %264 : vector<2x64xf32>
    %267 = arith.addf %265, %266 : vector<2x64xf32>
    %268 = math.tanh %267 : vector<2x64xf32>
    %269 = arith.mulf %262, %268 : vector<2x64xf32>
    %c320 = arith.constant 320 : index
    %c0_79 = arith.constant 0 : index
    %270 = vector.load %arg1[%c320, %c0_79] : memref<896x256xf32, #tpu.memory_space<vmem>>, vector<64x256xf32>
    %cst_80 = arith.constant dense<0.000000e+00> : vector<2x256xf32>
    %271 = tpu.matmul %269, %270, %cst_80 {dimension_numbers = #tpu.dot_dimension_numbers<[1], [0], [0], [1], [0, 0, 1, 1], [], []>} : vector<2x64xf32>, vector<64x256xf32>, vector<2x256xf32> -> vector<2x256xf32>
    %c384 = arith.constant 384 : index
    %c0_81 = arith.constant 0 : index
    %272 = vector.load %arg1[%c384, %c0_81] : memref<896x256xf32, #tpu.memory_space<vmem>>, vector<64x256xf32>
    %cst_82 = arith.constant dense<0.000000e+00> : vector<2x256xf32>
    %273 = tpu.matmul %242, %272, %cst_82 {dimension_numbers = #tpu.dot_dimension_numbers<[1], [0], [0], [1], [0, 0, 1, 1], [], []>} : vector<2x64xf32>, vector<64x256xf32>, vector<2x256xf32> -> vector<2x256xf32>
    %274 = arith.addf %271, %273 : vector<2x256xf32>
    %275 = arith.addf %274, %248 : vector<2x256xf32>
    %276 = vector.extract_strided_slice %275 {offsets = [0, 0], sizes = [2, 192], strides = [1, 1]} : vector<2x256xf32> to vector<2x192xf32>
    %277 = arith.negf %276 : vector<2x192xf32>
    %278 = math.exp %277 : vector<2x192xf32>
    %cst_83 = arith.constant 1.000000e+00 : f32
    %279 = vector.broadcast %cst_83 : f32 to vector<2x192xf32>
    %280 = arith.addf %279, %278 : vector<2x192xf32>
    %281 = arith.divf %279, %280 : vector<2x192xf32>
    %282 = vector.extract_strided_slice %281 {offsets = [0, 0], sizes = [2, 64], strides = [1, 1]} : vector<2x192xf32> to vector<2x64xf32>
    %283 = vector.extract_strided_slice %281 {offsets = [0, 64], sizes = [2, 64], strides = [1, 1]} : vector<2x192xf32> to vector<2x64xf32>
    %284 = vector.extract_strided_slice %281 {offsets = [0, 128], sizes = [2, 64], strides = [1, 1]} : vector<2x192xf32> to vector<2x64xf32>
    %285 = vector.extract_strided_slice %275 {offsets = [0, 192], sizes = [2, 64], strides = [1, 1]} : vector<2x256xf32> to vector<2x64xf32>
    %286 = math.tanh %285 : vector<2x64xf32>
    %287 = arith.mulf %283, %250 : vector<2x64xf32>
    %288 = arith.mulf %282, %286 : vector<2x64xf32>
    %289 = arith.addf %287, %288 : vector<2x64xf32>
    %290 = math.tanh %289 : vector<2x64xf32>
    %291 = arith.mulf %284, %290 : vector<2x64xf32>
    %c256_84 = arith.constant 256 : index
    %c0_85 = arith.constant 0 : index
    %292 = vector.load %arg1[%c256_84, %c0_85] : memref<896x256xf32, #tpu.memory_space<vmem>>, vector<64x256xf32>
    %cst_86 = arith.constant dense<0.000000e+00> : vector<2x256xf32>
    %293 = tpu.matmul %269, %292, %cst_86 {dimension_numbers = #tpu.dot_dimension_numbers<[1], [0], [0], [1], [0, 0, 1, 1], [], []>} : vector<2x64xf32>, vector<64x256xf32>, vector<2x256xf32> -> vector<2x256xf32>
    %294 = arith.addf %293, %245 : vector<2x256xf32>
    %295 = vector.extract_strided_slice %294 {offsets = [0, 0], sizes = [2, 192], strides = [1, 1]} : vector<2x256xf32> to vector<2x192xf32>
    %296 = arith.negf %295 : vector<2x192xf32>
    %297 = math.exp %296 : vector<2x192xf32>
    %cst_87 = arith.constant 1.000000e+00 : f32
    %298 = vector.broadcast %cst_87 : f32 to vector<2x192xf32>
    %299 = arith.addf %298, %297 : vector<2x192xf32>
    %300 = arith.divf %298, %299 : vector<2x192xf32>
    %301 = vector.extract_strided_slice %300 {offsets = [0, 0], sizes = [2, 64], strides = [1, 1]} : vector<2x192xf32> to vector<2x64xf32>
    %302 = vector.extract_strided_slice %300 {offsets = [0, 64], sizes = [2, 64], strides = [1, 1]} : vector<2x192xf32> to vector<2x64xf32>
    %303 = vector.extract_strided_slice %300 {offsets = [0, 128], sizes = [2, 64], strides = [1, 1]} : vector<2x192xf32> to vector<2x64xf32>
    %304 = vector.extract_strided_slice %294 {offsets = [0, 192], sizes = [2, 64], strides = [1, 1]} : vector<2x256xf32> to vector<2x64xf32>
    %305 = math.tanh %304 : vector<2x64xf32>
    %306 = arith.mulf %302, %267 : vector<2x64xf32>
    %307 = arith.mulf %301, %305 : vector<2x64xf32>
    %308 = arith.addf %306, %307 : vector<2x64xf32>
    %309 = math.tanh %308 : vector<2x64xf32>
    %310 = arith.mulf %303, %309 : vector<2x64xf32>
    %c320_88 = arith.constant 320 : index
    %c0_89 = arith.constant 0 : index
    %311 = vector.load %arg1[%c320_88, %c0_89] : memref<896x256xf32, #tpu.memory_space<vmem>>, vector<64x256xf32>
    %cst_90 = arith.constant dense<0.000000e+00> : vector<2x256xf32>
    %312 = tpu.matmul %310, %311, %cst_90 {dimension_numbers = #tpu.dot_dimension_numbers<[1], [0], [0], [1], [0, 0, 1, 1], [], []>} : vector<2x64xf32>, vector<64x256xf32>, vector<2x256xf32> -> vector<2x256xf32>
    %c384_91 = arith.constant 384 : index
    %c0_92 = arith.constant 0 : index
    %313 = vector.load %arg1[%c384_91, %c0_92] : memref<896x256xf32, #tpu.memory_space<vmem>>, vector<64x256xf32>
    %cst_93 = arith.constant dense<0.000000e+00> : vector<2x256xf32>
    %314 = tpu.matmul %291, %313, %cst_93 {dimension_numbers = #tpu.dot_dimension_numbers<[1], [0], [0], [1], [0, 0, 1, 1], [], []>} : vector<2x64xf32>, vector<64x256xf32>, vector<2x256xf32> -> vector<2x256xf32>
    %315 = arith.addf %312, %314 : vector<2x256xf32>
    %316 = arith.addf %315, %248 : vector<2x256xf32>
    %317 = vector.extract_strided_slice %316 {offsets = [0, 0], sizes = [2, 192], strides = [1, 1]} : vector<2x256xf32> to vector<2x192xf32>
    %318 = arith.negf %317 : vector<2x192xf32>
    %319 = math.exp %318 : vector<2x192xf32>
    %cst_94 = arith.constant 1.000000e+00 : f32
    %320 = vector.broadcast %cst_94 : f32 to vector<2x192xf32>
    %321 = arith.addf %320, %319 : vector<2x192xf32>
    %322 = arith.divf %320, %321 : vector<2x192xf32>
    %323 = vector.extract_strided_slice %322 {offsets = [0, 0], sizes = [2, 64], strides = [1, 1]} : vector<2x192xf32> to vector<2x64xf32>
    %324 = vector.extract_strided_slice %322 {offsets = [0, 64], sizes = [2, 64], strides = [1, 1]} : vector<2x192xf32> to vector<2x64xf32>
    %325 = vector.extract_strided_slice %322 {offsets = [0, 128], sizes = [2, 64], strides = [1, 1]} : vector<2x192xf32> to vector<2x64xf32>
    %326 = vector.extract_strided_slice %316 {offsets = [0, 192], sizes = [2, 64], strides = [1, 1]} : vector<2x256xf32> to vector<2x64xf32>
    %327 = math.tanh %326 : vector<2x64xf32>
    %328 = arith.mulf %324, %289 : vector<2x64xf32>
    %329 = arith.mulf %323, %327 : vector<2x64xf32>
    %330 = arith.addf %328, %329 : vector<2x64xf32>
    %331 = math.tanh %330 : vector<2x64xf32>
    %332 = arith.mulf %325, %331 : vector<2x64xf32>
    %c256_95 = arith.constant 256 : index
    %c0_96 = arith.constant 0 : index
    %333 = vector.load %arg1[%c256_95, %c0_96] : memref<896x256xf32, #tpu.memory_space<vmem>>, vector<64x256xf32>
    %cst_97 = arith.constant dense<0.000000e+00> : vector<2x256xf32>
    %334 = tpu.matmul %310, %333, %cst_97 {dimension_numbers = #tpu.dot_dimension_numbers<[1], [0], [0], [1], [0, 0, 1, 1], [], []>} : vector<2x64xf32>, vector<64x256xf32>, vector<2x256xf32> -> vector<2x256xf32>
    %335 = arith.addf %334, %245 : vector<2x256xf32>
    %336 = vector.extract_strided_slice %335 {offsets = [0, 0], sizes = [2, 192], strides = [1, 1]} : vector<2x256xf32> to vector<2x192xf32>
    %337 = arith.negf %336 : vector<2x192xf32>
    %338 = math.exp %337 : vector<2x192xf32>
    %cst_98 = arith.constant 1.000000e+00 : f32
    %339 = vector.broadcast %cst_98 : f32 to vector<2x192xf32>
    %340 = arith.addf %339, %338 : vector<2x192xf32>
    %341 = arith.divf %339, %340 : vector<2x192xf32>
    %342 = vector.extract_strided_slice %341 {offsets = [0, 0], sizes = [2, 64], strides = [1, 1]} : vector<2x192xf32> to vector<2x64xf32>
    %343 = vector.extract_strided_slice %341 {offsets = [0, 64], sizes = [2, 64], strides = [1, 1]} : vector<2x192xf32> to vector<2x64xf32>
    %344 = vector.extract_strided_slice %341 {offsets = [0, 128], sizes = [2, 64], strides = [1, 1]} : vector<2x192xf32> to vector<2x64xf32>
    %345 = vector.extract_strided_slice %335 {offsets = [0, 192], sizes = [2, 64], strides = [1, 1]} : vector<2x256xf32> to vector<2x64xf32>
    %346 = math.tanh %345 : vector<2x64xf32>
    %347 = arith.mulf %343, %308 : vector<2x64xf32>
    %348 = arith.mulf %342, %346 : vector<2x64xf32>
    %349 = arith.addf %347, %348 : vector<2x64xf32>
    %350 = math.tanh %349 : vector<2x64xf32>
    %351 = arith.mulf %344, %350 : vector<2x64xf32>
    %c320_99 = arith.constant 320 : index
    %c0_100 = arith.constant 0 : index
    %352 = vector.load %arg1[%c320_99, %c0_100] : memref<896x256xf32, #tpu.memory_space<vmem>>, vector<64x256xf32>
    %cst_101 = arith.constant dense<0.000000e+00> : vector<2x256xf32>
    %353 = tpu.matmul %351, %352, %cst_101 {dimension_numbers = #tpu.dot_dimension_numbers<[1], [0], [0], [1], [0, 0, 1, 1], [], []>} : vector<2x64xf32>, vector<64x256xf32>, vector<2x256xf32> -> vector<2x256xf32>
    %c384_102 = arith.constant 384 : index
    %c0_103 = arith.constant 0 : index
    %354 = vector.load %arg1[%c384_102, %c0_103] : memref<896x256xf32, #tpu.memory_space<vmem>>, vector<64x256xf32>
    %cst_104 = arith.constant dense<0.000000e+00> : vector<2x256xf32>
    %355 = tpu.matmul %332, %354, %cst_104 {dimension_numbers = #tpu.dot_dimension_numbers<[1], [0], [0], [1], [0, 0, 1, 1], [], []>} : vector<2x64xf32>, vector<64x256xf32>, vector<2x256xf32> -> vector<2x256xf32>
    %356 = arith.addf %353, %355 : vector<2x256xf32>
    %357 = arith.addf %356, %248 : vector<2x256xf32>
    %358 = vector.extract_strided_slice %357 {offsets = [0, 0], sizes = [2, 192], strides = [1, 1]} : vector<2x256xf32> to vector<2x192xf32>
    %359 = arith.negf %358 : vector<2x192xf32>
    %360 = math.exp %359 : vector<2x192xf32>
    %cst_105 = arith.constant 1.000000e+00 : f32
    %361 = vector.broadcast %cst_105 : f32 to vector<2x192xf32>
    %362 = arith.addf %361, %360 : vector<2x192xf32>
    %363 = arith.divf %361, %362 : vector<2x192xf32>
    %364 = vector.extract_strided_slice %363 {offsets = [0, 0], sizes = [2, 64], strides = [1, 1]} : vector<2x192xf32> to vector<2x64xf32>
    %365 = vector.extract_strided_slice %363 {offsets = [0, 64], sizes = [2, 64], strides = [1, 1]} : vector<2x192xf32> to vector<2x64xf32>
    %366 = vector.extract_strided_slice %363 {offsets = [0, 128], sizes = [2, 64], strides = [1, 1]} : vector<2x192xf32> to vector<2x64xf32>
    %367 = vector.extract_strided_slice %357 {offsets = [0, 192], sizes = [2, 64], strides = [1, 1]} : vector<2x256xf32> to vector<2x64xf32>
    %368 = math.tanh %367 : vector<2x64xf32>
    %369 = arith.mulf %365, %330 : vector<2x64xf32>
    %370 = arith.mulf %364, %368 : vector<2x64xf32>
    %371 = arith.addf %369, %370 : vector<2x64xf32>
    %372 = math.tanh %371 : vector<2x64xf32>
    %373 = arith.mulf %366, %372 : vector<2x64xf32>
    %c256_106 = arith.constant 256 : index
    %c0_107 = arith.constant 0 : index
    %374 = vector.load %arg1[%c256_106, %c0_107] : memref<896x256xf32, #tpu.memory_space<vmem>>, vector<64x256xf32>
    %cst_108 = arith.constant dense<0.000000e+00> : vector<2x256xf32>
    %375 = tpu.matmul %351, %374, %cst_108 {dimension_numbers = #tpu.dot_dimension_numbers<[1], [0], [0], [1], [0, 0, 1, 1], [], []>} : vector<2x64xf32>, vector<64x256xf32>, vector<2x256xf32> -> vector<2x256xf32>
    %376 = arith.addf %375, %245 : vector<2x256xf32>
    %377 = vector.extract_strided_slice %376 {offsets = [0, 0], sizes = [2, 192], strides = [1, 1]} : vector<2x256xf32> to vector<2x192xf32>
    %378 = arith.negf %377 : vector<2x192xf32>
    %379 = math.exp %378 : vector<2x192xf32>
    %cst_109 = arith.constant 1.000000e+00 : f32
    %380 = vector.broadcast %cst_109 : f32 to vector<2x192xf32>
    %381 = arith.addf %380, %379 : vector<2x192xf32>
    %382 = arith.divf %380, %381 : vector<2x192xf32>
    %383 = vector.extract_strided_slice %382 {offsets = [0, 0], sizes = [2, 64], strides = [1, 1]} : vector<2x192xf32> to vector<2x64xf32>
    %384 = vector.extract_strided_slice %382 {offsets = [0, 64], sizes = [2, 64], strides = [1, 1]} : vector<2x192xf32> to vector<2x64xf32>
    %385 = vector.extract_strided_slice %382 {offsets = [0, 128], sizes = [2, 64], strides = [1, 1]} : vector<2x192xf32> to vector<2x64xf32>
    %386 = vector.extract_strided_slice %376 {offsets = [0, 192], sizes = [2, 64], strides = [1, 1]} : vector<2x256xf32> to vector<2x64xf32>
    %387 = math.tanh %386 : vector<2x64xf32>
    %388 = arith.mulf %384, %349 : vector<2x64xf32>
    %389 = arith.mulf %383, %387 : vector<2x64xf32>
    %390 = arith.addf %388, %389 : vector<2x64xf32>
    %391 = math.tanh %390 : vector<2x64xf32>
    %392 = arith.mulf %385, %391 : vector<2x64xf32>
    %c320_110 = arith.constant 320 : index
    %c0_111 = arith.constant 0 : index
    %393 = vector.load %arg1[%c320_110, %c0_111] : memref<896x256xf32, #tpu.memory_space<vmem>>, vector<64x256xf32>
    %cst_112 = arith.constant dense<0.000000e+00> : vector<2x256xf32>
    %394 = tpu.matmul %392, %393, %cst_112 {dimension_numbers = #tpu.dot_dimension_numbers<[1], [0], [0], [1], [0, 0, 1, 1], [], []>} : vector<2x64xf32>, vector<64x256xf32>, vector<2x256xf32> -> vector<2x256xf32>
    %c384_113 = arith.constant 384 : index
    %c0_114 = arith.constant 0 : index
    %395 = vector.load %arg1[%c384_113, %c0_114] : memref<896x256xf32, #tpu.memory_space<vmem>>, vector<64x256xf32>
    %cst_115 = arith.constant dense<0.000000e+00> : vector<2x256xf32>
    %396 = tpu.matmul %373, %395, %cst_115 {dimension_numbers = #tpu.dot_dimension_numbers<[1], [0], [0], [1], [0, 0, 1, 1], [], []>} : vector<2x64xf32>, vector<64x256xf32>, vector<2x256xf32> -> vector<2x256xf32>
    %397 = arith.addf %394, %396 : vector<2x256xf32>
    %398 = arith.addf %397, %248 : vector<2x256xf32>
    %399 = vector.extract_strided_slice %398 {offsets = [0, 0], sizes = [2, 192], strides = [1, 1]} : vector<2x256xf32> to vector<2x192xf32>
    %400 = arith.negf %399 : vector<2x192xf32>
    %401 = math.exp %400 : vector<2x192xf32>
    %cst_116 = arith.constant 1.000000e+00 : f32
    %402 = vector.broadcast %cst_116 : f32 to vector<2x192xf32>
    %403 = arith.addf %402, %401 : vector<2x192xf32>
    %404 = arith.divf %402, %403 : vector<2x192xf32>
    %405 = vector.extract_strided_slice %404 {offsets = [0, 0], sizes = [2, 64], strides = [1, 1]} : vector<2x192xf32> to vector<2x64xf32>
    %406 = vector.extract_strided_slice %404 {offsets = [0, 64], sizes = [2, 64], strides = [1, 1]} : vector<2x192xf32> to vector<2x64xf32>
    %407 = vector.extract_strided_slice %404 {offsets = [0, 128], sizes = [2, 64], strides = [1, 1]} : vector<2x192xf32> to vector<2x64xf32>
    %408 = vector.extract_strided_slice %398 {offsets = [0, 192], sizes = [2, 64], strides = [1, 1]} : vector<2x256xf32> to vector<2x64xf32>
    %409 = math.tanh %408 : vector<2x64xf32>
    %410 = arith.mulf %406, %371 : vector<2x64xf32>
    %411 = arith.mulf %405, %409 : vector<2x64xf32>
    %412 = arith.addf %410, %411 : vector<2x64xf32>
    %413 = math.tanh %412 : vector<2x64xf32>
    %414 = arith.mulf %407, %413 : vector<2x64xf32>
    %c256_117 = arith.constant 256 : index
    %c0_118 = arith.constant 0 : index
    %415 = vector.load %arg1[%c256_117, %c0_118] : memref<896x256xf32, #tpu.memory_space<vmem>>, vector<64x256xf32>
    %cst_119 = arith.constant dense<0.000000e+00> : vector<2x256xf32>
    %416 = tpu.matmul %392, %415, %cst_119 {dimension_numbers = #tpu.dot_dimension_numbers<[1], [0], [0], [1], [0, 0, 1, 1], [], []>} : vector<2x64xf32>, vector<64x256xf32>, vector<2x256xf32> -> vector<2x256xf32>
    %417 = arith.addf %416, %245 : vector<2x256xf32>
    %418 = vector.extract_strided_slice %417 {offsets = [0, 0], sizes = [2, 192], strides = [1, 1]} : vector<2x256xf32> to vector<2x192xf32>
    %419 = arith.negf %418 : vector<2x192xf32>
    %420 = math.exp %419 : vector<2x192xf32>
    %cst_120 = arith.constant 1.000000e+00 : f32
    %421 = vector.broadcast %cst_120 : f32 to vector<2x192xf32>
    %422 = arith.addf %421, %420 : vector<2x192xf32>
    %423 = arith.divf %421, %422 : vector<2x192xf32>
    %424 = vector.extract_strided_slice %423 {offsets = [0, 0], sizes = [2, 64], strides = [1, 1]} : vector<2x192xf32> to vector<2x64xf32>
    %425 = vector.extract_strided_slice %423 {offsets = [0, 64], sizes = [2, 64], strides = [1, 1]} : vector<2x192xf32> to vector<2x64xf32>
    %426 = vector.extract_strided_slice %423 {offsets = [0, 128], sizes = [2, 64], strides = [1, 1]} : vector<2x192xf32> to vector<2x64xf32>
    %427 = vector.extract_strided_slice %417 {offsets = [0, 192], sizes = [2, 64], strides = [1, 1]} : vector<2x256xf32> to vector<2x64xf32>
    %428 = math.tanh %427 : vector<2x64xf32>
    %429 = arith.mulf %425, %390 : vector<2x64xf32>
    %430 = arith.mulf %424, %428 : vector<2x64xf32>
    %431 = arith.addf %429, %430 : vector<2x64xf32>
    %432 = math.tanh %431 : vector<2x64xf32>
    %433 = arith.mulf %426, %432 : vector<2x64xf32>
    %c320_121 = arith.constant 320 : index
    %c0_122 = arith.constant 0 : index
    %434 = vector.load %arg1[%c320_121, %c0_122] : memref<896x256xf32, #tpu.memory_space<vmem>>, vector<64x256xf32>
    %cst_123 = arith.constant dense<0.000000e+00> : vector<2x256xf32>
    %435 = tpu.matmul %433, %434, %cst_123 {dimension_numbers = #tpu.dot_dimension_numbers<[1], [0], [0], [1], [0, 0, 1, 1], [], []>} : vector<2x64xf32>, vector<64x256xf32>, vector<2x256xf32> -> vector<2x256xf32>
    %c384_124 = arith.constant 384 : index
    %c0_125 = arith.constant 0 : index
    %436 = vector.load %arg1[%c384_124, %c0_125] : memref<896x256xf32, #tpu.memory_space<vmem>>, vector<64x256xf32>
    %cst_126 = arith.constant dense<0.000000e+00> : vector<2x256xf32>
    %437 = tpu.matmul %414, %436, %cst_126 {dimension_numbers = #tpu.dot_dimension_numbers<[1], [0], [0], [1], [0, 0, 1, 1], [], []>} : vector<2x64xf32>, vector<64x256xf32>, vector<2x256xf32> -> vector<2x256xf32>
    %438 = arith.addf %435, %437 : vector<2x256xf32>
    %439 = arith.addf %438, %248 : vector<2x256xf32>
    %440 = vector.extract_strided_slice %439 {offsets = [0, 0], sizes = [2, 192], strides = [1, 1]} : vector<2x256xf32> to vector<2x192xf32>
    %441 = arith.negf %440 : vector<2x192xf32>
    %442 = math.exp %441 : vector<2x192xf32>
    %cst_127 = arith.constant 1.000000e+00 : f32
    %443 = vector.broadcast %cst_127 : f32 to vector<2x192xf32>
    %444 = arith.addf %443, %442 : vector<2x192xf32>
    %445 = arith.divf %443, %444 : vector<2x192xf32>
    %446 = vector.extract_strided_slice %445 {offsets = [0, 0], sizes = [2, 64], strides = [1, 1]} : vector<2x192xf32> to vector<2x64xf32>
    %447 = vector.extract_strided_slice %445 {offsets = [0, 64], sizes = [2, 64], strides = [1, 1]} : vector<2x192xf32> to vector<2x64xf32>
    %448 = vector.extract_strided_slice %445 {offsets = [0, 128], sizes = [2, 64], strides = [1, 1]} : vector<2x192xf32> to vector<2x64xf32>
    %449 = vector.extract_strided_slice %439 {offsets = [0, 192], sizes = [2, 64], strides = [1, 1]} : vector<2x256xf32> to vector<2x64xf32>
    %450 = math.tanh %449 : vector<2x64xf32>
    %451 = arith.mulf %447, %412 : vector<2x64xf32>
    %452 = arith.mulf %446, %450 : vector<2x64xf32>
    %453 = arith.addf %451, %452 : vector<2x64xf32>
    %454 = math.tanh %453 : vector<2x64xf32>
    %455 = arith.mulf %448, %454 : vector<2x64xf32>
    %456 = tpu.concatenate %291, %332, %373, %414, %455 in 0 : vector<2x64xf32>, vector<2x64xf32>, vector<2x64xf32>, vector<2x64xf32>, vector<2x64xf32> -> vector<10x64xf32>
    %c768 = arith.constant 768 : index
    %c0_128 = arith.constant 0 : index
    %457 = vector.load %arg1[%c768, %c0_128] : memref<896x256xf32, #tpu.memory_space<vmem>>, vector<64x128xf32>
    %cst_129 = arith.constant dense<0.000000e+00> : vector<10x128xf32>
    %458 = tpu.matmul %456, %457, %cst_129 {dimension_numbers = #tpu.dot_dimension_numbers<[1], [0], [0], [1], [0, 0, 1, 1], [], []>} : vector<10x64xf32>, vector<64x128xf32>, vector<10x128xf32> -> vector<10x128xf32>
    %c888 = arith.constant 888 : index
    %c0_130 = arith.constant 0 : index
    %459 = vector.load %arg1[%c888, %c0_130] : memref<896x256xf32, #tpu.memory_space<vmem>>, vector<1x128xf32>
    %460 = vector.shape_cast %459 : vector<1x128xf32> to vector<1x128xf32>
    %461 = vector.broadcast %460 : vector<1x128xf32> to vector<10x128xf32>
    %462 = arith.addf %458, %461 : vector<10x128xf32>
    %c0_131 = arith.constant 0 : index
    %c0_132 = arith.constant 0 : index
    %463 = vector.load %arg2[%c0_131, %c0_132] : memref<10x128xf32, #tpu.memory_space<vmem>>, vector<10x128xf32>
    tpu.vector_store %arg2[%c0_131, %c0_132], %462 {strides = array<i32>} : memref<10x128xf32, #tpu.memory_space<vmem>>, vector<10x128xf32>,
    return
  }
}

</mosaic_0001>

<llo_original>
// kernel: lstm_autoencoder_forward.1
$region0: #{lstm_autoencoder_forward.1}
  #allocation0 [shape = 'u32[]', space=smem, size = 0x4, offset = 0x4, fixed_abs, tag = 'smem constant byte address 0x4 - core index']
  #allocation1 [shape = 'u32[144,128]{1,0:T(1,128)}', space=vmem, size = 0x12000, scoped, tag = 'internal scratch']
  %s0 = inlined_call_operand.vmem [shape: f32[10,64], index: 0, kind: input, shape index: {}]
  %s1 = inlined_call_operand.hbm [shape: f32[896,256], index: 1, kind: input, shape index: {}]
  %s2 = inlined_call_operand.vmem [shape: f32[10,128], index: 2, kind: output, shape index: {}]
  %s3 = sld [smem:[#allocation0]]
  $region22: #{lstm_autoencoder_forward.1} parent=0
    _
  %s5 = ssub.s32 1, %s3
  %s6 = scalar_select 0, %s5, %s3
  $region1: #{lstm_autoencoder_forward.1} parent=0
    #allocation2 [shape = 'u8[917504]{0}', space=vmem, size = 0xe0000, scoped, tag = 'input window, operand 1, single buffered']
    #allocation3 [shape = 's32[1]{0}', space=sflag, size = 0x4, scoped, tag = 'scoped memory for lstm_autoencoder_forward.1']
    %7 = vsyncpa [#allocation3], 0
    // Predicated region
    $region2: #{lstm_autoencoder_forward.1} parent=1 // pred_check
      _
    $region3: #{lstm_autoencoder_forward.1} parent=1 // pred_check_branch
      %9 = sbr.rel (0) target = $region5
    $region4: #{lstm_autoencoder_forward.1} parent=1 // pred_region
      _
    $region5: #{lstm_autoencoder_forward.1} parent=1 // pred_fallthru
      _
    // Predicated region
    $region6: #{lstm_autoencoder_forward.1} parent=1 // pred_check
      _
    $region7: #{lstm_autoencoder_forward.1} parent=1 // pred_check_branch
      %11 = sbr.rel (0) target = $region9
    $region8: #{lstm_autoencoder_forward.1} parent=1 // pred_region
      %s13 = ssub.s32 28672, 28672
      %14 = vsyncadd [#allocation3], %s13
      %s15 = sshll.u32 [#allocation2], 4
      %s16 = int_to_ptr.vmem [resolvable:$true] %s15
      %21 = dma.hbm_to_vmem [thread:$0]  %s1, 28672, %s16, [#allocation3], 256, 256, 16
    $region9: #{lstm_autoencoder_forward.1} parent=1 // pred_fallthru
      _
    // Predicated region
    $region10: #{lstm_autoencoder_forward.1} parent=1 // pred_check
      _
    $region11: #{lstm_autoencoder_forward.1} parent=1 // pred_check_branch
      %23 = sbr.rel (0) target = $region13
    $region12: #{lstm_autoencoder_forward.1} parent=1 // pred_region
      %24 = dma.done [#allocation3], 28672
    $region13: #{lstm_autoencoder_forward.1} parent=1 // pred_fallthru
      _
    %v25 = vld [vmem:[%s0] sm:$0xff]
    %v26 = vld [vmem:[%s0 + $0x8] sm:$0x3]
    %v27 = vld [vmem:[#allocation2] sm:$0xff]
    %v28 = vld [vmem:[#allocation2 + $0x8] sm:$0xff]
    %v29 = vld [vmem:[#allocation2 + $0x10] sm:$0xff]
    %v30 = vld [vmem:[#allocation2 + $0x18] sm:$0xff]
    %v31 = vld [vmem:[#allocation2 + $0x20] sm:$0xff]
    %v32 = vld [vmem:[#allocation2 + $0x28] sm:$0xff]
    %v33 = vld [vmem:[#allocation2 + $0x30] sm:$0xff]
    %v34 = vld [vmem:[#allocation2 + $0x38] sm:$0xff]
    %v35 = vld [vmem:[#allocation2 + $0x40] sm:$0xff]
    %v36 = vld [vmem:[#allocation2 + $0x48] sm:$0xff]
    %v37 = vld [vmem:[#allocation2 + $0x50] sm:$0xff]
    %v38 = vld [vmem:[#allocation2 + $0x58] sm:$0xff]
    %v39 = vld [vmem:[#allocation2 + $0x60] sm:$0xff]
    %v40 = vld [vmem:[#allocation2 + $0x68] sm:$0xff]
    %v41 = vld [vmem:[#allocation2 + $0x70] sm:$0xff]
    %v42 = vld [vmem:[#allocation2 + $0x78] sm:$0xff]
    %s43 = scalar_lea.vmem [#allocation2], 1664
    %v44 = vld [vmem:[%s43] ss:$8 sm:$0x3]
    %v46 = vlaneseq
    %v47 = vshrl.u32 %v46, 7
    %v48 = vsub.s32 0, %v47
    %v49 = vrot.slane %v44, %v48
    %v50 = vlaneseq
    %v51 = vshrl.u32 %v50, 7
    %v52 = vsub.s32 1, %v51
    %v53 = vrot.slane %v44, %v52
    %vm56 = vcmask 523264
    %v58 = vsel %vm56, %v25, 0
    %v61 = vsel %vm56, %v26, 0
    %63 = vmatprep.subr.mxu0 0.0
    %64 = vmatpush1.msra.mxu0 0.0
    %65 = vmatprep.subr.mxu0 0.0
    %66 = vmatpush1.msra.mxu0 0.0
    %67 = vmatprep.subr.mxu0 0.0
    %68 = vmatpush1.msra.mxu0 0.0
    %69 = vmatprep.subr.mxu0 0.0
    %70 = vmatpush1.msra.mxu0 0.0
    %71 = vmatprep.subr.mxu0 0.0
    %72 = vmatpush1.msra.mxu0 0.0
    %73 = vmatprep.subr.mxu0 0.0
    %74 = vmatpush1.msra.mxu0 0.0
    %75 = vmatprep.subr.mxu0 0.0
    %76 = vmatpush1.msra.mxu0 0.0
    %77 = vmatprep.subr.mxu0 0.0
    %78 = vmatpush1.msra.mxu0 0.0
    %79 = vmatprep.subr.mxu0 %v42
    %80 = vmatpush1.msra.mxu0 %v41
    %81 = vmatprep.subr.mxu0 %v40
    %82 = vmatpush1.msra.mxu0 %v39
    %83 = vmatprep.subr.mxu0 %v38
    %84 = vmatpush1.msra.mxu0 %v37
    %85 = vmatprep.subr.mxu0 %v36
    %86 = vmatpush1.msra.mxu0 %v35
    %87 = vmatprep.subr.mxu0 %v34
    %88 = vmatpush1.msra.mxu0 %v33
    %89 = vmatprep.subr.mxu0 %v32
    %90 = vmatpush1.msra.mxu0 %v31
    %91 = vmatprep.subr.mxu0 %v30
    %92 = vmatpush1.msra.mxu0 %v29
    %93 = vmatprep.subr.mxu0 %v28
    %94 = vmatpush1.msra.mxu0 %v27
    %95 = vmatprep.subr.mxu0 0.0
    %96 = vmatpush2.msra.mxu0 0.0
    %97 = vmatprep.subr.mxu0 0.0
    %98 = vmatpush2.msra.mxu0 0.0
    %99 = vmatprep.subr.mxu0 0.0
    %100 = vmatpush2.msra.mxu0 0.0
    %101 = vmatprep.subr.mxu0 0.0
    %102 = vmatpush2.msra.mxu0 0.0
    %103 = vmatprep.subr.mxu0 0.0
    %104 = vmatpush2.msra.mxu0 0.0
    %105 = vmatprep.subr.mxu0 0.0
    %106 = vmatpush2.msra.mxu0 0.0
    %107 = vmatprep.subr.mxu0 0.0
    %108 = vmatpush2.msra.mxu0 0.0
    %109 = vmatprep.subr.mxu0 0.0
    %110 = vmatpush2.msra.mxu0 0.0
    %111 = vmatprep.subr.mxu0 0.0
    %112 = vmatpush2.msra.mxu0 0.0
    %113 = vmatprep.subr.mxu0 0.0
    %114 = vmatpush2.msra.mxu0 0.0
    %115 = vmatprep.subr.mxu0 0.0
    %116 = vmatpush2.msra.mxu0 0.0
    %117 = vmatprep.subr.mxu0 0.0
    %118 = vmatpush2.msra.mxu0 0.0
    %119 = vmatprep.subr.mxu0 0.0
    %120 = vmatpush2.msra.mxu0 0.0
    %121 = vmatprep.subr.mxu0 0.0
    %122 = vmatpush2.msra.mxu0 0.0
    %123 = vmatprep.subr.mxu0 0.0
    %124 = vmatpush2.msra.mxu0 0.0
    %125 = vmatprep.subr.mxu0 0.0
    %126 = vmatpush2.msra.mxu0 0.0
    %127 = vmatprep.mubr.f32.mxu0 0.0
    %128 = vmatmul.mubr.f32.gmra.mxu0 %v58
    %v129 = vpop.f32.mrf.mxu0
    %v130 = vadd.f32 %v49, %v129
    %v131 = vpop.f32.mrf.mxu0
    %v132 = vadd.f32 %v53, %v131
    %133 = vmatprep.mubr.f32.mxu0 0.0
    %134 = vmatmul.mubr.f32.gmra.mxu0 %v61
    %v135 = vpop.f32.mrf.mxu0
    %v136 = vadd.f32 %v49, %v135
    %v137 = vpop.f32.mrf.mxu0
    %v138 = vadd.f32 %v53, %v137
    %139 = vdwg.mxu0
    %s140 = scalar_lea.vmem [#allocation2], 1680
    %v141 = vld [vmem:[%s140] ss:$8 sm:$0x3]
    %v143 = vlaneseq
    %v144 = vshrl.u32 %v143, 7
    %v145 = vsub.s32 0, %v144
    %v146 = vrot.slane %v141, %v145
    %v147 = vlaneseq
    %v148 = vshrl.u32 %v147, 7
    %v149 = vsub.s32 1, %v148
    %v150 = vrot.slane %v141, %v149
    %v153 = vld [vmem:[#allocation2 + $0x80] sm:$0xff]
    %v154 = vld [vmem:[#allocation2 + $0x88] sm:$0xff]
    %v155 = vld [vmem:[#allocation2 + $0x90] sm:$0xff]
    %v156 = vld [vmem:[#allocation2 + $0x98] sm:$0xff]
    %v157 = vld [vmem:[#allocation2 + $0xa0] sm:$0xff]
    %v158 = vld [vmem:[#allocation2 + $0xa8] sm:$0xff]
    %v159 = vld [vmem:[#allocation2 + $0xb0] sm:$0xff]
    %v160 = vld [vmem:[#allocation2 + $0xb8] sm:$0xff]
    %v161 = vld [vmem:[#allocation2 + $0xc0] sm:$0xff]
    %v162 = vld [vmem:[#allocation2 + $0xc8] sm:$0xff]
    %v163 = vld [vmem:[#allocation2 + $0xd0] sm:$0xff]
    %v164 = vld [vmem:[#allocation2 + $0xd8] sm:$0xff]
    %v165 = vld [vmem:[#allocation2 + $0xe0] sm:$0xff]
    %v166 = vld [vmem:[#allocation2 + $0xe8] sm:$0xff]
    %v167 = vld [vmem:[#allocation2 + $0xf0] sm:$0xff]
    %v168 = vld [vmem:[#allocation2 + $0xf8] sm:$0xff]
    %v170 = vsel %vm56, 0.0, 0
    %172 = vmatprep.subr.mxu0 0.0
    %173 = vmatpush1.msra.mxu0 0.0
    %174 = vmatprep.subr.mxu0 0.0
    %175 = vmatpush1.msra.mxu0 0.0
    %176 = vmatprep.subr.mxu0 0.0
    %177 = vmatpush1.msra.mxu0 0.0
    %178 = vmatprep.subr.mxu0 0.0
    %179 = vmatpush1.msra.mxu0 0.0
    %180 = vmatprep.subr.mxu0 0.0
    %181 = vmatpush1.msra.mxu0 0.0
    %182 = vmatprep.subr.mxu0 0.0
    %183 = vmatpush1.msra.mxu0 0.0
    %184 = vmatprep.subr.mxu0 0.0
    %185 = vmatpush1.msra.mxu0 0.0
    %186 = vmatprep.subr.mxu0 0.0
    %187 = vmatpush1.msra.mxu0 0.0
    %188 = vmatprep.subr.mxu0 %v168
    %189 = vmatpush1.msra.mxu0 %v167
    %190 = vmatprep.subr.mxu0 %v166
    %191 = vmatpush1.msra.mxu0 %v165
    %192 = vmatprep.subr.mxu0 %v164
    %193 = vmatpush1.msra.mxu0 %v163
    %194 = vmatprep.subr.mxu0 %v162
    %195 = vmatpush1.msra.mxu0 %v161
    %196 = vmatprep.subr.mxu0 %v160
    %197 = vmatpush1.msra.mxu0 %v159
    %198 = vmatprep.subr.mxu0 %v158
    %199 = vmatpush1.msra.mxu0 %v157
    %200 = vmatprep.subr.mxu0 %v156
    %201 = vmatpush1.msra.mxu0 %v155
    %202 = vmatprep.subr.mxu0 %v154
    %203 = vmatpush1.msra.mxu0 %v153
    %204 = vmatprep.subr.mxu0 0.0
    %205 = vmatpush2.msra.mxu0 0.0
    %206 = vmatprep.subr.mxu0 0.0
    %207 = vmatpush2.msra.mxu0 0.0
    %208 = vmatprep.subr.mxu0 0.0
    %209 = vmatpush2.msra.mxu0 0.0
    %210 = vmatprep.subr.mxu0 0.0
    %211 = vmatpush2.msra.mxu0 0.0
    %212 = vmatprep.subr.mxu0 0.0
    %213 = vmatpush2.msra.mxu0 0.0
    %214 = vmatprep.subr.mxu0 0.0
    %215 = vmatpush2.msra.mxu0 0.0
    %216 = vmatprep.subr.mxu0 0.0
    %217 = vmatpush2.msra.mxu0 0.0
    %218 = vmatprep.subr.mxu0 0.0
    %219 = vmatpush2.msra.mxu0 0.0
    %220 = vmatprep.subr.mxu0 0.0
    %221 = vmatpush2.msra.mxu0 0.0
    %222 = vmatprep.subr.mxu0 0.0
    %223 = vmatpush2.msra.mxu0 0.0
    %224 = vmatprep.subr.mxu0 0.0
    %225 = vmatpush2.msra.mxu0 0.0
    %226 = vmatprep.subr.mxu0 0.0
    %227 = vmatpush2.msra.mxu0 0.0
    %228 = vmatprep.subr.mxu0 0.0
    %229 = vmatpush2.msra.mxu0 0.0
    %230 = vmatprep.subr.mxu0 0.0
    %231 = vmatpush2.msra.mxu0 0.0
    %232 = vmatprep.subr.mxu0 0.0
    %233 = vmatpush2.msra.mxu0 0.0
    %234 = vmatprep.subr.mxu0 0.0
    %235 = vmatpush2.msra.mxu0 0.0
    %236 = vmatprep.mubr.f32.mxu0 0.0
    %237 = vmatmul.mubr.f32.gmra.mxu0 %v170
    %v238 = vpop.f32.mrf.mxu0
    %v239 = vadd.f32 0.0, %v238
    %v240 = vpop.f32.mrf.mxu0
    %v241 = vadd.f32 0.0, %v240
    %242 = vdwg.mxu0
    %v243 = vadd.f32 %v130, %v239
    %v244 = vadd.f32 %v132, %v241
    %v245 = vxor.u32 %v243, 2147483648
    %v246 = vxor.u32 %v244, 2147483648
    %v247 = vmul.f32 %v245, 1.442695
    %v248 = vpow.pop %v247
    %v249 = vmul.f32 %v246, 1.442695
    %v250 = vpow.pop %v249
    %v251 = vadd.f32 %v248, 1.0
    %v252 = vadd.f32 %v250, 1.0
    %v253 = vrcp.pop %v251
    %v254 = vmul.f32 1.0, %v253
    %v255 = vrcp.pop %v252
    %v256 = vmul.f32 1.0, %v255
    %v257 = vtanh.pop %v244
    %v258 = vmul.f32 %v254, 0.0
    %260 = vrot.lane.b32.xlu0 %v257, 64
    %v261 = vpop.permute.xlu0 %260
    %v263 = vmul.f32 %v254, %v261
    %265 = vrot.lane.b32.xlu0 %v263, 64
    %v266 = vpop.permute.xlu0 %265
    %v268 = vadd.f32 %v258, %v266
    %v269 = vtanh.pop %v268
    %271 = vrot.lane.b32.xlu0 %v269, 64
    %v272 = vpop.permute.xlu0 %271
    %v274 = vmul.f32 %v256, %v272
    %v275 = vld [vmem:[#allocation2 + $0x100] sm:$0xff]
    %v276 = vld [vmem:[#allocation2 + $0x108] sm:$0xff]
    %v277 = vld [vmem:[#allocation2 + $0x110] sm:$0xff]
    %v278 = vld [vmem:[#allocation2 + $0x118] sm:$0xff]
    %v279 = vld [vmem:[#allocation2 + $0x120] sm:$0xff]
    %v280 = vld [vmem:[#allocation2 + $0x128] sm:$0xff]
    %v281 = vld [vmem:[#allocation2 + $0x130] sm:$0xff]
    %v282 = vld [vmem:[#allocation2 + $0x138] sm:$0xff]
    %v283 = vld [vmem:[#allocation2 + $0x140] sm:$0xff]
    %v284 = vld [vmem:[#allocation2 + $0x148] sm:$0xff]
    %v285 = vld [vmem:[#allocation2 + $0x150] sm:$0xff]
    %v286 = vld [vmem:[#allocation2 + $0x158] sm:$0xff]
    %v287 = vld [vmem:[#allocation2 + $0x160] sm:$0xff]
    %v288 = vld [vmem:[#allocation2 + $0x168] sm:$0xff]
    %v289 = vld [vmem:[#allocation2 + $0x170] sm:$0xff]
    %v290 = vld [vmem:[#allocation2 + $0x178] sm:$0xff]
    %v291 = vld [vmem:[#allocation2 + $0x180] sm:$0xff]
    %v292 = vld [vmem:[#allocation2 + $0x188] sm:$0xff]
    %v293 = vld [vmem:[#allocation2 + $0x190] sm:$0xff]
    %v294 = vld [vmem:[#allocation2 + $0x198] sm:$0xff]
    %v295 = vld [vmem:[#allocation2 + $0x1a0] sm:$0xff]
    %v296 = vld [vmem:[#allocation2 + $0x1a8] sm:$0xff]
    %v297 = vld [vmem:[#allocation2 + $0x1b0] sm:$0xff]
    %v298 = vld [vmem:[#allocation2 + $0x1b8] sm:$0xff]
    %v299 = vld [vmem:[#allocation2 + $0x1c0] sm:$0xff]
    %v300 = vld [vmem:[#allocation2 + $0x1c8] sm:$0xff]
    %v301 = vld [vmem:[#allocation2 + $0x1d0] sm:$0xff]
    %v302 = vld [vmem:[#allocation2 + $0x1d8] sm:$0xff]
    %v303 = vld [vmem:[#allocation2 + $0x1e0] sm:$0xff]
    %v304 = vld [vmem:[#allocation2 + $0x1e8] sm:$0xff]
    %v305 = vld [vmem:[#allocation2 + $0x1f0] sm:$0xff]
    %v306 = vld [vmem:[#allocation2 + $0x1f8] sm:$0xff]
    %307 = vmatprep.subr.mxu0 0.0
    %308 = vmatpush1.msra.mxu0 0.0
    %309 = vmatprep.subr.mxu0 0.0
    %310 = vmatpush1.msra.mxu0 0.0
    %311 = vmatprep.subr.mxu0 0.0
    %312 = vmatpush1.msra.mxu0 0.0
    %313 = vmatprep.subr.mxu0 0.0
    %314 = vmatpush1.msra.mxu0 0.0
    %315 = vmatprep.subr.mxu0 0.0
    %316 = vmatpush1.msra.mxu0 0.0
    %317 = vmatprep.subr.mxu0 0.0
    %318 = vmatpush1.msra.mxu0 0.0
    %319 = vmatprep.subr.mxu0 0.0
    %320 = vmatpush1.msra.mxu0 0.0
    %321 = vmatprep.subr.mxu0 0.0
    %322 = vmatpush1.msra.mxu0 0.0
    %323 = vmatprep.subr.mxu0 %v306
    %324 = vmatpush1.msra.mxu0 %v305
    %325 = vmatprep.subr.mxu0 %v304
    %326 = vmatpush1.msra.mxu0 %v303
    %327 = vmatprep.subr.mxu0 %v302
    %328 = vmatpush1.msra.mxu0 %v301
    %329 = vmatprep.subr.mxu0 %v300
    %330 = vmatpush1.msra.mxu0 %v299
    %331 = vmatprep.subr.mxu0 %v298
    %332 = vmatpush1.msra.mxu0 %v297
    %333 = vmatprep.subr.mxu0 %v296
    %334 = vmatpush1.msra.mxu0 %v295
    %335 = vmatprep.subr.mxu0 %v294
    %336 = vmatpush1.msra.mxu0 %v293
    %337 = vmatprep.subr.mxu0 %v292
    %338 = vmatpush1.msra.mxu0 %v291
    %339 = vmatprep.subr.mxu0 0.0
    %340 = vmatpush2.msra.mxu0 0.0
    %341 = vmatprep.subr.mxu0 0.0
    %342 = vmatpush2.msra.mxu0 0.0
    %343 = vmatprep.subr.mxu0 0.0
    %344 = vmatpush2.msra.mxu0 0.0
    %345 = vmatprep.subr.mxu0 0.0
    %346 = vmatpush2.msra.mxu0 0.0
    %347 = vmatprep.subr.mxu0 0.0
    %348 = vmatpush2.msra.mxu0 0.0
    %349 = vmatprep.subr.mxu0 0.0
    %350 = vmatpush2.msra.mxu0 0.0
    %351 = vmatprep.subr.mxu0 0.0
    %352 = vmatpush2.msra.mxu0 0.0
    %353 = vmatprep.subr.mxu0 0.0
    %354 = vmatpush2.msra.mxu0 0.0
    %355 = vmatprep.subr.mxu0 0.0
    %356 = vmatpush2.msra.mxu0 0.0
    %357 = vmatprep.subr.mxu0 0.0
    %358 = vmatpush2.msra.mxu0 0.0
    %359 = vmatprep.subr.mxu0 0.0
    %360 = vmatpush2.msra.mxu0 0.0
    %361 = vmatprep.subr.mxu0 0.0
    %362 = vmatpush2.msra.mxu0 0.0
    %363 = vmatprep.subr.mxu0 0.0
    %364 = vmatpush2.msra.mxu0 0.0
    %365 = vmatprep.subr.mxu0 0.0
    %366 = vmatpush2.msra.mxu0 0.0
    %367 = vmatprep.subr.mxu0 0.0
    %368 = vmatpush2.msra.mxu0 0.0
    %369 = vmatprep.subr.mxu0 0.0
    %370 = vmatpush2.msra.mxu0 0.0
    %371 = vmatprep.mubr.f32.mxu0 0.0
    %372 = vmatmul.mubr.f32.gmra.mxu0 %v170
    %v373 = vpop.f32.mrf.mxu0
    %v374 = vadd.f32 0.0, %v373
    %v375 = vpop.f32.mrf.mxu0
    %v376 = vadd.f32 0.0, %v375
    %377 = vdwg.mxu0
    %v379 = vsel %vm56, %v274, 0
    %381 = vmatprep.subr.mxu0 0.0
    %382 = vmatpush1.msra.mxu0 0.0
    %383 = vmatprep.subr.mxu0 0.0
    %384 = vmatpush1.msra.mxu0 0.0
    %385 = vmatprep.subr.mxu0 0.0
    %386 = vmatpush1.msra.mxu0 0.0
    %387 = vmatprep.subr.mxu0 0.0
    %388 = vmatpush1.msra.mxu0 0.0
    %389 = vmatprep.subr.mxu0 0.0
    %390 = vmatpush1.msra.mxu0 0.0
    %391 = vmatprep.subr.mxu0 0.0
    %392 = vmatpush1.msra.mxu0 0.0
    %393 = vmatprep.subr.mxu0 0.0
    %394 = vmatpush1.msra.mxu0 0.0
    %395 = vmatprep.subr.mxu0 0.0
    %396 = vmatpush1.msra.mxu0 0.0
    %397 = vmatprep.subr.mxu0 %v290
    %398 = vmatpush1.msra.mxu0 %v289
    %399 = vmatprep.subr.mxu0 %v288
    %400 = vmatpush1.msra.mxu0 %v287
    %401 = vmatprep.subr.mxu0 %v286
    %402 = vmatpush1.msra.mxu0 %v285
    %403 = vmatprep.subr.mxu0 %v284
    %404 = vmatpush1.msra.mxu0 %v283
    %405 = vmatprep.subr.mxu0 %v282
    %406 = vmatpush1.msra.mxu0 %v281
    %407 = vmatprep.subr.mxu0 %v280
    %408 = vmatpush1.msra.mxu0 %v279
    %409 = vmatprep.subr.mxu0 %v278
    %410 = vmatpush1.msra.mxu0 %v277
    %411 = vmatprep.subr.mxu0 %v276
    %412 = vmatpush1.msra.mxu0 %v275
    %413 = vmatprep.subr.mxu0 0.0
    %414 = vmatpush2.msra.mxu0 0.0
    %415 = vmatprep.subr.mxu0 0.0
    %416 = vmatpush2.msra.mxu0 0.0
    %417 = vmatprep.subr.mxu0 0.0
    %418 = vmatpush2.msra.mxu0 0.0
    %419 = vmatprep.subr.mxu0 0.0
    %420 = vmatpush2.msra.mxu0 0.0
    %421 = vmatprep.subr.mxu0 0.0
    %422 = vmatpush2.msra.mxu0 0.0
    %423 = vmatprep.subr.mxu0 0.0
    %424 = vmatpush2.msra.mxu0 0.0
    %425 = vmatprep.subr.mxu0 0.0
    %426 = vmatpush2.msra.mxu0 0.0
    %427 = vmatprep.subr.mxu0 0.0
    %428 = vmatpush2.msra.mxu0 0.0
    %429 = vmatprep.subr.mxu0 0.0
    %430 = vmatpush2.msra.mxu0 0.0
    %431 = vmatprep.subr.mxu0 0.0
    %432 = vmatpush2.msra.mxu0 0.0
    %433 = vmatprep.subr.mxu0 0.0
    %434 = vmatpush2.msra.mxu0 0.0
    %435 = vmatprep.subr.mxu0 0.0
    %436 = vmatpush2.msra.mxu0 0.0
    %437 = vmatprep.subr.mxu0 0.0
    %438 = vmatpush2.msra.mxu0 0.0
    %439 = vmatprep.subr.mxu0 0.0
    %440 = vmatpush2.msra.mxu0 0.0
    %441 = vmatprep.subr.mxu0 0.0
    %442 = vmatpush2.msra.mxu0 0.0
    %443 = vmatprep.subr.mxu0 0.0
    %444 = vmatpush2.msra.mxu0 0.0
    %445 = vmatprep.mubr.f32.mxu0 0.0
    %446 = vmatmul.mubr.f32.gmra.mxu0 %v379
    %v447 = vpop.f32.mrf.mxu0
    %v448 = vadd.f32 %v374, %v447
    %v449 = vpop.f32.mrf.mxu0
    %v450 = vadd.f32 %v376, %v449
    %451 = vdwg.mxu0
    %v452 = vadd.f32 %v448, %v146
    %v453 = vadd.f32 %v450, %v150
    %v454 = vxor.u32 %v452, 2147483648
    %v455 = vxor.u32 %v453, 2147483648
    %v456 = vmul.f32 %v454, 1.442695
    %v457 = vpow.pop %v456
    %v458 = vmul.f32 %v455, 1.442695
    %v459 = vpow.pop %v458
    %v460 = vadd.f32 %v457, 1.0
    %v461 = vadd.f32 %v459, 1.0
    %v462 = vrcp.pop %v460
    %v463 = vmul.f32 1.0, %v462
    %v464 = vrcp.pop %v461
    %v465 = vmul.f32 1.0, %v464
    %v466 = vtanh.pop %v453
    %v467 = vmul.f32 %v463, 0.0
    %469 = vrot.lane.b32.xlu0 %v466, 64
    %v470 = vpop.permute.xlu0 %469
    %v472 = vmul.f32 %v463, %v470
    %474 = vrot.lane.b32.xlu0 %v472, 64
    %v475 = vpop.permute.xlu0 %474
    %v477 = vadd.f32 %v467, %v475
    %v478 = vtanh.pop %v477
    %480 = vrot.lane.b32.xlu0 %v478, 64
    %v481 = vpop.permute.xlu0 %480
    %v483 = vmul.f32 %v465, %v481
    %484 = vmatprep.subr.mxu0 0.0
    %485 = vmatpush1.msra.mxu0 0.0
    %486 = vmatprep.subr.mxu0 0.0
    %487 = vmatpush1.msra.mxu0 0.0
    %488 = vmatprep.subr.mxu0 0.0
    %489 = vmatpush1.msra.mxu0 0.0
    %490 = vmatprep.subr.mxu0 0.0
    %491 = vmatpush1.msra.mxu0 0.0
    %492 = vmatprep.subr.mxu0 0.0
    %493 = vmatpush1.msra.mxu0 0.0
    %494 = vmatprep.subr.mxu0 0.0
    %495 = vmatpush1.msra.mxu0 0.0
    %496 = vmatprep.subr.mxu0 0.0
    %497 = vmatpush1.msra.mxu0 0.0
    %498 = vmatprep.subr.mxu0 0.0
    %499 = vmatpush1.msra.mxu0 0.0
    %500 = vmatprep.subr.mxu0 %v168
    %501 = vmatpush1.msra.mxu0 %v167
    %502 = vmatprep.subr.mxu0 %v166
    %503 = vmatpush1.msra.mxu0 %v165
    %504 = vmatprep.subr.mxu0 %v164
    %505 = vmatpush1.msra.mxu0 %v163
    %506 = vmatprep.subr.mxu0 %v162
    %507 = vmatpush1.msra.mxu0 %v161
    %508 = vmatprep.subr.mxu0 %v160
    %509 = vmatpush1.msra.mxu0 %v159
    %510 = vmatprep.subr.mxu0 %v158
    %511 = vmatpush1.msra.mxu0 %v157
    %512 = vmatprep.subr.mxu0 %v156
    %513 = vmatpush1.msra.mxu0 %v155
    %514 = vmatprep.subr.mxu0 %v154
    %515 = vmatpush1.msra.mxu0 %v153
    %516 = vmatprep.subr.mxu0 0.0
    %517 = vmatpush2.msra.mxu0 0.0
    %518 = vmatprep.subr.mxu0 0.0
    %519 = vmatpush2.msra.mxu0 0.0
    %520 = vmatprep.subr.mxu0 0.0
    %521 = vmatpush2.msra.mxu0 0.0
    %522 = vmatprep.subr.mxu0 0.0
    %523 = vmatpush2.msra.mxu0 0.0
    %524 = vmatprep.subr.mxu0 0.0
    %525 = vmatpush2.msra.mxu0 0.0
    %526 = vmatprep.subr.mxu0 0.0
    %527 = vmatpush2.msra.mxu0 0.0
    %528 = vmatprep.subr.mxu0 0.0
    %529 = vmatpush2.msra.mxu0 0.0
    %530 = vmatprep.subr.mxu0 0.0
    %531 = vmatpush2.msra.mxu0 0.0
    %532 = vmatprep.subr.mxu0 0.0
    %533 = vmatpush2.msra.mxu0 0.0
    %534 = vmatprep.subr.mxu0 0.0
    %535 = vmatpush2.msra.mxu0 0.0
    %536 = vmatprep.subr.mxu0 0.0
    %537 = vmatpush2.msra.mxu0 0.0
    %538 = vmatprep.subr.mxu0 0.0
    %539 = vmatpush2.msra.mxu0 0.0
    %540 = vmatprep.subr.mxu0 0.0
    %541 = vmatpush2.msra.mxu0 0.0
    %542 = vmatprep.subr.mxu0 0.0
    %543 = vmatpush2.msra.mxu0 0.0
    %544 = vmatprep.subr.mxu0 0.0
    %545 = vmatpush2.msra.mxu0 0.0
    %546 = vmatprep.subr.mxu0 0.0
    %547 = vmatpush2.msra.mxu0 0.0
    %548 = vmatprep.mubr.f32.mxu0 0.0
    %549 = vmatmul.mubr.f32.gmra.mxu0 %v379
    %v550 = vpop.f32.mrf.mxu0
    %v551 = vadd.f32 0.0, %v550
    %v552 = vpop.f32.mrf.mxu0
    %v553 = vadd.f32 0.0, %v552
    %554 = vdwg.mxu0
    %v557 = vrot.slane %v551, 6
    %v558 = vrot.slane %v553, 6
    %v561 = vadd.f32 %v130, %v557
    %v562 = vadd.f32 %v132, %v558
    %v563 = vxor.u32 %v561, 2147483648
    %v564 = vxor.u32 %v562, 2147483648
    %v565 = vmul.f32 %v563, 1.442695
    %v566 = vpow.pop %v565
    %v567 = vmul.f32 %v564, 1.442695
    %v568 = vpow.pop %v567
    %v569 = vadd.f32 %v566, 1.0
    %v570 = vadd.f32 %v568, 1.0
    %v571 = vrcp.pop %v569
    %v572 = vmul.f32 1.0, %v571
    %v573 = vrcp.pop %v570
    %v574 = vmul.f32 1.0, %v573
    %v575 = vtanh.pop %v562
    %v577 = vrot.slane %v268, 6
    %v579 = vmul.f32 %v572, %v577
    %581 = vrot.lane.b32.xlu0 %v575, 64
    %v582 = vpop.permute.xlu0 %581
    %v584 = vmul.f32 %v572, %v582
    %586 = vrot.lane.b32.xlu0 %v584, 64
    %v587 = vpop.permute.xlu0 %586
    %v589 = vadd.f32 %v579, %v587
    %v590 = vtanh.pop %v589
    %592 = vrot.lane.b32.xlu0 %v590, 64
    %v593 = vpop.permute.xlu0 %592
    %v595 = vmul.f32 %v574, %v593
    %v597 = vsel %vm56, %v483, 0
    %599 = vmatprep.subr.mxu0 0.0
    %600 = vmatpush1.msra.mxu0 0.0
    %601 = vmatprep.subr.mxu0 0.0
    %602 = vmatpush1.msra.mxu0 0.0
    %603 = vmatprep.subr.mxu0 0.0
    %604 = vmatpush1.msra.mxu0 0.0
    %605 = vmatprep.subr.mxu0 0.0
    %606 = vmatpush1.msra.mxu0 0.0
    %607 = vmatprep.subr.mxu0 0.0
    %608 = vmatpush1.msra.mxu0 0.0
    %609 = vmatprep.subr.mxu0 0.0
    %610 = vmatpush1.msra.mxu0 0.0
    %611 = vmatprep.subr.mxu0 0.0
    %612 = vmatpush1.msra.mxu0 0.0
    %613 = vmatprep.subr.mxu0 0.0
    %614 = vmatpush1.msra.mxu0 0.0
    %615 = vmatprep.subr.mxu0 %v306
    %616 = vmatpush1.msra.mxu0 %v305
    %617 = vmatprep.subr.mxu0 %v304
    %618 = vmatpush1.msra.mxu0 %v303
    %619 = vmatprep.subr.mxu0 %v302
    %620 = vmatpush1.msra.mxu0 %v301
    %621 = vmatprep.subr.mxu0 %v300
    %622 = vmatpush1.msra.mxu0 %v299
    %623 = vmatprep.subr.mxu0 %v298
    %624 = vmatpush1.msra.mxu0 %v297
    %625 = vmatprep.subr.mxu0 %v296
    %626 = vmatpush1.msra.mxu0 %v295
    %627 = vmatprep.subr.mxu0 %v294
    %628 = vmatpush1.msra.mxu0 %v293
    %629 = vmatprep.subr.mxu0 %v292
    %630 = vmatpush1.msra.mxu0 %v291
    %631 = vmatprep.subr.mxu0 0.0
    %632 = vmatpush2.msra.mxu0 0.0
    %633 = vmatprep.subr.mxu0 0.0
    %634 = vmatpush2.msra.mxu0 0.0
    %635 = vmatprep.subr.mxu0 0.0
    %636 = vmatpush2.msra.mxu0 0.0
    %637 = vmatprep.subr.mxu0 0.0
    %638 = vmatpush2.msra.mxu0 0.0
    %639 = vmatprep.subr.mxu0 0.0
    %640 = vmatpush2.msra.mxu0 0.0
    %641 = vmatprep.subr.mxu0 0.0
    %642 = vmatpush2.msra.mxu0 0.0
    %643 = vmatprep.subr.mxu0 0.0
    %644 = vmatpush2.msra.mxu0 0.0
    %645 = vmatprep.subr.mxu0 0.0
    %646 = vmatpush2.msra.mxu0 0.0
    %647 = vmatprep.subr.mxu0 0.0
    %648 = vmatpush2.msra.mxu0 0.0
    %649 = vmatprep.subr.mxu0 0.0
    %650 = vmatpush2.msra.mxu0 0.0
    %651 = vmatprep.subr.mxu0 0.0
    %652 = vmatpush2.msra.mxu0 0.0
    %653 = vmatprep.subr.mxu0 0.0
    %654 = vmatpush2.msra.mxu0 0.0
    %655 = vmatprep.subr.mxu0 0.0
    %656 = vmatpush2.msra.mxu0 0.0
    %657 = vmatprep.subr.mxu0 0.0
    %658 = vmatpush2.msra.mxu0 0.0
    %659 = vmatprep.subr.mxu0 0.0
    %660 = vmatpush2.msra.mxu0 0.0
    %661 = vmatprep.subr.mxu0 0.0
    %662 = vmatpush2.msra.mxu0 0.0
    %663 = vmatprep.mubr.f32.mxu0 0.0
    %664 = vmatmul.mubr.f32.gmra.mxu0 %v597
    %v665 = vpop.f32.mrf.mxu0
    %v666 = vadd.f32 0.0, %v665
    %v667 = vpop.f32.mrf.mxu0
    %v668 = vadd.f32 0.0, %v667
    %669 = vdwg.mxu0
    %v671 = vrot.slane %v595, 2
    %v672 = vsel %vm56, %v671, 0
    %674 = vmatprep.subr.mxu0 0.0
    %675 = vmatpush1.msra.mxu0 0.0
    %676 = vmatprep.subr.mxu0 0.0
    %677 = vmatpush1.msra.mxu0 0.0
    %678 = vmatprep.subr.mxu0 0.0
    %679 = vmatpush1.msra.mxu0 0.0
    %680 = vmatprep.subr.mxu0 0.0
    %681 = vmatpush1.msra.mxu0 0.0
    %682 = vmatprep.subr.mxu0 0.0
    %683 = vmatpush1.msra.mxu0 0.0
    %684 = vmatprep.subr.mxu0 0.0
    %685 = vmatpush1.msra.mxu0 0.0
    %686 = vmatprep.subr.mxu0 0.0
    %687 = vmatpush1.msra.mxu0 0.0
    %688 = vmatprep.subr.mxu0 0.0
    %689 = vmatpush1.msra.mxu0 0.0
    %690 = vmatprep.subr.mxu0 %v290
    %691 = vmatpush1.msra.mxu0 %v289
    %692 = vmatprep.subr.mxu0 %v288
    %693 = vmatpush1.msra.mxu0 %v287
    %694 = vmatprep.subr.mxu0 %v286
    %695 = vmatpush1.msra.mxu0 %v285
    %696 = vmatprep.subr.mxu0 %v284
    %697 = vmatpush1.msra.mxu0 %v283
    %698 = vmatprep.subr.mxu0 %v282
    %699 = vmatpush1.msra.mxu0 %v281
    %700 = vmatprep.subr.mxu0 %v280
    %701 = vmatpush1.msra.mxu0 %v279
    %702 = vmatprep.subr.mxu0 %v278
    %703 = vmatpush1.msra.mxu0 %v277
    %704 = vmatprep.subr.mxu0 %v276
    %705 = vmatpush1.msra.mxu0 %v275
    %706 = vmatprep.subr.mxu0 0.0
    %707 = vmatpush2.msra.mxu0 0.0
    %708 = vmatprep.subr.mxu0 0.0
    %709 = vmatpush2.msra.mxu0 0.0
    %710 = vmatprep.subr.mxu0 0.0
    %711 = vmatpush2.msra.mxu0 0.0
    %712 = vmatprep.subr.mxu0 0.0
    %713 = vmatpush2.msra.mxu0 0.0
    %714 = vmatprep.subr.mxu0 0.0
    %715 = vmatpush2.msra.mxu0 0.0
    %716 = vmatprep.subr.mxu0 0.0
    %717 = vmatpush2.msra.mxu0 0.0
    %718 = vmatprep.subr.mxu0 0.0
    %719 = vmatpush2.msra.mxu0 0.0
    %720 = vmatprep.subr.mxu0 0.0
    %721 = vmatpush2.msra.mxu0 0.0
    %722 = vmatprep.subr.mxu0 0.0
    %723 = vmatpush2.msra.mxu0 0.0
    %724 = vmatprep.subr.mxu0 0.0
    %725 = vmatpush2.msra.mxu0 0.0
    %726 = vmatprep.subr.mxu0 0.0
    %727 = vmatpush2.msra.mxu0 0.0
    %728 = vmatprep.subr.mxu0 0.0
    %729 = vmatpush2.msra.mxu0 0.0
    %730 = vmatprep.subr.mxu0 0.0
    %731 = vmatpush2.msra.mxu0 0.0
    %732 = vmatprep.subr.mxu0 0.0
    %733 = vmatpush2.msra.mxu0 0.0
    %734 = vmatprep.subr.mxu0 0.0
    %735 = vmatpush2.msra.mxu0 0.0
    %736 = vmatprep.subr.mxu0 0.0
    %737 = vmatpush2.msra.mxu0 0.0
    %738 = vmatprep.mubr.f32.mxu0 0.0
    %739 = vmatmul.mubr.f32.gmra.mxu0 %v672
    %v740 = vpop.f32.mrf.mxu0
    %v741 = vadd.f32 %v666, %v740
    %v742 = vpop.f32.mrf.mxu0
    %v743 = vadd.f32 %v668, %v742
    %744 = vdwg.mxu0
    %v745 = vadd.f32 %v741, %v146
    %v746 = vadd.f32 %v743, %v150
    %v747 = vxor.u32 %v745, 2147483648
    %v748 = vxor.u32 %v746, 2147483648
    %v749 = vmul.f32 %v747, 1.442695
    %v750 = vpow.pop %v749
    %v751 = vmul.f32 %v748, 1.442695
    %v752 = vpow.pop %v751
    %v753 = vadd.f32 %v750, 1.0
    %v754 = vadd.f32 %v752, 1.0
    %v755 = vrcp.pop %v753
    %v756 = vmul.f32 1.0, %v755
    %v757 = vrcp.pop %v754
    %v758 = vmul.f32 1.0, %v757
    %v759 = vtanh.pop %v746
    %v760 = vmul.f32 %v756, %v477
    %762 = vrot.lane.b32.xlu0 %v759, 64
    %v763 = vpop.permute.xlu0 %762
    %v765 = vmul.f32 %v756, %v763
    %767 = vrot.lane.b32.xlu0 %v765, 64
    %v768 = vpop.permute.xlu0 %767
    %v770 = vadd.f32 %v760, %v768
    %v771 = vtanh.pop %v770
    %773 = vrot.lane.b32.xlu0 %v771, 64
    %v774 = vpop.permute.xlu0 %773
    %v776 = vmul.f32 %v758, %v774
    %777 = vmatprep.subr.mxu0 0.0
    %778 = vmatpush1.msra.mxu0 0.0
    %779 = vmatprep.subr.mxu0 0.0
    %780 = vmatpush1.msra.mxu0 0.0
    %781 = vmatprep.subr.mxu0 0.0
    %782 = vmatpush1.msra.mxu0 0.0
    %783 = vmatprep.subr.mxu0 0.0
    %784 = vmatpush1.msra.mxu0 0.0
    %785 = vmatprep.subr.mxu0 0.0
    %786 = vmatpush1.msra.mxu0 0.0
    %787 = vmatprep.subr.mxu0 0.0
    %788 = vmatpush1.msra.mxu0 0.0
    %789 = vmatprep.subr.mxu0 0.0
    %790 = vmatpush1.msra.mxu0 0.0
    %791 = vmatprep.subr.mxu0 0.0
    %792 = vmatpush1.msra.mxu0 0.0
    %793 = vmatprep.subr.mxu0 %v168
    %794 = vmatpush1.msra.mxu0 %v167
    %795 = vmatprep.subr.mxu0 %v166
    %796 = vmatpush1.msra.mxu0 %v165
    %797 = vmatprep.subr.mxu0 %v164
    %798 = vmatpush1.msra.mxu0 %v163
    %799 = vmatprep.subr.mxu0 %v162
    %800 = vmatpush1.msra.mxu0 %v161
    %801 = vmatprep.subr.mxu0 %v160
    %802 = vmatpush1.msra.mxu0 %v159
    %803 = vmatprep.subr.mxu0 %v158
    %804 = vmatpush1.msra.mxu0 %v157
    %805 = vmatprep.subr.mxu0 %v156
    %806 = vmatpush1.msra.mxu0 %v155
    %807 = vmatprep.subr.mxu0 %v154
    %808 = vmatpush1.msra.mxu0 %v153
    %809 = vmatprep.subr.mxu0 0.0
    %810 = vmatpush2.msra.mxu0 0.0
    %811 = vmatprep.subr.mxu0 0.0
    %812 = vmatpush2.msra.mxu0 0.0
    %813 = vmatprep.subr.mxu0 0.0
    %814 = vmatpush2.msra.mxu0 0.0
    %815 = vmatprep.subr.mxu0 0.0
    %816 = vmatpush2.msra.mxu0 0.0
    %817 = vmatprep.subr.mxu0 0.0
    %818 = vmatpush2.msra.mxu0 0.0
    %819 = vmatprep.subr.mxu0 0.0
    %820 = vmatpush2.msra.mxu0 0.0
    %821 = vmatprep.subr.mxu0 0.0
    %822 = vmatpush2.msra.mxu0 0.0
    %823 = vmatprep.subr.mxu0 0.0
    %824 = vmatpush2.msra.mxu0 0.0
    %825 = vmatprep.subr.mxu0 0.0
    %826 = vmatpush2.msra.mxu0 0.0
    %827 = vmatprep.subr.mxu0 0.0
    %828 = vmatpush2.msra.mxu0 0.0
    %829 = vmatprep.subr.mxu0 0.0
    %830 = vmatpush2.msra.mxu0 0.0
    %831 = vmatprep.subr.mxu0 0.0
    %832 = vmatpush2.msra.mxu0 0.0
    %833 = vmatprep.subr.mxu0 0.0
    %834 = vmatpush2.msra.mxu0 0.0
    %835 = vmatprep.subr.mxu0 0.0
    %836 = vmatpush2.msra.mxu0 0.0
    %837 = vmatprep.subr.mxu0 0.0
    %838 = vmatpush2.msra.mxu0 0.0
    %839 = vmatprep.subr.mxu0 0.0
    %840 = vmatpush2.msra.mxu0 0.0
    %841 = vmatprep.mubr.f32.mxu0 0.0
    %842 = vmatmul.mubr.f32.gmra.mxu0 %v672
    %v843 = vpop.f32.mrf.mxu0
    %v844 = vadd.f32 0.0, %v843
    %v845 = vpop.f32.mrf.mxu0
    %v846 = vadd.f32 0.0, %v845
    %847 = vdwg.mxu0
    %v850 = vrot.slane %v844, 4
    %v851 = vrot.slane %v846, 4
    %v854 = vadd.f32 %v130, %v850
    %v855 = vadd.f32 %v132, %v851
    %v856 = vxor.u32 %v854, 2147483648
    %v857 = vxor.u32 %v855, 2147483648
    %v858 = vmul.f32 %v856, 1.442695
    %v859 = vpow.pop %v858
    %v860 = vmul.f32 %v857, 1.442695
    %v861 = vpow.pop %v860
    %v862 = vadd.f32 %v859, 1.0
    %v863 = vadd.f32 %v861, 1.0
    %v864 = vrcp.pop %v862
    %v865 = vmul.f32 1.0, %v864
    %v866 = vrcp.pop %v863
    %v867 = vmul.f32 1.0, %v866
    %v868 = vtanh.pop %v855
    %v870 = vrot.slane %v589, 6
    %v872 = vmul.f32 %v865, %v870
    %874 = vrot.lane.b32.xlu0 %v868, 64
    %v875 = vpop.permute.xlu0 %874
    %v877 = vmul.f32 %v865, %v875
    %879 = vrot.lane.b32.xlu0 %v877, 64
    %v880 = vpop.permute.xlu0 %879
    %v882 = vadd.f32 %v872, %v880
    %v883 = vtanh.pop %v882
    %885 = vrot.lane.b32.xlu0 %v883, 64
    %v886 = vpop.permute.xlu0 %885
    %v888 = vmul.f32 %v867, %v886
    %v890 = vsel %vm56, %v776, 0
    %892 = vmatprep.subr.mxu0 0.0
    %893 = vmatpush1.msra.mxu0 0.0
    %894 = vmatprep.subr.mxu0 0.0
    %895 = vmatpush1.msra.mxu0 0.0
    %896 = vmatprep.subr.mxu0 0.0
    %897 = vmatpush1.msra.mxu0 0.0
    %898 = vmatprep.subr.mxu0 0.0
    %899 = vmatpush1.msra.mxu0 0.0
    %900 = vmatprep.subr.mxu0 0.0
    %901 = vmatpush1.msra.mxu0 0.0
    %902 = vmatprep.subr.mxu0 0.0
    %903 = vmatpush1.msra.mxu0 0.0
    %904 = vmatprep.subr.mxu0 0.0
    %905 = vmatpush1.msra.mxu0 0.0
    %906 = vmatprep.subr.mxu0 0.0
    %907 = vmatpush1.msra.mxu0 0.0
    %908 = vmatprep.subr.mxu0 %v306
    %909 = vmatpush1.msra.mxu0 %v305
    %910 = vmatprep.subr.mxu0 %v304
    %911 = vmatpush1.msra.mxu0 %v303
    %912 = vmatprep.subr.mxu0 %v302
    %913 = vmatpush1.msra.mxu0 %v301
    %914 = vmatprep.subr.mxu0 %v300
    %915 = vmatpush1.msra.mxu0 %v299
    %916 = vmatprep.subr.mxu0 %v298
    %917 = vmatpush1.msra.mxu0 %v297
    %918 = vmatprep.subr.mxu0 %v296
    %919 = vmatpush1.msra.mxu0 %v295
    %920 = vmatprep.subr.mxu0 %v294
    %921 = vmatpush1.msra.mxu0 %v293
    %922 = vmatprep.subr.mxu0 %v292
    %923 = vmatpush1.msra.mxu0 %v291
    %924 = vmatprep.subr.mxu0 0.0
    %925 = vmatpush2.msra.mxu0 0.0
    %926 = vmatprep.subr.mxu0 0.0
    %927 = vmatpush2.msra.mxu0 0.0
    %928 = vmatprep.subr.mxu0 0.0
    %929 = vmatpush2.msra.mxu0 0.0
    %930 = vmatprep.subr.mxu0 0.0
    %931 = vmatpush2.msra.mxu0 0.0
    %932 = vmatprep.subr.mxu0 0.0
    %933 = vmatpush2.msra.mxu0 0.0
    %934 = vmatprep.subr.mxu0 0.0
    %935 = vmatpush2.msra.mxu0 0.0
    %936 = vmatprep.subr.mxu0 0.0
    %937 = vmatpush2.msra.mxu0 0.0
    %938 = vmatprep.subr.mxu0 0.0
    %939 = vmatpush2.msra.mxu0 0.0
    %940 = vmatprep.subr.mxu0 0.0
    %941 = vmatpush2.msra.mxu0 0.0
    %942 = vmatprep.subr.mxu0 0.0
    %943 = vmatpush2.msra.mxu0 0.0
    %944 = vmatprep.subr.mxu0 0.0
    %945 = vmatpush2.msra.mxu0 0.0
    %946 = vmatprep.subr.mxu0 0.0
    %947 = vmatpush2.msra.mxu0 0.0
    %948 = vmatprep.subr.mxu0 0.0
    %949 = vmatpush2.msra.mxu0 0.0
    %950 = vmatprep.subr.mxu0 0.0
    %951 = vmatpush2.msra.mxu0 0.0
    %952 = vmatprep.subr.mxu0 0.0
    %953 = vmatpush2.msra.mxu0 0.0
    %954 = vmatprep.subr.mxu0 0.0
    %955 = vmatpush2.msra.mxu0 0.0
    %956 = vmatprep.mubr.f32.mxu0 0.0
    %957 = vmatmul.mubr.f32.gmra.mxu0 %v890
    %v958 = vpop.f32.mrf.mxu0
    %v959 = vadd.f32 0.0, %v958
    %v960 = vpop.f32.mrf.mxu0
    %v961 = vadd.f32 0.0, %v960
    %962 = vdwg.mxu0
    %v964 = vrot.slane %v888, 4
    %v965 = vsel %vm56, %v964, 0
    %967 = vmatprep.subr.mxu0 0.0
    %968 = vmatpush1.msra.mxu0 0.0
    %969 = vmatprep.subr.mxu0 0.0
    %970 = vmatpush1.msra.mxu0 0.0
    %971 = vmatprep.subr.mxu0 0.0
    %972 = vmatpush1.msra.mxu0 0.0
    %973 = vmatprep.subr.mxu0 0.0
    %974 = vmatpush1.msra.mxu0 0.0
    %975 = vmatprep.subr.mxu0 0.0
    %976 = vmatpush1.msra.mxu0 0.0
    %977 = vmatprep.subr.mxu0 0.0
    %978 = vmatpush1.msra.mxu0 0.0
    %979 = vmatprep.subr.mxu0 0.0
    %980 = vmatpush1.msra.mxu0 0.0
    %981 = vmatprep.subr.mxu0 0.0
    %982 = vmatpush1.msra.mxu0 0.0
    %983 = vmatprep.subr.mxu0 %v290
    %984 = vmatpush1.msra.mxu0 %v289
    %985 = vmatprep.subr.mxu0 %v288
    %986 = vmatpush1.msra.mxu0 %v287
    %987 = vmatprep.subr.mxu0 %v286
    %988 = vmatpush1.msra.mxu0 %v285
    %989 = vmatprep.subr.mxu0 %v284
    %990 = vmatpush1.msra.mxu0 %v283
    %991 = vmatprep.subr.mxu0 %v282
    %992 = vmatpush1.msra.mxu0 %v281
    %993 = vmatprep.subr.mxu0 %v280
    %994 = vmatpush1.msra.mxu0 %v279
    %995 = vmatprep.subr.mxu0 %v278
    %996 = vmatpush1.msra.mxu0 %v277
    %997 = vmatprep.subr.mxu0 %v276
    %998 = vmatpush1.msra.mxu0 %v275
    %999 = vmatprep.subr.mxu0 0.0
    %1000 = vmatpush2.msra.mxu0 0.0
    %1001 = vmatprep.subr.mxu0 0.0
    %1002 = vmatpush2.msra.mxu0 0.0
    %1003 = vmatprep.subr.mxu0 0.0
    %1004 = vmatpush2.msra.mxu0 0.0
    %1005 = vmatprep.subr.mxu0 0.0
    %1006 = vmatpush2.msra.mxu0 0.0
    %1007 = vmatprep.subr.mxu0 0.0
    %1008 = vmatpush2.msra.mxu0 0.0
    %1009 = vmatprep.subr.mxu0 0.0
    %1010 = vmatpush2.msra.mxu0 0.0
    %1011 = vmatprep.subr.mxu0 0.0
    %1012 = vmatpush2.msra.mxu0 0.0
    %1013 = vmatprep.subr.mxu0 0.0
    %1014 = vmatpush2.msra.mxu0 0.0
    %1015 = vmatprep.subr.mxu0 0.0
    %1016 = vmatpush2.msra.mxu0 0.0
    %1017 = vmatprep.subr.mxu0 0.0
    %1018 = vmatpush2.msra.mxu0 0.0
    %1019 = vmatprep.subr.mxu0 0.0
    %1020 = vmatpush2.msra.mxu0 0.0
    %1021 = vmatprep.subr.mxu0 0.0
    %1022 = vmatpush2.msra.mxu0 0.0
    %1023 = vmatprep.subr.mxu0 0.0
    %1024 = vmatpush2.msra.mxu0 0.0
    %1025 = vmatprep.subr.mxu0 0.0
    %1026 = vmatpush2.msra.mxu0 0.0
    %1027 = vmatprep.subr.mxu0 0.0
    %1028 = vmatpush2.msra.mxu0 0.0
    %1029 = vmatprep.subr.mxu0 0.0
    %1030 = vmatpush2.msra.mxu0 0.0
    %1031 = vmatprep.mubr.f32.mxu0 0.0
    %1032 = vmatmul.mubr.f32.gmra.mxu0 %v965
    %v1033 = vpop.f32.mrf.mxu0
    %v1034 = vadd.f32 %v959, %v1033
    %v1035 = vpop.f32.mrf.mxu0
    %v1036 = vadd.f32 %v961, %v1035
    %1037 = vdwg.mxu0
    %v1038 = vadd.f32 %v1034, %v146
    %v1039 = vadd.f32 %v1036, %v150
    %v1040 = vxor.u32 %v1038, 2147483648
    %v1041 = vxor.u32 %v1039, 2147483648
    %v1042 = vmul.f32 %v1040, 1.442695
    %v1043 = vpow.pop %v1042
    %v1044 = vmul.f32 %v1041, 1.442695
    %v1045 = vpow.pop %v1044
    %v1046 = vadd.f32 %v1043, 1.0
    %v1047 = vadd.f32 %v1045, 1.0
    %v1048 = vrcp.pop %v1046
    %v1049 = vmul.f32 1.0, %v1048
    %v1050 = vrcp.pop %v1047
    %v1051 = vmul.f32 1.0, %v1050
    %v1052 = vtanh.pop %v1039
    %v1053 = vmul.f32 %v1049, %v770
    %1055 = vrot.lane.b32.xlu0 %v1052, 64
    %v1056 = vpop.permute.xlu0 %1055
    %v1058 = vmul.f32 %v1049, %v1056
    %1060 = vrot.lane.b32.xlu0 %v1058, 64
    %v1061 = vpop.permute.xlu0 %1060
    %v1063 = vadd.f32 %v1053, %v1061
    %v1064 = vtanh.pop %v1063
    %1066 = vrot.lane.b32.xlu0 %v1064, 64
    %v1067 = vpop.permute.xlu0 %1066
    %v1069 = vmul.f32 %v1051, %v1067
    %1070 = vmatprep.subr.mxu0 0.0
    %1071 = vmatpush1.msra.mxu0 0.0
    %1072 = vmatprep.subr.mxu0 0.0
    %1073 = vmatpush1.msra.mxu0 0.0
    %1074 = vmatprep.subr.mxu0 0.0
    %1075 = vmatpush1.msra.mxu0 0.0
    %1076 = vmatprep.subr.mxu0 0.0
    %1077 = vmatpush1.msra.mxu0 0.0
    %1078 = vmatprep.subr.mxu0 0.0
    %1079 = vmatpush1.msra.mxu0 0.0
    %1080 = vmatprep.subr.mxu0 0.0
    %1081 = vmatpush1.msra.mxu0 0.0
    %1082 = vmatprep.subr.mxu0 0.0
    %1083 = vmatpush1.msra.mxu0 0.0
    %1084 = vmatprep.subr.mxu0 0.0
    %1085 = vmatpush1.msra.mxu0 0.0
    %1086 = vmatprep.subr.mxu0 %v168
    %1087 = vmatpush1.msra.mxu0 %v167
    %1088 = vmatprep.subr.mxu0 %v166
    %1089 = vmatpush1.msra.mxu0 %v165
    %1090 = vmatprep.subr.mxu0 %v164
    %1091 = vmatpush1.msra.mxu0 %v163
    %1092 = vmatprep.subr.mxu0 %v162
    %1093 = vmatpush1.msra.mxu0 %v161
    %1094 = vmatprep.subr.mxu0 %v160
    %1095 = vmatpush1.msra.mxu0 %v159
    %1096 = vmatprep.subr.mxu0 %v158
    %1097 = vmatpush1.msra.mxu0 %v157
    %1098 = vmatprep.subr.mxu0 %v156
    %1099 = vmatpush1.msra.mxu0 %v155
    %1100 = vmatprep.subr.mxu0 %v154
    %1101 = vmatpush1.msra.mxu0 %v153
    %1102 = vmatprep.subr.mxu0 0.0
    %1103 = vmatpush2.msra.mxu0 0.0
    %1104 = vmatprep.subr.mxu0 0.0
    %1105 = vmatpush2.msra.mxu0 0.0
    %1106 = vmatprep.subr.mxu0 0.0
    %1107 = vmatpush2.msra.mxu0 0.0
    %1108 = vmatprep.subr.mxu0 0.0
    %1109 = vmatpush2.msra.mxu0 0.0
    %1110 = vmatprep.subr.mxu0 0.0
    %1111 = vmatpush2.msra.mxu0 0.0
    %1112 = vmatprep.subr.mxu0 0.0
    %1113 = vmatpush2.msra.mxu0 0.0
    %1114 = vmatprep.subr.mxu0 0.0
    %1115 = vmatpush2.msra.mxu0 0.0
    %1116 = vmatprep.subr.mxu0 0.0
    %1117 = vmatpush2.msra.mxu0 0.0
    %1118 = vmatprep.subr.mxu0 0.0
    %1119 = vmatpush2.msra.mxu0 0.0
    %1120 = vmatprep.subr.mxu0 0.0
    %1121 = vmatpush2.msra.mxu0 0.0
    %1122 = vmatprep.subr.mxu0 0.0
    %1123 = vmatpush2.msra.mxu0 0.0
    %1124 = vmatprep.subr.mxu0 0.0
    %1125 = vmatpush2.msra.mxu0 0.0
    %1126 = vmatprep.subr.mxu0 0.0
    %1127 = vmatpush2.msra.mxu0 0.0
    %1128 = vmatprep.subr.mxu0 0.0
    %1129 = vmatpush2.msra.mxu0 0.0
    %1130 = vmatprep.subr.mxu0 0.0
    %1131 = vmatpush2.msra.mxu0 0.0
    %1132 = vmatprep.subr.mxu0 0.0
    %1133 = vmatpush2.msra.mxu0 0.0
    %1134 = vmatprep.mubr.f32.mxu0 0.0
    %1135 = vmatmul.mubr.f32.gmra.mxu0 %v965
    %v1136 = vpop.f32.mrf.mxu0
    %v1137 = vadd.f32 0.0, %v1136
    %v1138 = vpop.f32.mrf.mxu0
    %v1139 = vadd.f32 0.0, %v1138
    %1140 = vdwg.mxu0
    %v1143 = vrot.slane %v1137, 2
    %v1144 = vrot.slane %v1139, 2
    %v1147 = vadd.f32 %v130, %v1143
    %v1148 = vadd.f32 %v132, %v1144
    %v1149 = vxor.u32 %v1147, 2147483648
    %v1150 = vxor.u32 %v1148, 2147483648
    %v1151 = vmul.f32 %v1149, 1.442695
    %v1152 = vpow.pop %v1151
    %v1153 = vmul.f32 %v1150, 1.442695
    %v1154 = vpow.pop %v1153
    %v1155 = vadd.f32 %v1152, 1.0
    %v1156 = vadd.f32 %v1154, 1.0
    %v1157 = vrcp.pop %v1155
    %v1158 = vmul.f32 1.0, %v1157
    %v1159 = vrcp.pop %v1156
    %v1160 = vmul.f32 1.0, %v1159
    %v1161 = vtanh.pop %v1148
    %v1163 = vrot.slane %v882, 6
    %v1165 = vmul.f32 %v1158, %v1163
    %1167 = vrot.lane.b32.xlu0 %v1161, 64
    %v1168 = vpop.permute.xlu0 %1167
    %v1170 = vmul.f32 %v1158, %v1168
    %1172 = vrot.lane.b32.xlu0 %v1170, 64
    %v1173 = vpop.permute.xlu0 %1172
    %v1175 = vadd.f32 %v1165, %v1173
    %v1176 = vtanh.pop %v1175
    %1178 = vrot.lane.b32.xlu0 %v1176, 64
    %v1179 = vpop.permute.xlu0 %1178
    %v1181 = vmul.f32 %v1160, %v1179
    %v1183 = vsel %vm56, %v1069, 0
    %1185 = vmatprep.subr.mxu0 0.0
    %1186 = vmatpush1.msra.mxu0 0.0
    %1187 = vmatprep.subr.mxu0 0.0
    %1188 = vmatpush1.msra.mxu0 0.0
    %1189 = vmatprep.subr.mxu0 0.0
    %1190 = vmatpush1.msra.mxu0 0.0
    %1191 = vmatprep.subr.mxu0 0.0
    %1192 = vmatpush1.msra.mxu0 0.0
    %1193 = vmatprep.subr.mxu0 0.0
    %1194 = vmatpush1.msra.mxu0 0.0
    %1195 = vmatprep.subr.mxu0 0.0
    %1196 = vmatpush1.msra.mxu0 0.0
    %1197 = vmatprep.subr.mxu0 0.0
    %1198 = vmatpush1.msra.mxu0 0.0
    %1199 = vmatprep.subr.mxu0 0.0
    %1200 = vmatpush1.msra.mxu0 0.0
    %1201 = vmatprep.subr.mxu0 %v306
    %1202 = vmatpush1.msra.mxu0 %v305
    %1203 = vmatprep.subr.mxu0 %v304
    %1204 = vmatpush1.msra.mxu0 %v303
    %1205 = vmatprep.subr.mxu0 %v302
    %1206 = vmatpush1.msra.mxu0 %v301
    %1207 = vmatprep.subr.mxu0 %v300
    %1208 = vmatpush1.msra.mxu0 %v299
    %1209 = vmatprep.subr.mxu0 %v298
    %1210 = vmatpush1.msra.mxu0 %v297
    %1211 = vmatprep.subr.mxu0 %v296
    %1212 = vmatpush1.msra.mxu0 %v295
    %1213 = vmatprep.subr.mxu0 %v294
    %1214 = vmatpush1.msra.mxu0 %v293
    %1215 = vmatprep.subr.mxu0 %v292
    %1216 = vmatpush1.msra.mxu0 %v291
    %1217 = vmatprep.subr.mxu0 0.0
    %1218 = vmatpush2.msra.mxu0 0.0
    %1219 = vmatprep.subr.mxu0 0.0
    %1220 = vmatpush2.msra.mxu0 0.0
    %1221 = vmatprep.subr.mxu0 0.0
    %1222 = vmatpush2.msra.mxu0 0.0
    %1223 = vmatprep.subr.mxu0 0.0
    %1224 = vmatpush2.msra.mxu0 0.0
    %1225 = vmatprep.subr.mxu0 0.0
    %1226 = vmatpush2.msra.mxu0 0.0
    %1227 = vmatprep.subr.mxu0 0.0
    %1228 = vmatpush2.msra.mxu0 0.0
    %1229 = vmatprep.subr.mxu0 0.0
    %1230 = vmatpush2.msra.mxu0 0.0
    %1231 = vmatprep.subr.mxu0 0.0
    %1232 = vmatpush2.msra.mxu0 0.0
    %1233 = vmatprep.subr.mxu0 0.0
    %1234 = vmatpush2.msra.mxu0 0.0
    %1235 = vmatprep.subr.mxu0 0.0
    %1236 = vmatpush2.msra.mxu0 0.0
    %1237 = vmatprep.subr.mxu0 0.0
    %1238 = vmatpush2.msra.mxu0 0.0
    %1239 = vmatprep.subr.mxu0 0.0
    %1240 = vmatpush2.msra.mxu0 0.0
    %1241 = vmatprep.subr.mxu0 0.0
    %1242 = vmatpush2.msra.mxu0 0.0
    %1243 = vmatprep.subr.mxu0 0.0
    %1244 = vmatpush2.msra.mxu0 0.0
    %1245 = vmatprep.subr.mxu0 0.0
    %1246 = vmatpush2.msra.mxu0 0.0
    %1247 = vmatprep.subr.mxu0 0.0
    %1248 = vmatpush2.msra.mxu0 0.0
    %1249 = vmatprep.mubr.f32.mxu0 0.0
    %1250 = vmatmul.mubr.f32.gmra.mxu0 %v1183
    %v1251 = vpop.f32.mrf.mxu0
    %v1252 = vadd.f32 0.0, %v1251
    %v1253 = vpop.f32.mrf.mxu0
    %v1254 = vadd.f32 0.0, %v1253
    %1255 = vdwg.mxu0
    %v1257 = vrot.slane %v1181, 6
    %v1258 = vsel %vm56, %v1257, 0
    %1260 = vmatprep.subr.mxu0 0.0
    %1261 = vmatpush1.msra.mxu0 0.0
    %1262 = vmatprep.subr.mxu0 0.0
    %1263 = vmatpush1.msra.mxu0 0.0
    %1264 = vmatprep.subr.mxu0 0.0
    %1265 = vmatpush1.msra.mxu0 0.0
    %1266 = vmatprep.subr.mxu0 0.0
    %1267 = vmatpush1.msra.mxu0 0.0
    %1268 = vmatprep.subr.mxu0 0.0
    %1269 = vmatpush1.msra.mxu0 0.0
    %1270 = vmatprep.subr.mxu0 0.0
    %1271 = vmatpush1.msra.mxu0 0.0
    %1272 = vmatprep.subr.mxu0 0.0
    %1273 = vmatpush1.msra.mxu0 0.0
    %1274 = vmatprep.subr.mxu0 0.0
    %1275 = vmatpush1.msra.mxu0 0.0
    %1276 = vmatprep.subr.mxu0 %v290
    %1277 = vmatpush1.msra.mxu0 %v289
    %1278 = vmatprep.subr.mxu0 %v288
    %1279 = vmatpush1.msra.mxu0 %v287
    %1280 = vmatprep.subr.mxu0 %v286
    %1281 = vmatpush1.msra.mxu0 %v285
    %1282 = vmatprep.subr.mxu0 %v284
    %1283 = vmatpush1.msra.mxu0 %v283
    %1284 = vmatprep.subr.mxu0 %v282
    %1285 = vmatpush1.msra.mxu0 %v281
    %1286 = vmatprep.subr.mxu0 %v280
    %1287 = vmatpush1.msra.mxu0 %v279
    %1288 = vmatprep.subr.mxu0 %v278
    %1289 = vmatpush1.msra.mxu0 %v277
    %1290 = vmatprep.subr.mxu0 %v276
    %1291 = vmatpush1.msra.mxu0 %v275
    %1292 = vmatprep.subr.mxu0 0.0
    %1293 = vmatpush2.msra.mxu0 0.0
    %1294 = vmatprep.subr.mxu0 0.0
    %1295 = vmatpush2.msra.mxu0 0.0
    %1296 = vmatprep.subr.mxu0 0.0
    %1297 = vmatpush2.msra.mxu0 0.0
    %1298 = vmatprep.subr.mxu0 0.0
    %1299 = vmatpush2.msra.mxu0 0.0
    %1300 = vmatprep.subr.mxu0 0.0
    %1301 = vmatpush2.msra.mxu0 0.0
    %1302 = vmatprep.subr.mxu0 0.0
    %1303 = vmatpush2.msra.mxu0 0.0
    %1304 = vmatprep.subr.mxu0 0.0
    %1305 = vmatpush2.msra.mxu0 0.0
    %1306 = vmatprep.subr.mxu0 0.0
    %1307 = vmatpush2.msra.mxu0 0.0
    %1308 = vmatprep.subr.mxu0 0.0
    %1309 = vmatpush2.msra.mxu0 0.0
    %1310 = vmatprep.subr.mxu0 0.0
    %1311 = vmatpush2.msra.mxu0 0.0
    %1312 = vmatprep.subr.mxu0 0.0
    %1313 = vmatpush2.msra.mxu0 0.0
    %1314 = vmatprep.subr.mxu0 0.0
    %1315 = vmatpush2.msra.mxu0 0.0
    %1316 = vmatprep.subr.mxu0 0.0
    %1317 = vmatpush2.msra.mxu0 0.0
    %1318 = vmatprep.subr.mxu0 0.0
    %1319 = vmatpush2.msra.mxu0 0.0
    %1320 = vmatprep.subr.mxu0 0.0
    %1321 = vmatpush2.msra.mxu0 0.0
    %1322 = vmatprep.subr.mxu0 0.0
    %1323 = vmatpush2.msra.mxu0 0.0
    %1324 = vmatprep.mubr.f32.mxu0 0.0
    %1325 = vmatmul.mubr.f32.gmra.mxu0 %v1258
    %v1326 = vpop.f32.mrf.mxu0
    %v1327 = vadd.f32 %v1252, %v1326
    %v1328 = vpop.f32.mrf.mxu0
    %v1329 = vadd.f32 %v1254, %v1328
    %1330 = vdwg.mxu0
    %v1331 = vadd.f32 %v1327, %v146
    %v1332 = vadd.f32 %v1329, %v150
    %v1333 = vxor.u32 %v1331, 2147483648
    %v1334 = vxor.u32 %v1332, 2147483648
    %v1335 = vmul.f32 %v1333, 1.442695
    %v1336 = vpow.pop %v1335
    %v1337 = vmul.f32 %v1334, 1.442695
    %v1338 = vpow.pop %v1337
    %v1339 = vadd.f32 %v1336, 1.0
    %v1340 = vadd.f32 %v1338, 1.0
    %v1341 = vrcp.pop %v1339
    %v1342 = vmul.f32 1.0, %v1341
    %v1343 = vrcp.pop %v1340
    %v1344 = vmul.f32 1.0, %v1343
    %v1345 = vtanh.pop %v1332
    %v1346 = vmul.f32 %v1342, %v1063
    %1348 = vrot.lane.b32.xlu0 %v1345, 64
    %v1349 = vpop.permute.xlu0 %1348
    %v1351 = vmul.f32 %v1342, %v1349
    %1353 = vrot.lane.b32.xlu0 %v1351, 64
    %v1354 = vpop.permute.xlu0 %1353
    %v1356 = vadd.f32 %v1346, %v1354
    %v1357 = vtanh.pop %v1356
    %1359 = vrot.lane.b32.xlu0 %v1357, 64
    %v1360 = vpop.permute.xlu0 %1359
    %v1362 = vmul.f32 %v1344, %v1360
    %1363 = vmatprep.subr.mxu0 0.0
    %1364 = vmatpush1.msra.mxu0 0.0
    %1365 = vmatprep.subr.mxu0 0.0
    %1366 = vmatpush1.msra.mxu0 0.0
    %1367 = vmatprep.subr.mxu0 0.0
    %1368 = vmatpush1.msra.mxu0 0.0
    %1369 = vmatprep.subr.mxu0 0.0
    %1370 = vmatpush1.msra.mxu0 0.0
    %1371 = vmatprep.subr.mxu0 0.0
    %1372 = vmatpush1.msra.mxu0 0.0
    %1373 = vmatprep.subr.mxu0 0.0
    %1374 = vmatpush1.msra.mxu0 0.0
    %1375 = vmatprep.subr.mxu0 0.0
    %1376 = vmatpush1.msra.mxu0 0.0
    %1377 = vmatprep.subr.mxu0 0.0
    %1378 = vmatpush1.msra.mxu0 0.0
    %1379 = vmatprep.subr.mxu0 %v168
    %1380 = vmatpush1.msra.mxu0 %v167
    %1381 = vmatprep.subr.mxu0 %v166
    %1382 = vmatpush1.msra.mxu0 %v165
    %1383 = vmatprep.subr.mxu0 %v164
    %1384 = vmatpush1.msra.mxu0 %v163
    %1385 = vmatprep.subr.mxu0 %v162
    %1386 = vmatpush1.msra.mxu0 %v161
    %1387 = vmatprep.subr.mxu0 %v160
    %1388 = vmatpush1.msra.mxu0 %v159
    %1389 = vmatprep.subr.mxu0 %v158
    %1390 = vmatpush1.msra.mxu0 %v157
    %1391 = vmatprep.subr.mxu0 %v156
    %1392 = vmatpush1.msra.mxu0 %v155
    %1393 = vmatprep.subr.mxu0 %v154
    %1394 = vmatpush1.msra.mxu0 %v153
    %1395 = vmatprep.subr.mxu0 0.0
    %1396 = vmatpush2.msra.mxu0 0.0
    %1397 = vmatprep.subr.mxu0 0.0
    %1398 = vmatpush2.msra.mxu0 0.0
    %1399 = vmatprep.subr.mxu0 0.0
    %1400 = vmatpush2.msra.mxu0 0.0
    %1401 = vmatprep.subr.mxu0 0.0
    %1402 = vmatpush2.msra.mxu0 0.0
    %1403 = vmatprep.subr.mxu0 0.0
    %1404 = vmatpush2.msra.mxu0 0.0
    %1405 = vmatprep.subr.mxu0 0.0
    %1406 = vmatpush2.msra.mxu0 0.0
    %1407 = vmatprep.subr.mxu0 0.0
    %1408 = vmatpush2.msra.mxu0 0.0
    %1409 = vmatprep.subr.mxu0 0.0
    %1410 = vmatpush2.msra.mxu0 0.0
    %1411 = vmatprep.subr.mxu0 0.0
    %1412 = vmatpush2.msra.mxu0 0.0
    %1413 = vmatprep.subr.mxu0 0.0
    %1414 = vmatpush2.msra.mxu0 0.0
    %1415 = vmatprep.subr.mxu0 0.0
    %1416 = vmatpush2.msra.mxu0 0.0
    %1417 = vmatprep.subr.mxu0 0.0
    %1418 = vmatpush2.msra.mxu0 0.0
    %1419 = vmatprep.subr.mxu0 0.0
    %1420 = vmatpush2.msra.mxu0 0.0
    %1421 = vmatprep.subr.mxu0 0.0
    %1422 = vmatpush2.msra.mxu0 0.0
    %1423 = vmatprep.subr.mxu0 0.0
    %1424 = vmatpush2.msra.mxu0 0.0
    %1425 = vmatprep.subr.mxu0 0.0
    %1426 = vmatpush2.msra.mxu0 0.0
    %1427 = vmatprep.mubr.f32.mxu0 0.0
    %1428 = vmatmul.mubr.f32.gmra.mxu0 %v1258
    %v1429 = vpop.f32.mrf.mxu0
    %v1430 = vadd.f32 0.0, %v1429
    %v1431 = vpop.f32.mrf.mxu0
    %v1432 = vadd.f32 0.0, %v1431
    %1433 = vdwg.mxu0
    %v1434 = vadd.f32 %v136, %v1430
    %v1435 = vadd.f32 %v138, %v1432
    %v1436 = vxor.u32 %v1434, 2147483648
    %v1437 = vxor.u32 %v1435, 2147483648
    %v1438 = vmul.f32 %v1436, 1.442695
    %v1439 = vpow.pop %v1438
    %v1440 = vmul.f32 %v1437, 1.442695
    %v1441 = vpow.pop %v1440
    %v1442 = vadd.f32 %v1439, 1.0
    %v1443 = vadd.f32 %v1441, 1.0
    %v1444 = vrcp.pop %v1442
    %v1445 = vmul.f32 1.0, %v1444
    %v1446 = vrcp.pop %v1443
    %v1447 = vmul.f32 1.0, %v1446
    %v1448 = vtanh.pop %v1435
    %v1450 = vrot.slane %v1175, 6
    %v1452 = vmul.f32 %v1445, %v1450
    %1454 = vrot.lane.b32.xlu0 %v1448, 64
    %v1455 = vpop.permute.xlu0 %1454
    %v1457 = vmul.f32 %v1445, %v1455
    %1459 = vrot.lane.b32.xlu0 %v1457, 64
    %v1460 = vpop.permute.xlu0 %1459
    %v1462 = vadd.f32 %v1452, %v1460
    %v1463 = vtanh.pop %v1462
    %1465 = vrot.lane.b32.xlu0 %v1463, 64
    %v1466 = vpop.permute.xlu0 %1465
    %v1468 = vmul.f32 %v1447, %v1466
    %v1470 = vsel %vm56, %v1362, 0
    %1472 = vmatprep.subr.mxu0 0.0
    %1473 = vmatpush1.msra.mxu0 0.0
    %1474 = vmatprep.subr.mxu0 0.0
    %1475 = vmatpush1.msra.mxu0 0.0
    %1476 = vmatprep.subr.mxu0 0.0
    %1477 = vmatpush1.msra.mxu0 0.0
    %1478 = vmatprep.subr.mxu0 0.0
    %1479 = vmatpush1.msra.mxu0 0.0
    %1480 = vmatprep.subr.mxu0 0.0
    %1481 = vmatpush1.msra.mxu0 0.0
    %1482 = vmatprep.subr.mxu0 0.0
    %1483 = vmatpush1.msra.mxu0 0.0
    %1484 = vmatprep.subr.mxu0 0.0
    %1485 = vmatpush1.msra.mxu0 0.0
    %1486 = vmatprep.subr.mxu0 0.0
    %1487 = vmatpush1.msra.mxu0 0.0
    %1488 = vmatprep.subr.mxu0 %v306
    %1489 = vmatpush1.msra.mxu0 %v305
    %1490 = vmatprep.subr.mxu0 %v304
    %1491 = vmatpush1.msra.mxu0 %v303
    %1492 = vmatprep.subr.mxu0 %v302
    %1493 = vmatpush1.msra.mxu0 %v301
    %1494 = vmatprep.subr.mxu0 %v300
    %1495 = vmatpush1.msra.mxu0 %v299
    %1496 = vmatprep.subr.mxu0 %v298
    %1497 = vmatpush1.msra.mxu0 %v297
    %1498 = vmatprep.subr.mxu0 %v296
    %1499 = vmatpush1.msra.mxu0 %v295
    %1500 = vmatprep.subr.mxu0 %v294
    %1501 = vmatpush1.msra.mxu0 %v293
    %1502 = vmatprep.subr.mxu0 %v292
    %1503 = vmatpush1.msra.mxu0 %v291
    %1504 = vmatprep.subr.mxu0 0.0
    %1505 = vmatpush2.msra.mxu0 0.0
    %1506 = vmatprep.subr.mxu0 0.0
    %1507 = vmatpush2.msra.mxu0 0.0
    %1508 = vmatprep.subr.mxu0 0.0
    %1509 = vmatpush2.msra.mxu0 0.0
    %1510 = vmatprep.subr.mxu0 0.0
    %1511 = vmatpush2.msra.mxu0 0.0
    %1512 = vmatprep.subr.mxu0 0.0
    %1513 = vmatpush2.msra.mxu0 0.0
    %1514 = vmatprep.subr.mxu0 0.0
    %1515 = vmatpush2.msra.mxu0 0.0
    %1516 = vmatprep.subr.mxu0 0.0
    %1517 = vmatpush2.msra.mxu0 0.0
    %1518 = vmatprep.subr.mxu0 0.0
    %1519 = vmatpush2.msra.mxu0 0.0
    %1520 = vmatprep.subr.mxu0 0.0
    %1521 = vmatpush2.msra.mxu0 0.0
    %1522 = vmatprep.subr.mxu0 0.0
    %1523 = vmatpush2.msra.mxu0 0.0
    %1524 = vmatprep.subr.mxu0 0.0
    %1525 = vmatpush2.msra.mxu0 0.0
    %1526 = vmatprep.subr.mxu0 0.0
    %1527 = vmatpush2.msra.mxu0 0.0
    %1528 = vmatprep.subr.mxu0 0.0
    %1529 = vmatpush2.msra.mxu0 0.0
    %1530 = vmatprep.subr.mxu0 0.0
    %1531 = vmatpush2.msra.mxu0 0.0
    %1532 = vmatprep.subr.mxu0 0.0
    %1533 = vmatpush2.msra.mxu0 0.0
    %1534 = vmatprep.subr.mxu0 0.0
    %1535 = vmatpush2.msra.mxu0 0.0
    %1536 = vmatprep.mubr.f32.mxu0 0.0
    %1537 = vmatmul.mubr.f32.gmra.mxu0 %v1470
    %v1538 = vpop.f32.mrf.mxu0
    %v1539 = vadd.f32 0.0, %v1538
    %v1540 = vpop.f32.mrf.mxu0
    %v1541 = vadd.f32 0.0, %v1540
    %1542 = vdwg.mxu0
    %v1544 = vsel %vm56, %v1468, 0
    %1546 = vmatprep.subr.mxu0 0.0
    %1547 = vmatpush1.msra.mxu0 0.0
    %1548 = vmatprep.subr.mxu0 0.0
    %1549 = vmatpush1.msra.mxu0 0.0
    %1550 = vmatprep.subr.mxu0 0.0
    %1551 = vmatpush1.msra.mxu0 0.0
    %1552 = vmatprep.subr.mxu0 0.0
    %1553 = vmatpush1.msra.mxu0 0.0
    %1554 = vmatprep.subr.mxu0 0.0
    %1555 = vmatpush1.msra.mxu0 0.0
    %1556 = vmatprep.subr.mxu0 0.0
    %1557 = vmatpush1.msra.mxu0 0.0
    %1558 = vmatprep.subr.mxu0 0.0
    %1559 = vmatpush1.msra.mxu0 0.0
    %1560 = vmatprep.subr.mxu0 0.0
    %1561 = vmatpush1.msra.mxu0 0.0
    %1562 = vmatprep.subr.mxu0 %v290
    %1563 = vmatpush1.msra.mxu0 %v289
    %1564 = vmatprep.subr.mxu0 %v288
    %1565 = vmatpush1.msra.mxu0 %v287
    %1566 = vmatprep.subr.mxu0 %v286
    %1567 = vmatpush1.msra.mxu0 %v285
    %1568 = vmatprep.subr.mxu0 %v284
    %1569 = vmatpush1.msra.mxu0 %v283
    %1570 = vmatprep.subr.mxu0 %v282
    %1571 = vmatpush1.msra.mxu0 %v281
    %1572 = vmatprep.subr.mxu0 %v280
    %1573 = vmatpush1.msra.mxu0 %v279
    %1574 = vmatprep.subr.mxu0 %v278
    %1575 = vmatpush1.msra.mxu0 %v277
    %1576 = vmatprep.subr.mxu0 %v276
    %1577 = vmatpush1.msra.mxu0 %v275
    %1578 = vmatprep.subr.mxu0 0.0
    %1579 = vmatpush2.msra.mxu0 0.0
    %1580 = vmatprep.subr.mxu0 0.0
    %1581 = vmatpush2.msra.mxu0 0.0
    %1582 = vmatprep.subr.mxu0 0.0
    %1583 = vmatpush2.msra.mxu0 0.0
    %1584 = vmatprep.subr.mxu0 0.0
    %1585 = vmatpush2.msra.mxu0 0.0
    %1586 = vmatprep.subr.mxu0 0.0
    %1587 = vmatpush2.msra.mxu0 0.0
    %1588 = vmatprep.subr.mxu0 0.0
    %1589 = vmatpush2.msra.mxu0 0.0
    %1590 = vmatprep.subr.mxu0 0.0
    %1591 = vmatpush2.msra.mxu0 0.0
    %1592 = vmatprep.subr.mxu0 0.0
    %1593 = vmatpush2.msra.mxu0 0.0
    %1594 = vmatprep.subr.mxu0 0.0
    %1595 = vmatpush2.msra.mxu0 0.0
    %1596 = vmatprep.subr.mxu0 0.0
    %1597 = vmatpush2.msra.mxu0 0.0
    %1598 = vmatprep.subr.mxu0 0.0
    %1599 = vmatpush2.msra.mxu0 0.0
    %1600 = vmatprep.subr.mxu0 0.0
    %1601 = vmatpush2.msra.mxu0 0.0
    %1602 = vmatprep.subr.mxu0 0.0
    %1603 = vmatpush2.msra.mxu0 0.0
    %1604 = vmatprep.subr.mxu0 0.0
    %1605 = vmatpush2.msra.mxu0 0.0
    %1606 = vmatprep.subr.mxu0 0.0
    %1607 = vmatpush2.msra.mxu0 0.0
    %1608 = vmatprep.subr.mxu0 0.0
    %1609 = vmatpush2.msra.mxu0 0.0
    %1610 = vmatprep.mubr.f32.mxu0 0.0
    %1611 = vmatmul.mubr.f32.gmra.mxu0 %v1544
    %v1612 = vpop.f32.mrf.mxu0
    %v1613 = vadd.f32 %v1539, %v1612
    %v1614 = vpop.f32.mrf.mxu0
    %v1615 = vadd.f32 %v1541, %v1614
    %1616 = vdwg.mxu0
    %v1617 = vadd.f32 %v1613, %v146
    %v1618 = vadd.f32 %v1615, %v150
    %v1619 = vxor.u32 %v1617, 2147483648
    %v1620 = vxor.u32 %v1618, 2147483648
    %v1621 = vmul.f32 %v1619, 1.442695
    %v1622 = vpow.pop %v1621
    %v1623 = vmul.f32 %v1620, 1.442695
    %v1624 = vpow.pop %v1623
    %v1625 = vadd.f32 %v1622, 1.0
    %v1626 = vadd.f32 %v1624, 1.0
    %v1627 = vrcp.pop %v1625
    %v1628 = vmul.f32 1.0, %v1627
    %v1629 = vrcp.pop %v1626
    %v1630 = vmul.f32 1.0, %v1629
    %v1631 = vtanh.pop %v1618
    %v1632 = vmul.f32 %v1628, %v1356
    %1634 = vrot.lane.b32.xlu0 %v1631, 64
    %v1635 = vpop.permute.xlu0 %1634
    %v1637 = vmul.f32 %v1628, %v1635
    %1639 = vrot.lane.b32.xlu0 %v1637, 64
    %v1640 = vpop.permute.xlu0 %1639
    %v1642 = vadd.f32 %v1632, %v1640
    %v1643 = vtanh.pop %v1642
    %1645 = vrot.lane.b32.xlu0 %v1643, 64
    %v1646 = vpop.permute.xlu0 %1645
    %v1648 = vmul.f32 %v1630, %v1646
    %v1649 = vld [vmem:[#allocation2 + $0x380] sm:$0xff]
    %v1650 = vld [vmem:[#allocation2 + $0x390] sm:$0xff]
    %v1651 = vld [vmem:[#allocation2 + $0x3a0] sm:$0xff]
    %v1652 = vld [vmem:[#allocation2 + $0x3b0] sm:$0xff]
    %v1653 = vld [vmem:[#allocation2 + $0x3c0] sm:$0xff]
    %v1654 = vld [vmem:[#allocation2 + $0x3d0] sm:$0xff]
    %v1655 = vld [vmem:[#allocation2 + $0x3e0] sm:$0xff]
    %v1656 = vld [vmem:[#allocation2 + $0x3f0] sm:$0xff]
    %v1657 = vld [vmem:[#allocation2 + $0x6c0] ss:$0 sm:$0xff]
    %v1659 = vsel %vm56, %v1648, 0
    %1661 = vmatprep.subr.mxu0 0.0
    %1662 = vmatpush1.msra.mxu0 0.0
    %1663 = vmatprep.subr.mxu0 0.0
    %1664 = vmatpush1.msra.mxu0 0.0
    %1665 = vmatprep.subr.mxu0 0.0
    %1666 = vmatpush1.msra.mxu0 0.0
    %1667 = vmatprep.subr.mxu0 0.0
    %1668 = vmatpush1.msra.mxu0 0.0
    %1669 = vmatprep.subr.mxu0 0.0
    %1670 = vmatpush1.msra.mxu0 0.0
    %1671 = vmatprep.subr.mxu0 0.0
    %1672 = vmatpush1.msra.mxu0 0.0
    %1673 = vmatprep.subr.mxu0 0.0
    %1674 = vmatpush1.msra.mxu0 0.0
    %1675 = vmatprep.subr.mxu0 0.0
    %1676 = vmatpush1.msra.mxu0 0.0
    %1677 = vmatprep.subr.mxu0 0.0
    %1678 = vmatpush1.msra.mxu0 %v1656
    %1679 = vmatprep.subr.mxu0 0.0
    %1680 = vmatpush1.msra.mxu0 %v1655
    %1681 = vmatprep.subr.mxu0 0.0
    %1682 = vmatpush1.msra.mxu0 %v1654
    %1683 = vmatprep.subr.mxu0 0.0
    %1684 = vmatpush1.msra.mxu0 %v1653
    %1685 = vmatprep.subr.mxu0 0.0
    %1686 = vmatpush1.msra.mxu0 %v1652
    %1687 = vmatprep.subr.mxu0 0.0
    %1688 = vmatpush1.msra.mxu0 %v1651
    %1689 = vmatprep.subr.mxu0 0.0
    %1690 = vmatpush1.msra.mxu0 %v1650
    %1691 = vmatprep.subr.mxu0 0.0
    %1692 = vmatpush1.msra.mxu0 %v1649
    %1693 = vmatprep.subr.mxu0 0.0
    %1694 = vmatpush2.msra.mxu0 0.0
    %1695 = vmatprep.subr.mxu0 0.0
    %1696 = vmatpush2.msra.mxu0 0.0
    %1697 = vmatprep.subr.mxu0 0.0
    %1698 = vmatpush2.msra.mxu0 0.0
    %1699 = vmatprep.subr.mxu0 0.0
    %1700 = vmatpush2.msra.mxu0 0.0
    %1701 = vmatprep.subr.mxu0 0.0
    %1702 = vmatpush2.msra.mxu0 0.0
    %1703 = vmatprep.subr.mxu0 0.0
    %1704 = vmatpush2.msra.mxu0 0.0
    %1705 = vmatprep.subr.mxu0 0.0
    %1706 = vmatpush2.msra.mxu0 0.0
    %1707 = vmatprep.subr.mxu0 0.0
    %1708 = vmatpush2.msra.mxu0 0.0
    %1709 = vmatprep.subr.mxu0 0.0
    %1710 = vmatpush2.msra.mxu0 0.0
    %1711 = vmatprep.subr.mxu0 0.0
    %1712 = vmatpush2.msra.mxu0 0.0
    %1713 = vmatprep.subr.mxu0 0.0
    %1714 = vmatpush2.msra.mxu0 0.0
    %1715 = vmatprep.subr.mxu0 0.0
    %1716 = vmatpush2.msra.mxu0 0.0
    %1717 = vmatprep.subr.mxu0 0.0
    %1718 = vmatpush2.msra.mxu0 0.0
    %1719 = vmatprep.subr.mxu0 0.0
    %1720 = vmatpush2.msra.mxu0 0.0
    %1721 = vmatprep.subr.mxu0 0.0
    %1722 = vmatpush2.msra.mxu0 0.0
    %1723 = vmatprep.subr.mxu0 0.0
    %1724 = vmatpush2.msra.mxu0 0.0
    %1725 = vmatprep.mubr.f32.mxu0 0.0
    %1726 = vmatmul.mubr.f32.gmra.mxu0 %v1659
    %v1727 = vpop.f32.mrf.mxu0
    %v1728 = vadd.f32 %v1657, %v1727
    %v1729 = vpop.f32.mrf.mxu0
    %1730 = vdwg.mxu0
    %v1731 = vmax.f32 %v1728, 0.0
    %v1732 = vld [vmem:[#allocation2 + $0x400] sm:$0xff]
    %v1733 = vld [vmem:[#allocation2 + $0x410] sm:$0xff]
    %v1734 = vld [vmem:[#allocation2 + $0x420] sm:$0xff]
    %v1735 = vld [vmem:[#allocation2 + $0x430] sm:$0xff]
    %v1736 = vld [vmem:[#allocation2 + $0x440] sm:$0xff]
    %v1737 = vld [vmem:[#allocation2 + $0x450] sm:$0xff]
    %v1738 = vld [vmem:[#allocation2 + $0x460] sm:$0xff]
    %v1739 = vld [vmem:[#allocation2 + $0x470] sm:$0xff]
    %v1740 = vld [vmem:[#allocation2 + $0x480] sm:$0xff]
    %v1741 = vld [vmem:[#allocation2 + $0x490] sm:$0xff]
    %v1742 = vld [vmem:[#allocation2 + $0x4a0] sm:$0xff]
    %v1743 = vld [vmem:[#allocation2 + $0x4b0] sm:$0xff]
    %v1744 = vld [vmem:[#allocation2 + $0x4c0] sm:$0xff]
    %v1745 = vld [vmem:[#allocation2 + $0x4d0] sm:$0xff]
    %v1746 = vld [vmem:[#allocation2 + $0x4e0] sm:$0xff]
    %v1747 = vld [vmem:[#allocation2 + $0x4f0] sm:$0xff]
    %v1748 = vld [vmem:[#allocation2 + $0x6d0] ss:$0 sm:$0xff]
    %1749 = vmatprep.subr.mxu0 0.0
    %1750 = vmatpush1.msra.mxu0 %v1747
    %1751 = vmatprep.subr.mxu0 0.0
    %1752 = vmatpush1.msra.mxu0 %v1746
    %1753 = vmatprep.subr.mxu0 0.0
    %1754 = vmatpush1.msra.mxu0 %v1745
    %1755 = vmatprep.subr.mxu0 0.0
    %1756 = vmatpush1.msra.mxu0 %v1744
    %1757 = vmatprep.subr.mxu0 0.0
    %1758 = vmatpush1.msra.mxu0 %v1743
    %1759 = vmatprep.subr.mxu0 0.0
    %1760 = vmatpush1.msra.mxu0 %v1742
    %1761 = vmatprep.subr.mxu0 0.0
    %1762 = vmatpush1.msra.mxu0 %v1741
    %1763 = vmatprep.subr.mxu0 0.0
    %1764 = vmatpush1.msra.mxu0 %v1740
    %1765 = vmatprep.subr.mxu0 0.0
    %1766 = vmatpush1.msra.mxu0 %v1739
    %1767 = vmatprep.subr.mxu0 0.0
    %1768 = vmatpush1.msra.mxu0 %v1738
    %1769 = vmatprep.subr.mxu0 0.0
    %1770 = vmatpush1.msra.mxu0 %v1737
    %1771 = vmatprep.subr.mxu0 0.0
    %1772 = vmatpush1.msra.mxu0 %v1736
    %1773 = vmatprep.subr.mxu0 0.0
    %1774 = vmatpush1.msra.mxu0 %v1735
    %1775 = vmatprep.subr.mxu0 0.0
    %1776 = vmatpush1.msra.mxu0 %v1734
    %1777 = vmatprep.subr.mxu0 0.0
    %1778 = vmatpush1.msra.mxu0 %v1733
    %1779 = vmatprep.subr.mxu0 0.0
    %1780 = vmatpush1.msra.mxu0 %v1732
    %1781 = vmatprep.subr.mxu0 0.0
    %1782 = vmatpush2.msra.mxu0 0.0
    %1783 = vmatprep.subr.mxu0 0.0
    %1784 = vmatpush2.msra.mxu0 0.0
    %1785 = vmatprep.subr.mxu0 0.0
    %1786 = vmatpush2.msra.mxu0 0.0
    %1787 = vmatprep.subr.mxu0 0.0
    %1788 = vmatpush2.msra.mxu0 0.0
    %1789 = vmatprep.subr.mxu0 0.0
    %1790 = vmatpush2.msra.mxu0 0.0
    %1791 = vmatprep.subr.mxu0 0.0
    %1792 = vmatpush2.msra.mxu0 0.0
    %1793 = vmatprep.subr.mxu0 0.0
    %1794 = vmatpush2.msra.mxu0 0.0
    %1795 = vmatprep.subr.mxu0 0.0
    %1796 = vmatpush2.msra.mxu0 0.0
    %1797 = vmatprep.subr.mxu0 0.0
    %1798 = vmatpush2.msra.mxu0 0.0
    %1799 = vmatprep.subr.mxu0 0.0
    %1800 = vmatpush2.msra.mxu0 0.0
    %1801 = vmatprep.subr.mxu0 0.0
    %1802 = vmatpush2.msra.mxu0 0.0
    %1803 = vmatprep.subr.mxu0 0.0
    %1804 = vmatpush2.msra.mxu0 0.0
    %1805 = vmatprep.subr.mxu0 0.0
    %1806 = vmatpush2.msra.mxu0 0.0
    %1807 = vmatprep.subr.mxu0 0.0
    %1808 = vmatpush2.msra.mxu0 0.0
    %1809 = vmatprep.subr.mxu0 0.0
    %1810 = vmatpush2.msra.mxu0 0.0
    %1811 = vmatprep.subr.mxu0 0.0
    %1812 = vmatpush2.msra.mxu0 0.0
    %1813 = vmatprep.mubr.f32.mxu0 0.0
    %1814 = vmatmul.mubr.f32.gmra.mxu0 %v1731
    %v1815 = vpop.f32.mrf.mxu0
    %v1816 = vadd.f32 %v1748, %v1815
    %v1817 = vpop.f32.mrf.mxu0
    %1818 = vdwg.mxu0
    %v1819 = vld [vmem:[#allocation2 + $0x500] sm:$0xff]
    %v1820 = vld [vmem:[#allocation2 + $0x510] sm:$0xff]
    %v1821 = vld [vmem:[#allocation2 + $0x520] sm:$0xff]
    %v1822 = vld [vmem:[#allocation2 + $0x530] sm:$0xff]
    %v1823 = vld [vmem:[#allocation2 + $0x540] sm:$0xff]
    %v1824 = vld [vmem:[#allocation2 + $0x550] sm:$0xff]
    %v1825 = vld [vmem:[#allocation2 + $0x560] sm:$0xff]
    %v1826 = vld [vmem:[#allocation2 + $0x570] sm:$0xff]
    %v1827 = vld [vmem:[#allocation2 + $0x580] sm:$0xff]
    %v1828 = vld [vmem:[#allocation2 + $0x590] sm:$0xff]
    %v1829 = vld [vmem:[#allocation2 + $0x5a0] sm:$0xff]
    %v1830 = vld [vmem:[#allocation2 + $0x5b0] sm:$0xff]
    %v1831 = vld [vmem:[#allocation2 + $0x5c0] sm:$0xff]
    %v1832 = vld [vmem:[#allocation2 + $0x5d0] sm:$0xff]
    %v1833 = vld [vmem:[#allocation2 + $0x5e0] sm:$0xff]
    %v1834 = vld [vmem:[#allocation2 + $0x5f0] sm:$0xff]
    %v1835 = vld [vmem:[#allocation2 + $0x6e0] ss:$0 sm:$0xff]
    %1836 = vmatprep.subr.mxu0 0.0
    %1837 = vmatpush1.msra.mxu0 %v1834
    %1838 = vmatprep.subr.mxu0 0.0
    %1839 = vmatpush1.msra.mxu0 %v1833
    %1840 = vmatprep.subr.mxu0 0.0
    %1841 = vmatpush1.msra.mxu0 %v1832
    %1842 = vmatprep.subr.mxu0 0.0
    %1843 = vmatpush1.msra.mxu0 %v1831
    %1844 = vmatprep.subr.mxu0 0.0
    %1845 = vmatpush1.msra.mxu0 %v1830
    %1846 = vmatprep.subr.mxu0 0.0
    %1847 = vmatpush1.msra.mxu0 %v1829
    %1848 = vmatprep.subr.mxu0 0.0
    %1849 = vmatpush1.msra.mxu0 %v1828
    %1850 = vmatprep.subr.mxu0 0.0
    %1851 = vmatpush1.msra.mxu0 %v1827
    %1852 = vmatprep.subr.mxu0 0.0
    %1853 = vmatpush1.msra.mxu0 %v1826
    %1854 = vmatprep.subr.mxu0 0.0
    %1855 = vmatpush1.msra.mxu0 %v1825
    %1856 = vmatprep.subr.mxu0 0.0
    %1857 = vmatpush1.msra.mxu0 %v1824
    %1858 = vmatprep.subr.mxu0 0.0
    %1859 = vmatpush1.msra.mxu0 %v1823
    %1860 = vmatprep.subr.mxu0 0.0
    %1861 = vmatpush1.msra.mxu0 %v1822
    %1862 = vmatprep.subr.mxu0 0.0
    %1863 = vmatpush1.msra.mxu0 %v1821
    %1864 = vmatprep.subr.mxu0 0.0
    %1865 = vmatpush1.msra.mxu0 %v1820
    %1866 = vmatprep.subr.mxu0 0.0
    %1867 = vmatpush1.msra.mxu0 %v1819
    %1868 = vmatprep.subr.mxu0 0.0
    %1869 = vmatpush2.msra.mxu0 0.0
    %1870 = vmatprep.subr.mxu0 0.0
    %1871 = vmatpush2.msra.mxu0 0.0
    %1872 = vmatprep.subr.mxu0 0.0
    %1873 = vmatpush2.msra.mxu0 0.0
    %1874 = vmatprep.subr.mxu0 0.0
    %1875 = vmatpush2.msra.mxu0 0.0
    %1876 = vmatprep.subr.mxu0 0.0
    %1877 = vmatpush2.msra.mxu0 0.0
    %1878 = vmatprep.subr.mxu0 0.0
    %1879 = vmatpush2.msra.mxu0 0.0
    %1880 = vmatprep.subr.mxu0 0.0
    %1881 = vmatpush2.msra.mxu0 0.0
    %1882 = vmatprep.subr.mxu0 0.0
    %1883 = vmatpush2.msra.mxu0 0.0
    %1884 = vmatprep.subr.mxu0 0.0
    %1885 = vmatpush2.msra.mxu0 0.0
    %1886 = vmatprep.subr.mxu0 0.0
    %1887 = vmatpush2.msra.mxu0 0.0
    %1888 = vmatprep.subr.mxu0 0.0
    %1889 = vmatpush2.msra.mxu0 0.0
    %1890 = vmatprep.subr.mxu0 0.0
    %1891 = vmatpush2.msra.mxu0 0.0
    %1892 = vmatprep.subr.mxu0 0.0
    %1893 = vmatpush2.msra.mxu0 0.0
    %1894 = vmatprep.subr.mxu0 0.0
    %1895 = vmatpush2.msra.mxu0 0.0
    %1896 = vmatprep.subr.mxu0 0.0
    %1897 = vmatpush2.msra.mxu0 0.0
    %1898 = vmatprep.subr.mxu0 0.0
    %1899 = vmatpush2.msra.mxu0 0.0
    %1900 = vmatprep.mubr.f32.mxu0 0.0
    %1901 = vmatmul.mubr.f32.gmra.mxu0 %v1816
    %v1902 = vpop.f32.mrf.mxu0
    %v1903 = vadd.f32 %v1835, %v1902
    %v1904 = vpop.f32.mrf.mxu0
    %1905 = vdwg.mxu0
    %v1906 = vmax.f32 %v1903, 0.0
    %s1907 = scalar_lea.vmem [#allocation2], 1696
    %v1908 = vld [vmem:[%s1907] ss:$8 sm:$0x3]
    %v1910 = vlaneseq
    %v1911 = vshrl.u32 %v1910, 7
    %v1912 = vsub.s32 0, %v1911
    %v1913 = vrot.slane %v1908, %v1912
    %v1914 = vlaneseq
    %v1915 = vshrl.u32 %v1914, 7
    %v1916 = vsub.s32 1, %v1915
    %v1917 = vrot.slane %v1908, %v1916
    %s1920 = scalar_lea.vmem [#allocation2], 1712
    %v1921 = vld [vmem:[%s1920] ss:$8 sm:$0x3]
    %v1923 = vlaneseq
    %v1924 = vshrl.u32 %v1923, 7
    %v1925 = vsub.s32 0, %v1924
    %v1926 = vrot.slane %v1921, %v1925
    %v1927 = vlaneseq
    %v1928 = vshrl.u32 %v1927, 7
    %v1929 = vsub.s32 1, %v1928
    %v1930 = vrot.slane %v1921, %v1929
    %v1933 = vld [vmem:[#allocation2 + $0x200] sm:$0xff]
    %v1934 = vld [vmem:[#allocation2 + $0x208] sm:$0xff]
    %v1935 = vld [vmem:[#allocation2 + $0x210] sm:$0xff]
    %v1936 = vld [vmem:[#allocation2 + $0x218] sm:$0xff]
    %v1937 = vld [vmem:[#allocation2 + $0x220] sm:$0xff]
    %v1938 = vld [vmem:[#allocation2 + $0x228] sm:$0xff]
    %v1939 = vld [vmem:[#allocation2 + $0x230] sm:$0xff]
    %v1940 = vld [vmem:[#allocation2 + $0x238] sm:$0xff]
    %v1941 = vld [vmem:[#allocation2 + $0x240] sm:$0xff]
    %v1942 = vld [vmem:[#allocation2 + $0x248] sm:$0xff]
    %v1943 = vld [vmem:[#allocation2 + $0x250] sm:$0xff]
    %v1944 = vld [vmem:[#allocation2 + $0x258] sm:$0xff]
    %v1945 = vld [vmem:[#allocation2 + $0x260] sm:$0xff]
    %v1946 = vld [vmem:[#allocation2 + $0x268] sm:$0xff]
    %v1947 = vld [vmem:[#allocation2 + $0x270] sm:$0xff]
    %v1948 = vld [vmem:[#allocation2 + $0x278] sm:$0xff]
    %v1950 = vsel %vm56, %v1906, 0
    %1952 = vmatprep.subr.mxu0 0.0
    %1953 = vmatpush1.msra.mxu0 0.0
    %1954 = vmatprep.subr.mxu0 0.0
    %1955 = vmatpush1.msra.mxu0 0.0
    %1956 = vmatprep.subr.mxu0 0.0
    %1957 = vmatpush1.msra.mxu0 0.0
    %1958 = vmatprep.subr.mxu0 0.0
    %1959 = vmatpush1.msra.mxu0 0.0
    %1960 = vmatprep.subr.mxu0 0.0
    %1961 = vmatpush1.msra.mxu0 0.0
    %1962 = vmatprep.subr.mxu0 0.0
    %1963 = vmatpush1.msra.mxu0 0.0
    %1964 = vmatprep.subr.mxu0 0.0
    %1965 = vmatpush1.msra.mxu0 0.0
    %1966 = vmatprep.subr.mxu0 0.0
    %1967 = vmatpush1.msra.mxu0 0.0
    %1968 = vmatprep.subr.mxu0 %v1948
    %1969 = vmatpush1.msra.mxu0 %v1947
    %1970 = vmatprep.subr.mxu0 %v1946
    %1971 = vmatpush1.msra.mxu0 %v1945
    %1972 = vmatprep.subr.mxu0 %v1944
    %1973 = vmatpush1.msra.mxu0 %v1943
    %1974 = vmatprep.subr.mxu0 %v1942
    %1975 = vmatpush1.msra.mxu0 %v1941
    %1976 = vmatprep.subr.mxu0 %v1940
    %1977 = vmatpush1.msra.mxu0 %v1939
    %1978 = vmatprep.subr.mxu0 %v1938
    %1979 = vmatpush1.msra.mxu0 %v1937
    %1980 = vmatprep.subr.mxu0 %v1936
    %1981 = vmatpush1.msra.mxu0 %v1935
    %1982 = vmatprep.subr.mxu0 %v1934
    %1983 = vmatpush1.msra.mxu0 %v1933
    %1984 = vmatprep.subr.mxu0 0.0
    %1985 = vmatpush2.msra.mxu0 0.0
    %1986 = vmatprep.subr.mxu0 0.0
    %1987 = vmatpush2.msra.mxu0 0.0
    %1988 = vmatprep.subr.mxu0 0.0
    %1989 = vmatpush2.msra.mxu0 0.0
    %1990 = vmatprep.subr.mxu0 0.0
    %1991 = vmatpush2.msra.mxu0 0.0
    %1992 = vmatprep.subr.mxu0 0.0
    %1993 = vmatpush2.msra.mxu0 0.0
    %1994 = vmatprep.subr.mxu0 0.0
    %1995 = vmatpush2.msra.mxu0 0.0
    %1996 = vmatprep.subr.mxu0 0.0
    %1997 = vmatpush2.msra.mxu0 0.0
    %1998 = vmatprep.subr.mxu0 0.0
    %1999 = vmatpush2.msra.mxu0 0.0
    %2000 = vmatprep.subr.mxu0 0.0
    %2001 = vmatpush2.msra.mxu0 0.0
    %2002 = vmatprep.subr.mxu0 0.0
    %2003 = vmatpush2.msra.mxu0 0.0
    %2004 = vmatprep.subr.mxu0 0.0
    %2005 = vmatpush2.msra.mxu0 0.0
    %2006 = vmatprep.subr.mxu0 0.0
    %2007 = vmatpush2.msra.mxu0 0.0
    %2008 = vmatprep.subr.mxu0 0.0
    %2009 = vmatpush2.msra.mxu0 0.0
    %2010 = vmatprep.subr.mxu0 0.0
    %2011 = vmatpush2.msra.mxu0 0.0
    %2012 = vmatprep.subr.mxu0 0.0
    %2013 = vmatpush2.msra.mxu0 0.0
    %2014 = vmatprep.subr.mxu0 0.0
    %2015 = vmatpush2.msra.mxu0 0.0
    %2016 = vmatprep.mubr.f32.mxu0 0.0
    %2017 = vmatmul.mubr.f32.gmra.mxu0 %v1950
    %v2018 = vpop.f32.mrf.mxu0
    %v2019 = vadd.f32 %v1913, %v2018
    %v2020 = vpop.f32.mrf.mxu0
    %v2021 = vadd.f32 %v1917, %v2020
    %2022 = vdwg.mxu0
    %v2023 = vxor.u32 %v2019, 2147483648
    %v2024 = vxor.u32 %v2021, 2147483648
    %v2025 = vmul.f32 %v2023, 1.442695
    %v2026 = vpow.pop %v2025
    %v2027 = vmul.f32 %v2024, 1.442695
    %v2028 = vpow.pop %v2027
    %v2029 = vadd.f32 %v2026, 1.0
    %v2030 = vadd.f32 %v2028, 1.0
    %v2031 = vrcp.pop %v2029
    %v2032 = vmul.f32 1.0, %v2031
    %v2033 = vrcp.pop %v2030
    %v2034 = vmul.f32 1.0, %v2033
    %v2035 = vtanh.pop %v2021
    %v2036 = vmul.f32 %v2032, 0.0
    %2038 = vrot.lane.b32.xlu0 %v2035, 64
    %v2039 = vpop.permute.xlu0 %2038
    %v2041 = vmul.f32 %v2032, %v2039
    %2043 = vrot.lane.b32.xlu0 %v2041, 64
    %v2044 = vpop.permute.xlu0 %2043
    %v2046 = vadd.f32 %v2036, %v2044
    %v2047 = vtanh.pop %v2046
    %2049 = vrot.lane.b32.xlu0 %v2047, 64
    %v2050 = vpop.permute.xlu0 %2049
    %v2052 = vmul.f32 %v2034, %v2050
    %v2053 = vld [vmem:[#allocation2 + $0x280] sm:$0xff]
    %v2054 = vld [vmem:[#allocation2 + $0x288] sm:$0xff]
    %v2055 = vld [vmem:[#allocation2 + $0x290] sm:$0xff]
    %v2056 = vld [vmem:[#allocation2 + $0x298] sm:$0xff]
    %v2057 = vld [vmem:[#allocation2 + $0x2a0] sm:$0xff]
    %v2058 = vld [vmem:[#allocation2 + $0x2a8] sm:$0xff]
    %v2059 = vld [vmem:[#allocation2 + $0x2b0] sm:$0xff]
    %v2060 = vld [vmem:[#allocation2 + $0x2b8] sm:$0xff]
    %v2061 = vld [vmem:[#allocation2 + $0x2c0] sm:$0xff]
    %v2062 = vld [vmem:[#allocation2 + $0x2c8] sm:$0xff]
    %v2063 = vld [vmem:[#allocation2 + $0x2d0] sm:$0xff]
    %v2064 = vld [vmem:[#allocation2 + $0x2d8] sm:$0xff]
    %v2065 = vld [vmem:[#allocation2 + $0x2e0] sm:$0xff]
    %v2066 = vld [vmem:[#allocation2 + $0x2e8] sm:$0xff]
    %v2067 = vld [vmem:[#allocation2 + $0x2f0] sm:$0xff]
    %v2068 = vld [vmem:[#allocation2 + $0x2f8] sm:$0xff]
    %v2069 = vld [vmem:[#allocation2 + $0x300] sm:$0xff]
    %v2070 = vld [vmem:[#allocation2 + $0x308] sm:$0xff]
    %v2071 = vld [vmem:[#allocation2 + $0x310] sm:$0xff]
    %v2072 = vld [vmem:[#allocation2 + $0x318] sm:$0xff]
    %v2073 = vld [vmem:[#allocation2 + $0x320] sm:$0xff]
    %v2074 = vld [vmem:[#allocation2 + $0x328] sm:$0xff]
    %v2075 = vld [vmem:[#allocation2 + $0x330] sm:$0xff]
    %v2076 = vld [vmem:[#allocation2 + $0x338] sm:$0xff]
    %v2077 = vld [vmem:[#allocation2 + $0x340] sm:$0xff]
    %v2078 = vld [vmem:[#allocation2 + $0x348] sm:$0xff]
    %v2079 = vld [vmem:[#allocation2 + $0x350] sm:$0xff]
    %v2080 = vld [vmem:[#allocation2 + $0x358] sm:$0xff]
    %v2081 = vld [vmem:[#allocation2 + $0x360] sm:$0xff]
    %v2082 = vld [vmem:[#allocation2 + $0x368] sm:$0xff]
    %v2083 = vld [vmem:[#allocation2 + $0x370] sm:$0xff]
    %v2084 = vld [vmem:[#allocation2 + $0x378] sm:$0xff]
    %2085 = vmatprep.subr.mxu0 0.0
    %2086 = vmatpush1.msra.mxu0 0.0
    %2087 = vmatprep.subr.mxu0 0.0
    %2088 = vmatpush1.msra.mxu0 0.0
    %2089 = vmatprep.subr.mxu0 0.0
    %2090 = vmatpush1.msra.mxu0 0.0
    %2091 = vmatprep.subr.mxu0 0.0
    %2092 = vmatpush1.msra.mxu0 0.0
    %2093 = vmatprep.subr.mxu0 0.0
    %2094 = vmatpush1.msra.mxu0 0.0
    %2095 = vmatprep.subr.mxu0 0.0
    %2096 = vmatpush1.msra.mxu0 0.0
    %2097 = vmatprep.subr.mxu0 0.0
    %2098 = vmatpush1.msra.mxu0 0.0
    %2099 = vmatprep.subr.mxu0 0.0
    %2100 = vmatpush1.msra.mxu0 0.0
    %2101 = vmatprep.subr.mxu0 %v2084
    %2102 = vmatpush1.msra.mxu0 %v2083
    %2103 = vmatprep.subr.mxu0 %v2082
    %2104 = vmatpush1.msra.mxu0 %v2081
    %2105 = vmatprep.subr.mxu0 %v2080
    %2106 = vmatpush1.msra.mxu0 %v2079
    %2107 = vmatprep.subr.mxu0 %v2078
    %2108 = vmatpush1.msra.mxu0 %v2077
    %2109 = vmatprep.subr.mxu0 %v2076
    %2110 = vmatpush1.msra.mxu0 %v2075
    %2111 = vmatprep.subr.mxu0 %v2074
    %2112 = vmatpush1.msra.mxu0 %v2073
    %2113 = vmatprep.subr.mxu0 %v2072
    %2114 = vmatpush1.msra.mxu0 %v2071
    %2115 = vmatprep.subr.mxu0 %v2070
    %2116 = vmatpush1.msra.mxu0 %v2069
    %2117 = vmatprep.subr.mxu0 0.0
    %2118 = vmatpush2.msra.mxu0 0.0
    %2119 = vmatprep.subr.mxu0 0.0
    %2120 = vmatpush2.msra.mxu0 0.0
    %2121 = vmatprep.subr.mxu0 0.0
    %2122 = vmatpush2.msra.mxu0 0.0
    %2123 = vmatprep.subr.mxu0 0.0
    %2124 = vmatpush2.msra.mxu0 0.0
    %2125 = vmatprep.subr.mxu0 0.0
    %2126 = vmatpush2.msra.mxu0 0.0
    %2127 = vmatprep.subr.mxu0 0.0
    %2128 = vmatpush2.msra.mxu0 0.0
    %2129 = vmatprep.subr.mxu0 0.0
    %2130 = vmatpush2.msra.mxu0 0.0
    %2131 = vmatprep.subr.mxu0 0.0
    %2132 = vmatpush2.msra.mxu0 0.0
    %2133 = vmatprep.subr.mxu0 0.0
    %2134 = vmatpush2.msra.mxu0 0.0
    %2135 = vmatprep.subr.mxu0 0.0
    %2136 = vmatpush2.msra.mxu0 0.0
    %2137 = vmatprep.subr.mxu0 0.0
    %2138 = vmatpush2.msra.mxu0 0.0
    %2139 = vmatprep.subr.mxu0 0.0
    %2140 = vmatpush2.msra.mxu0 0.0
    %2141 = vmatprep.subr.mxu0 0.0
    %2142 = vmatpush2.msra.mxu0 0.0
    %2143 = vmatprep.subr.mxu0 0.0
    %2144 = vmatpush2.msra.mxu0 0.0
    %2145 = vmatprep.subr.mxu0 0.0
    %2146 = vmatpush2.msra.mxu0 0.0
    %2147 = vmatprep.subr.mxu0 0.0
    %2148 = vmatpush2.msra.mxu0 0.0
    %2149 = vmatprep.mubr.f32.mxu0 0.0
    %2150 = vmatmul.mubr.f32.gmra.mxu0 %v1950
    %v2151 = vpop.f32.mrf.mxu0
    %v2152 = vadd.f32 0.0, %v2151
    %v2153 = vpop.f32.mrf.mxu0
    %v2154 = vadd.f32 0.0, %v2153
    %2155 = vdwg.mxu0
    %v2157 = vsel %vm56, %v2052, 0
    %2159 = vmatprep.subr.mxu0 0.0
    %2160 = vmatpush1.msra.mxu0 0.0
    %2161 = vmatprep.subr.mxu0 0.0
    %2162 = vmatpush1.msra.mxu0 0.0
    %2163 = vmatprep.subr.mxu0 0.0
    %2164 = vmatpush1.msra.mxu0 0.0
    %2165 = vmatprep.subr.mxu0 0.0
    %2166 = vmatpush1.msra.mxu0 0.0
    %2167 = vmatprep.subr.mxu0 0.0
    %2168 = vmatpush1.msra.mxu0 0.0
    %2169 = vmatprep.subr.mxu0 0.0
    %2170 = vmatpush1.msra.mxu0 0.0
    %2171 = vmatprep.subr.mxu0 0.0
    %2172 = vmatpush1.msra.mxu0 0.0
    %2173 = vmatprep.subr.mxu0 0.0
    %2174 = vmatpush1.msra.mxu0 0.0
    %2175 = vmatprep.subr.mxu0 %v2068
    %2176 = vmatpush1.msra.mxu0 %v2067
    %2177 = vmatprep.subr.mxu0 %v2066
    %2178 = vmatpush1.msra.mxu0 %v2065
    %2179 = vmatprep.subr.mxu0 %v2064
    %2180 = vmatpush1.msra.mxu0 %v2063
    %2181 = vmatprep.subr.mxu0 %v2062
    %2182 = vmatpush1.msra.mxu0 %v2061
    %2183 = vmatprep.subr.mxu0 %v2060
    %2184 = vmatpush1.msra.mxu0 %v2059
    %2185 = vmatprep.subr.mxu0 %v2058
    %2186 = vmatpush1.msra.mxu0 %v2057
    %2187 = vmatprep.subr.mxu0 %v2056
    %2188 = vmatpush1.msra.mxu0 %v2055
    %2189 = vmatprep.subr.mxu0 %v2054
    %2190 = vmatpush1.msra.mxu0 %v2053
    %2191 = vmatprep.subr.mxu0 0.0
    %2192 = vmatpush2.msra.mxu0 0.0
    %2193 = vmatprep.subr.mxu0 0.0
    %2194 = vmatpush2.msra.mxu0 0.0
    %2195 = vmatprep.subr.mxu0 0.0
    %2196 = vmatpush2.msra.mxu0 0.0
    %2197 = vmatprep.subr.mxu0 0.0
    %2198 = vmatpush2.msra.mxu0 0.0
    %2199 = vmatprep.subr.mxu0 0.0
    %2200 = vmatpush2.msra.mxu0 0.0
    %2201 = vmatprep.subr.mxu0 0.0
    %2202 = vmatpush2.msra.mxu0 0.0
    %2203 = vmatprep.subr.mxu0 0.0
    %2204 = vmatpush2.msra.mxu0 0.0
    %2205 = vmatprep.subr.mxu0 0.0
    %2206 = vmatpush2.msra.mxu0 0.0
    %2207 = vmatprep.subr.mxu0 0.0
    %2208 = vmatpush2.msra.mxu0 0.0
    %2209 = vmatprep.subr.mxu0 0.0
    %2210 = vmatpush2.msra.mxu0 0.0
    %2211 = vmatprep.subr.mxu0 0.0
    %2212 = vmatpush2.msra.mxu0 0.0
    %2213 = vmatprep.subr.mxu0 0.0
    %2214 = vmatpush2.msra.mxu0 0.0
    %2215 = vmatprep.subr.mxu0 0.0
    %2216 = vmatpush2.msra.mxu0 0.0
    %2217 = vmatprep.subr.mxu0 0.0
    %2218 = vmatpush2.msra.mxu0 0.0
    %2219 = vmatprep.subr.mxu0 0.0
    %2220 = vmatpush2.msra.mxu0 0.0
    %2221 = vmatprep.subr.mxu0 0.0
    %2222 = vmatpush2.msra.mxu0 0.0
    %2223 = vmatprep.mubr.f32.mxu0 0.0
    %2224 = vmatmul.mubr.f32.gmra.mxu0 %v2157
    %v2225 = vpop.f32.mrf.mxu0
    %v2226 = vadd.f32 %v2152, %v2225
    %v2227 = vpop.f32.mrf.mxu0
    %v2228 = vadd.f32 %v2154, %v2227
    %2229 = vdwg.mxu0
    %v2230 = vadd.f32 %v2226, %v1926
    %v2231 = vadd.f32 %v2228, %v1930
    %v2232 = vxor.u32 %v2230, 2147483648
    %v2233 = vxor.u32 %v2231, 2147483648
    %v2234 = vmul.f32 %v2232, 1.442695
    %v2235 = vpow.pop %v2234
    %v2236 = vmul.f32 %v2233, 1.442695
    %v2237 = vpow.pop %v2236
    %v2238 = vadd.f32 %v2235, 1.0
    %v2239 = vadd.f32 %v2237, 1.0
    %v2240 = vrcp.pop %v2238
    %v2241 = vmul.f32 1.0, %v2240
    %v2242 = vrcp.pop %v2239
    %v2243 = vmul.f32 1.0, %v2242
    %v2244 = vtanh.pop %v2231
    %v2245 = vmul.f32 %v2241, 0.0
    %2247 = vrot.lane.b32.xlu0 %v2244, 64
    %v2248 = vpop.permute.xlu0 %2247
    %v2250 = vmul.f32 %v2241, %v2248
    %2252 = vrot.lane.b32.xlu0 %v2250, 64
    %v2253 = vpop.permute.xlu0 %2252
    %v2255 = vadd.f32 %v2245, %v2253
    %v2256 = vtanh.pop %v2255
    %2258 = vrot.lane.b32.xlu0 %v2256, 64
    %v2259 = vpop.permute.xlu0 %2258
    %v2261 = vmul.f32 %v2243, %v2259
    %2262 = vmatprep.subr.mxu0 0.0
    %2263 = vmatpush1.msra.mxu0 0.0
    %2264 = vmatprep.subr.mxu0 0.0
    %2265 = vmatpush1.msra.mxu0 0.0
    %2266 = vmatprep.subr.mxu0 0.0
    %2267 = vmatpush1.msra.mxu0 0.0
    %2268 = vmatprep.subr.mxu0 0.0
    %2269 = vmatpush1.msra.mxu0 0.0
    %2270 = vmatprep.subr.mxu0 0.0
    %2271 = vmatpush1.msra.mxu0 0.0
    %2272 = vmatprep.subr.mxu0 0.0
    %2273 = vmatpush1.msra.mxu0 0.0
    %2274 = vmatprep.subr.mxu0 0.0
    %2275 = vmatpush1.msra.mxu0 0.0
    %2276 = vmatprep.subr.mxu0 0.0
    %2277 = vmatpush1.msra.mxu0 0.0
    %2278 = vmatprep.subr.mxu0 %v1948
    %2279 = vmatpush1.msra.mxu0 %v1947
    %2280 = vmatprep.subr.mxu0 %v1946
    %2281 = vmatpush1.msra.mxu0 %v1945
    %2282 = vmatprep.subr.mxu0 %v1944
    %2283 = vmatpush1.msra.mxu0 %v1943
    %2284 = vmatprep.subr.mxu0 %v1942
    %2285 = vmatpush1.msra.mxu0 %v1941
    %2286 = vmatprep.subr.mxu0 %v1940
    %2287 = vmatpush1.msra.mxu0 %v1939
    %2288 = vmatprep.subr.mxu0 %v1938
    %2289 = vmatpush1.msra.mxu0 %v1937
    %2290 = vmatprep.subr.mxu0 %v1936
    %2291 = vmatpush1.msra.mxu0 %v1935
    %2292 = vmatprep.subr.mxu0 %v1934
    %2293 = vmatpush1.msra.mxu0 %v1933
    %2294 = vmatprep.subr.mxu0 0.0
    %2295 = vmatpush2.msra.mxu0 0.0
    %2296 = vmatprep.subr.mxu0 0.0
    %2297 = vmatpush2.msra.mxu0 0.0
    %2298 = vmatprep.subr.mxu0 0.0
    %2299 = vmatpush2.msra.mxu0 0.0
    %2300 = vmatprep.subr.mxu0 0.0
    %2301 = vmatpush2.msra.mxu0 0.0
    %2302 = vmatprep.subr.mxu0 0.0
    %2303 = vmatpush2.msra.mxu0 0.0
    %2304 = vmatprep.subr.mxu0 0.0
    %2305 = vmatpush2.msra.mxu0 0.0
    %2306 = vmatprep.subr.mxu0 0.0
    %2307 = vmatpush2.msra.mxu0 0.0
    %2308 = vmatprep.subr.mxu0 0.0
    %2309 = vmatpush2.msra.mxu0 0.0
    %2310 = vmatprep.subr.mxu0 0.0
    %2311 = vmatpush2.msra.mxu0 0.0
    %2312 = vmatprep.subr.mxu0 0.0
    %2313 = vmatpush2.msra.mxu0 0.0
    %2314 = vmatprep.subr.mxu0 0.0
    %2315 = vmatpush2.msra.mxu0 0.0
    %2316 = vmatprep.subr.mxu0 0.0
    %2317 = vmatpush2.msra.mxu0 0.0
    %2318 = vmatprep.subr.mxu0 0.0
    %2319 = vmatpush2.msra.mxu0 0.0
    %2320 = vmatprep.subr.mxu0 0.0
    %2321 = vmatpush2.msra.mxu0 0.0
    %2322 = vmatprep.subr.mxu0 0.0
    %2323 = vmatpush2.msra.mxu0 0.0
    %2324 = vmatprep.subr.mxu0 0.0
    %2325 = vmatpush2.msra.mxu0 0.0
    %2326 = vmatprep.mubr.f32.mxu0 0.0
    %2327 = vmatmul.mubr.f32.gmra.mxu0 %v2157
    %v2328 = vpop.f32.mrf.mxu0
    %v2329 = vadd.f32 %v1913, %v2328
    %v2330 = vpop.f32.mrf.mxu0
    %v2331 = vadd.f32 %v1917, %v2330
    %2332 = vdwg.mxu0
    %v2333 = vxor.u32 %v2329, 2147483648
    %v2334 = vxor.u32 %v2331, 2147483648
    %v2335 = vmul.f32 %v2333, 1.442695
    %v2336 = vpow.pop %v2335
    %v2337 = vmul.f32 %v2334, 1.442695
    %v2338 = vpow.pop %v2337
    %v2339 = vadd.f32 %v2336, 1.0
    %v2340 = vadd.f32 %v2338, 1.0
    %v2341 = vrcp.pop %v2339
    %v2342 = vmul.f32 1.0, %v2341
    %v2343 = vrcp.pop %v2340
    %v2344 = vmul.f32 1.0, %v2343
    %v2345 = vtanh.pop %v2331
    %v2346 = vmul.f32 %v2342, %v2046
    %2348 = vrot.lane.b32.xlu0 %v2345, 64
    %v2349 = vpop.permute.xlu0 %2348
    %v2351 = vmul.f32 %v2342, %v2349
    %2353 = vrot.lane.b32.xlu0 %v2351, 64
    %v2354 = vpop.permute.xlu0 %2353
    %v2356 = vadd.f32 %v2346, %v2354
    %v2357 = vtanh.pop %v2356
    %2359 = vrot.lane.b32.xlu0 %v2357, 64
    %v2360 = vpop.permute.xlu0 %2359
    %v2362 = vmul.f32 %v2344, %v2360
    %v2364 = vsel %vm56, %v2261, 0
    %2366 = vmatprep.subr.mxu0 0.0
    %2367 = vmatpush1.msra.mxu0 0.0
    %2368 = vmatprep.subr.mxu0 0.0
    %2369 = vmatpush1.msra.mxu0 0.0
    %2370 = vmatprep.subr.mxu0 0.0
    %2371 = vmatpush1.msra.mxu0 0.0
    %2372 = vmatprep.subr.mxu0 0.0
    %2373 = vmatpush1.msra.mxu0 0.0
    %2374 = vmatprep.subr.mxu0 0.0
    %2375 = vmatpush1.msra.mxu0 0.0
    %2376 = vmatprep.subr.mxu0 0.0
    %2377 = vmatpush1.msra.mxu0 0.0
    %2378 = vmatprep.subr.mxu0 0.0
    %2379 = vmatpush1.msra.mxu0 0.0
    %2380 = vmatprep.subr.mxu0 0.0
    %2381 = vmatpush1.msra.mxu0 0.0
    %2382 = vmatprep.subr.mxu0 %v2084
    %2383 = vmatpush1.msra.mxu0 %v2083
    %2384 = vmatprep.subr.mxu0 %v2082
    %2385 = vmatpush1.msra.mxu0 %v2081
    %2386 = vmatprep.subr.mxu0 %v2080
    %2387 = vmatpush1.msra.mxu0 %v2079
    %2388 = vmatprep.subr.mxu0 %v2078
    %2389 = vmatpush1.msra.mxu0 %v2077
    %2390 = vmatprep.subr.mxu0 %v2076
    %2391 = vmatpush1.msra.mxu0 %v2075
    %2392 = vmatprep.subr.mxu0 %v2074
    %2393 = vmatpush1.msra.mxu0 %v2073
    %2394 = vmatprep.subr.mxu0 %v2072
    %2395 = vmatpush1.msra.mxu0 %v2071
    %2396 = vmatprep.subr.mxu0 %v2070
    %2397 = vmatpush1.msra.mxu0 %v2069
    %2398 = vmatprep.subr.mxu0 0.0
    %2399 = vmatpush2.msra.mxu0 0.0
    %2400 = vmatprep.subr.mxu0 0.0
    %2401 = vmatpush2.msra.mxu0 0.0
    %2402 = vmatprep.subr.mxu0 0.0
    %2403 = vmatpush2.msra.mxu0 0.0
    %2404 = vmatprep.subr.mxu0 0.0
    %2405 = vmatpush2.msra.mxu0 0.0
    %2406 = vmatprep.subr.mxu0 0.0
    %2407 = vmatpush2.msra.mxu0 0.0
    %2408 = vmatprep.subr.mxu0 0.0
    %2409 = vmatpush2.msra.mxu0 0.0
    %2410 = vmatprep.subr.mxu0 0.0
    %2411 = vmatpush2.msra.mxu0 0.0
    %2412 = vmatprep.subr.mxu0 0.0
    %2413 = vmatpush2.msra.mxu0 0.0
    %2414 = vmatprep.subr.mxu0 0.0
    %2415 = vmatpush2.msra.mxu0 0.0
    %2416 = vmatprep.subr.mxu0 0.0
    %2417 = vmatpush2.msra.mxu0 0.0
    %2418 = vmatprep.subr.mxu0 0.0
    %2419 = vmatpush2.msra.mxu0 0.0
    %2420 = vmatprep.subr.mxu0 0.0
    %2421 = vmatpush2.msra.mxu0 0.0
    %2422 = vmatprep.subr.mxu0 0.0
    %2423 = vmatpush2.msra.mxu0 0.0
    %2424 = vmatprep.subr.mxu0 0.0
    %2425 = vmatpush2.msra.mxu0 0.0
    %2426 = vmatprep.subr.mxu0 0.0
    %2427 = vmatpush2.msra.mxu0 0.0
    %2428 = vmatprep.subr.mxu0 0.0
    %2429 = vmatpush2.msra.mxu0 0.0
    %2430 = vmatprep.mubr.f32.mxu0 0.0
    %2431 = vmatmul.mubr.f32.gmra.mxu0 %v2364
    %v2432 = vpop.f32.mrf.mxu0
    %v2433 = vadd.f32 0.0, %v2432
    %v2434 = vpop.f32.mrf.mxu0
    %v2435 = vadd.f32 0.0, %v2434
    %2436 = vdwg.mxu0
    %v2438 = vsel %vm56, %v2362, 0
    %2440 = vmatprep.subr.mxu0 0.0
    %2441 = vmatpush1.msra.mxu0 0.0
    %2442 = vmatprep.subr.mxu0 0.0
    %2443 = vmatpush1.msra.mxu0 0.0
    %2444 = vmatprep.subr.mxu0 0.0
    %2445 = vmatpush1.msra.mxu0 0.0
    %2446 = vmatprep.subr.mxu0 0.0
    %2447 = vmatpush1.msra.mxu0 0.0
    %2448 = vmatprep.subr.mxu0 0.0
    %2449 = vmatpush1.msra.mxu0 0.0
    %2450 = vmatprep.subr.mxu0 0.0
    %2451 = vmatpush1.msra.mxu0 0.0
    %2452 = vmatprep.subr.mxu0 0.0
    %2453 = vmatpush1.msra.mxu0 0.0
    %2454 = vmatprep.subr.mxu0 0.0
    %2455 = vmatpush1.msra.mxu0 0.0
    %2456 = vmatprep.subr.mxu0 %v2068
    %2457 = vmatpush1.msra.mxu0 %v2067
    %2458 = vmatprep.subr.mxu0 %v2066
    %2459 = vmatpush1.msra.mxu0 %v2065
    %2460 = vmatprep.subr.mxu0 %v2064
    %2461 = vmatpush1.msra.mxu0 %v2063
    %2462 = vmatprep.subr.mxu0 %v2062
    %2463 = vmatpush1.msra.mxu0 %v2061
    %2464 = vmatprep.subr.mxu0 %v2060
    %2465 = vmatpush1.msra.mxu0 %v2059
    %2466 = vmatprep.subr.mxu0 %v2058
    %2467 = vmatpush1.msra.mxu0 %v2057
    %2468 = vmatprep.subr.mxu0 %v2056
    %2469 = vmatpush1.msra.mxu0 %v2055
    %2470 = vmatprep.subr.mxu0 %v2054
    %2471 = vmatpush1.msra.mxu0 %v2053
    %2472 = vmatprep.subr.mxu0 0.0
    %2473 = vmatpush2.msra.mxu0 0.0
    %2474 = vmatprep.subr.mxu0 0.0
    %2475 = vmatpush2.msra.mxu0 0.0
    %2476 = vmatprep.subr.mxu0 0.0
    %2477 = vmatpush2.msra.mxu0 0.0
    %2478 = vmatprep.subr.mxu0 0.0
    %2479 = vmatpush2.msra.mxu0 0.0
    %2480 = vmatprep.subr.mxu0 0.0
    %2481 = vmatpush2.msra.mxu0 0.0
    %2482 = vmatprep.subr.mxu0 0.0
    %2483 = vmatpush2.msra.mxu0 0.0
    %2484 = vmatprep.subr.mxu0 0.0
    %2485 = vmatpush2.msra.mxu0 0.0
    %2486 = vmatprep.subr.mxu0 0.0
    %2487 = vmatpush2.msra.mxu0 0.0
    %2488 = vmatprep.subr.mxu0 0.0
    %2489 = vmatpush2.msra.mxu0 0.0
    %2490 = vmatprep.subr.mxu0 0.0
    %2491 = vmatpush2.msra.mxu0 0.0
    %2492 = vmatprep.subr.mxu0 0.0
    %2493 = vmatpush2.msra.mxu0 0.0
    %2494 = vmatprep.subr.mxu0 0.0
    %2495 = vmatpush2.msra.mxu0 0.0
    %2496 = vmatprep.subr.mxu0 0.0
    %2497 = vmatpush2.msra.mxu0 0.0
    %2498 = vmatprep.subr.mxu0 0.0
    %2499 = vmatpush2.msra.mxu0 0.0
    %2500 = vmatprep.subr.mxu0 0.0
    %2501 = vmatpush2.msra.mxu0 0.0
    %2502 = vmatprep.subr.mxu0 0.0
    %2503 = vmatpush2.msra.mxu0 0.0
    %2504 = vmatprep.mubr.f32.mxu0 0.0
    %2505 = vmatmul.mubr.f32.gmra.mxu0 %v2438
    %v2506 = vpop.f32.mrf.mxu0
    %v2507 = vadd.f32 %v2433, %v2506
    %v2508 = vpop.f32.mrf.mxu0
    %v2509 = vadd.f32 %v2435, %v2508
    %2510 = vdwg.mxu0
    %v2511 = vadd.f32 %v2507, %v1926
    %v2512 = vadd.f32 %v2509, %v1930
    %v2513 = vxor.u32 %v2511, 2147483648
    %v2514 = vxor.u32 %v2512, 2147483648
    %v2515 = vmul.f32 %v2513, 1.442695
    %v2516 = vpow.pop %v2515
    %v2517 = vmul.f32 %v2514, 1.442695
    %v2518 = vpow.pop %v2517
    %v2519 = vadd.f32 %v2516, 1.0
    %v2520 = vadd.f32 %v2518, 1.0
    %v2521 = vrcp.pop %v2519
    %v2522 = vmul.f32 1.0, %v2521
    %v2523 = vrcp.pop %v2520
    %v2524 = vmul.f32 1.0, %v2523
    %v2525 = vtanh.pop %v2512
    %v2526 = vmul.f32 %v2522, %v2255
    %2528 = vrot.lane.b32.xlu0 %v2525, 64
    %v2529 = vpop.permute.xlu0 %2528
    %v2531 = vmul.f32 %v2522, %v2529
    %2533 = vrot.lane.b32.xlu0 %v2531, 64
    %v2534 = vpop.permute.xlu0 %2533
    %v2536 = vadd.f32 %v2526, %v2534
    %v2537 = vtanh.pop %v2536
    %2539 = vrot.lane.b32.xlu0 %v2537, 64
    %v2540 = vpop.permute.xlu0 %2539
    %v2542 = vmul.f32 %v2524, %v2540
    %2543 = vmatprep.subr.mxu0 0.0
    %2544 = vmatpush1.msra.mxu0 0.0
    %2545 = vmatprep.subr.mxu0 0.0
    %2546 = vmatpush1.msra.mxu0 0.0
    %2547 = vmatprep.subr.mxu0 0.0
    %2548 = vmatpush1.msra.mxu0 0.0
    %2549 = vmatprep.subr.mxu0 0.0
    %2550 = vmatpush1.msra.mxu0 0.0
    %2551 = vmatprep.subr.mxu0 0.0
    %2552 = vmatpush1.msra.mxu0 0.0
    %2553 = vmatprep.subr.mxu0 0.0
    %2554 = vmatpush1.msra.mxu0 0.0
    %2555 = vmatprep.subr.mxu0 0.0
    %2556 = vmatpush1.msra.mxu0 0.0
    %2557 = vmatprep.subr.mxu0 0.0
    %2558 = vmatpush1.msra.mxu0 0.0
    %2559 = vmatprep.subr.mxu0 %v1948
    %2560 = vmatpush1.msra.mxu0 %v1947
    %2561 = vmatprep.subr.mxu0 %v1946
    %2562 = vmatpush1.msra.mxu0 %v1945
    %2563 = vmatprep.subr.mxu0 %v1944
    %2564 = vmatpush1.msra.mxu0 %v1943
    %2565 = vmatprep.subr.mxu0 %v1942
    %2566 = vmatpush1.msra.mxu0 %v1941
    %2567 = vmatprep.subr.mxu0 %v1940
    %2568 = vmatpush1.msra.mxu0 %v1939
    %2569 = vmatprep.subr.mxu0 %v1938
    %2570 = vmatpush1.msra.mxu0 %v1937
    %2571 = vmatprep.subr.mxu0 %v1936
    %2572 = vmatpush1.msra.mxu0 %v1935
    %2573 = vmatprep.subr.mxu0 %v1934
    %2574 = vmatpush1.msra.mxu0 %v1933
    %2575 = vmatprep.subr.mxu0 0.0
    %2576 = vmatpush2.msra.mxu0 0.0
    %2577 = vmatprep.subr.mxu0 0.0
    %2578 = vmatpush2.msra.mxu0 0.0
    %2579 = vmatprep.subr.mxu0 0.0
    %2580 = vmatpush2.msra.mxu0 0.0
    %2581 = vmatprep.subr.mxu0 0.0
    %2582 = vmatpush2.msra.mxu0 0.0
    %2583 = vmatprep.subr.mxu0 0.0
    %2584 = vmatpush2.msra.mxu0 0.0
    %2585 = vmatprep.subr.mxu0 0.0
    %2586 = vmatpush2.msra.mxu0 0.0
    %2587 = vmatprep.subr.mxu0 0.0
    %2588 = vmatpush2.msra.mxu0 0.0
    %2589 = vmatprep.subr.mxu0 0.0
    %2590 = vmatpush2.msra.mxu0 0.0
    %2591 = vmatprep.subr.mxu0 0.0
    %2592 = vmatpush2.msra.mxu0 0.0
    %2593 = vmatprep.subr.mxu0 0.0
    %2594 = vmatpush2.msra.mxu0 0.0
    %2595 = vmatprep.subr.mxu0 0.0
    %2596 = vmatpush2.msra.mxu0 0.0
    %2597 = vmatprep.subr.mxu0 0.0
    %2598 = vmatpush2.msra.mxu0 0.0
    %2599 = vmatprep.subr.mxu0 0.0
    %2600 = vmatpush2.msra.mxu0 0.0
    %2601 = vmatprep.subr.mxu0 0.0
    %2602 = vmatpush2.msra.mxu0 0.0
    %2603 = vmatprep.subr.mxu0 0.0
    %2604 = vmatpush2.msra.mxu0 0.0
    %2605 = vmatprep.subr.mxu0 0.0
    %2606 = vmatpush2.msra.mxu0 0.0
    %2607 = vmatprep.mubr.f32.mxu0 0.0
    %2608 = vmatmul.mubr.f32.gmra.mxu0 %v2438
    %v2609 = vpop.f32.mrf.mxu0
    %v2610 = vadd.f32 %v1913, %v2609
    %v2611 = vpop.f32.mrf.mxu0
    %v2612 = vadd.f32 %v1917, %v2611
    %2613 = vdwg.mxu0
    %v2614 = vxor.u32 %v2610, 2147483648
    %v2615 = vxor.u32 %v2612, 2147483648
    %v2616 = vmul.f32 %v2614, 1.442695
    %v2617 = vpow.pop %v2616
    %v2618 = vmul.f32 %v2615, 1.442695
    %v2619 = vpow.pop %v2618
    %v2620 = vadd.f32 %v2617, 1.0
    %v2621 = vadd.f32 %v2619, 1.0
    %v2622 = vrcp.pop %v2620
    %v2623 = vmul.f32 1.0, %v2622
    %v2624 = vrcp.pop %v2621
    %v2625 = vmul.f32 1.0, %v2624
    %v2626 = vtanh.pop %v2612
    %v2627 = vmul.f32 %v2623, %v2356
    %2629 = vrot.lane.b32.xlu0 %v2626, 64
    %v2630 = vpop.permute.xlu0 %2629
    %v2632 = vmul.f32 %v2623, %v2630
    %2634 = vrot.lane.b32.xlu0 %v2632, 64
    %v2635 = vpop.permute.xlu0 %2634
    %v2637 = vadd.f32 %v2627, %v2635
    %v2638 = vtanh.pop %v2637
    %2640 = vrot.lane.b32.xlu0 %v2638, 64
    %v2641 = vpop.permute.xlu0 %2640
    %v2643 = vmul.f32 %v2625, %v2641
    %v2645 = vsel %vm56, %v2542, 0
    %2647 = vmatprep.subr.mxu0 0.0
    %2648 = vmatpush1.msra.mxu0 0.0
    %2649 = vmatprep.subr.mxu0 0.0
    %2650 = vmatpush1.msra.mxu0 0.0
    %2651 = vmatprep.subr.mxu0 0.0
    %2652 = vmatpush1.msra.mxu0 0.0
    %2653 = vmatprep.subr.mxu0 0.0
    %2654 = vmatpush1.msra.mxu0 0.0
    %2655 = vmatprep.subr.mxu0 0.0
    %2656 = vmatpush1.msra.mxu0 0.0
    %2657 = vmatprep.subr.mxu0 0.0
    %2658 = vmatpush1.msra.mxu0 0.0
    %2659 = vmatprep.subr.mxu0 0.0
    %2660 = vmatpush1.msra.mxu0 0.0
    %2661 = vmatprep.subr.mxu0 0.0
    %2662 = vmatpush1.msra.mxu0 0.0
    %2663 = vmatprep.subr.mxu0 %v2084
    %2664 = vmatpush1.msra.mxu0 %v2083
    %2665 = vmatprep.subr.mxu0 %v2082
    %2666 = vmatpush1.msra.mxu0 %v2081
    %2667 = vmatprep.subr.mxu0 %v2080
    %2668 = vmatpush1.msra.mxu0 %v2079
    %2669 = vmatprep.subr.mxu0 %v2078
    %2670 = vmatpush1.msra.mxu0 %v2077
    %2671 = vmatprep.subr.mxu0 %v2076
    %2672 = vmatpush1.msra.mxu0 %v2075
    %2673 = vmatprep.subr.mxu0 %v2074
    %2674 = vmatpush1.msra.mxu0 %v2073
    %2675 = vmatprep.subr.mxu0 %v2072
    %2676 = vmatpush1.msra.mxu0 %v2071
    %2677 = vmatprep.subr.mxu0 %v2070
    %2678 = vmatpush1.msra.mxu0 %v2069
    %2679 = vmatprep.subr.mxu0 0.0
    %2680 = vmatpush2.msra.mxu0 0.0
    %2681 = vmatprep.subr.mxu0 0.0
    %2682 = vmatpush2.msra.mxu0 0.0
    %2683 = vmatprep.subr.mxu0 0.0
    %2684 = vmatpush2.msra.mxu0 0.0
    %2685 = vmatprep.subr.mxu0 0.0
    %2686 = vmatpush2.msra.mxu0 0.0
    %2687 = vmatprep.subr.mxu0 0.0
    %2688 = vmatpush2.msra.mxu0 0.0
    %2689 = vmatprep.subr.mxu0 0.0
    %2690 = vmatpush2.msra.mxu0 0.0
    %2691 = vmatprep.subr.mxu0 0.0
    %2692 = vmatpush2.msra.mxu0 0.0
    %2693 = vmatprep.subr.mxu0 0.0
    %2694 = vmatpush2.msra.mxu0 0.0
    %2695 = vmatprep.subr.mxu0 0.0
    %2696 = vmatpush2.msra.mxu0 0.0
    %2697 = vmatprep.subr.mxu0 0.0
    %2698 = vmatpush2.msra.mxu0 0.0
    %2699 = vmatprep.subr.mxu0 0.0
    %2700 = vmatpush2.msra.mxu0 0.0
    %2701 = vmatprep.subr.mxu0 0.0
    %2702 = vmatpush2.msra.mxu0 0.0
    %2703 = vmatprep.subr.mxu0 0.0
    %2704 = vmatpush2.msra.mxu0 0.0
    %2705 = vmatprep.subr.mxu0 0.0
    %2706 = vmatpush2.msra.mxu0 0.0
    %2707 = vmatprep.subr.mxu0 0.0
    %2708 = vmatpush2.msra.mxu0 0.0
    %2709 = vmatprep.subr.mxu0 0.0
    %2710 = vmatpush2.msra.mxu0 0.0
    %2711 = vmatprep.mubr.f32.mxu0 0.0
    %2712 = vmatmul.mubr.f32.gmra.mxu0 %v2645
    %v2713 = vpop.f32.mrf.mxu0
    %v2714 = vadd.f32 0.0, %v2713
    %v2715 = vpop.f32.mrf.mxu0
    %v2716 = vadd.f32 0.0, %v2715
    %2717 = vdwg.mxu0
    %v2719 = vsel %vm56, %v2643, 0
    %2721 = vmatprep.subr.mxu0 0.0
    %2722 = vmatpush1.msra.mxu0 0.0
    %2723 = vmatprep.subr.mxu0 0.0
    %2724 = vmatpush1.msra.mxu0 0.0
    %2725 = vmatprep.subr.mxu0 0.0
    %2726 = vmatpush1.msra.mxu0 0.0
    %2727 = vmatprep.subr.mxu0 0.0
    %2728 = vmatpush1.msra.mxu0 0.0
    %2729 = vmatprep.subr.mxu0 0.0
    %2730 = vmatpush1.msra.mxu0 0.0
    %2731 = vmatprep.subr.mxu0 0.0
    %2732 = vmatpush1.msra.mxu0 0.0
    %2733 = vmatprep.subr.mxu0 0.0
    %2734 = vmatpush1.msra.mxu0 0.0
    %2735 = vmatprep.subr.mxu0 0.0
    %2736 = vmatpush1.msra.mxu0 0.0
    %2737 = vmatprep.subr.mxu0 %v2068
    %2738 = vmatpush1.msra.mxu0 %v2067
    %2739 = vmatprep.subr.mxu0 %v2066
    %2740 = vmatpush1.msra.mxu0 %v2065
    %2741 = vmatprep.subr.mxu0 %v2064
    %2742 = vmatpush1.msra.mxu0 %v2063
    %2743 = vmatprep.subr.mxu0 %v2062
    %2744 = vmatpush1.msra.mxu0 %v2061
    %2745 = vmatprep.subr.mxu0 %v2060
    %2746 = vmatpush1.msra.mxu0 %v2059
    %2747 = vmatprep.subr.mxu0 %v2058
    %2748 = vmatpush1.msra.mxu0 %v2057
    %2749 = vmatprep.subr.mxu0 %v2056
    %2750 = vmatpush1.msra.mxu0 %v2055
    %2751 = vmatprep.subr.mxu0 %v2054
    %2752 = vmatpush1.msra.mxu0 %v2053
    %2753 = vmatprep.subr.mxu0 0.0
    %2754 = vmatpush2.msra.mxu0 0.0
    %2755 = vmatprep.subr.mxu0 0.0
    %2756 = vmatpush2.msra.mxu0 0.0
    %2757 = vmatprep.subr.mxu0 0.0
    %2758 = vmatpush2.msra.mxu0 0.0
    %2759 = vmatprep.subr.mxu0 0.0
    %2760 = vmatpush2.msra.mxu0 0.0
    %2761 = vmatprep.subr.mxu0 0.0
    %2762 = vmatpush2.msra.mxu0 0.0
    %2763 = vmatprep.subr.mxu0 0.0
    %2764 = vmatpush2.msra.mxu0 0.0
    %2765 = vmatprep.subr.mxu0 0.0
    %2766 = vmatpush2.msra.mxu0 0.0
    %2767 = vmatprep.subr.mxu0 0.0
    %2768 = vmatpush2.msra.mxu0 0.0
    %2769 = vmatprep.subr.mxu0 0.0
    %2770 = vmatpush2.msra.mxu0 0.0
    %2771 = vmatprep.subr.mxu0 0.0
    %2772 = vmatpush2.msra.mxu0 0.0
    %2773 = vmatprep.subr.mxu0 0.0
    %2774 = vmatpush2.msra.mxu0 0.0
    %2775 = vmatprep.subr.mxu0 0.0
    %2776 = vmatpush2.msra.mxu0 0.0
    %2777 = vmatprep.subr.mxu0 0.0
    %2778 = vmatpush2.msra.mxu0 0.0
    %2779 = vmatprep.subr.mxu0 0.0
    %2780 = vmatpush2.msra.mxu0 0.0
    %2781 = vmatprep.subr.mxu0 0.0
    %2782 = vmatpush2.msra.mxu0 0.0
    %2783 = vmatprep.subr.mxu0 0.0
    %2784 = vmatpush2.msra.mxu0 0.0
    %2785 = vmatprep.mubr.f32.mxu0 0.0
    %2786 = vmatmul.mubr.f32.gmra.mxu0 %v2719
    %v2787 = vpop.f32.mrf.mxu0
    %v2788 = vadd.f32 %v2714, %v2787
    %v2789 = vpop.f32.mrf.mxu0
    %v2790 = vadd.f32 %v2716, %v2789
    %2791 = vdwg.mxu0
    %v2792 = vadd.f32 %v2788, %v1926
    %v2793 = vadd.f32 %v2790, %v1930
    %v2794 = vxor.u32 %v2792, 2147483648
    %v2795 = vxor.u32 %v2793, 2147483648
    %v2796 = vmul.f32 %v2794, 1.442695
    %v2797 = vpow.pop %v2796
    %v2798 = vmul.f32 %v2795, 1.442695
    %v2799 = vpow.pop %v2798
    %v2800 = vadd.f32 %v2797, 1.0
    %v2801 = vadd.f32 %v2799, 1.0
    %v2802 = vrcp.pop %v2800
    %v2803 = vmul.f32 1.0, %v2802
    %v2804 = vrcp.pop %v2801
    %v2805 = vmul.f32 1.0, %v2804
    %v2806 = vtanh.pop %v2793
    %v2807 = vmul.f32 %v2803, %v2536
    %2809 = vrot.lane.b32.xlu0 %v2806, 64
    %v2810 = vpop.permute.xlu0 %2809
    %v2812 = vmul.f32 %v2803, %v2810
    %2814 = vrot.lane.b32.xlu0 %v2812, 64
    %v2815 = vpop.permute.xlu0 %2814
    %v2817 = vadd.f32 %v2807, %v2815
    %v2818 = vtanh.pop %v2817
    %2820 = vrot.lane.b32.xlu0 %v2818, 64
    %v2821 = vpop.permute.xlu0 %2820
    %v2823 = vmul.f32 %v2805, %v2821
    %2824 = vmatprep.subr.mxu0 0.0
    %2825 = vmatpush1.msra.mxu0 0.0
    %2826 = vmatprep.subr.mxu0 0.0
    %2827 = vmatpush1.msra.mxu0 0.0
    %2828 = vmatprep.subr.mxu0 0.0
    %2829 = vmatpush1.msra.mxu0 0.0
    %2830 = vmatprep.subr.mxu0 0.0
    %2831 = vmatpush1.msra.mxu0 0.0
    %2832 = vmatprep.subr.mxu0 0.0
    %2833 = vmatpush1.msra.mxu0 0.0
    %2834 = vmatprep.subr.mxu0 0.0
    %2835 = vmatpush1.msra.mxu0 0.0
    %2836 = vmatprep.subr.mxu0 0.0
    %2837 = vmatpush1.msra.mxu0 0.0
    %2838 = vmatprep.subr.mxu0 0.0
    %2839 = vmatpush1.msra.mxu0 0.0
    %2840 = vmatprep.subr.mxu0 %v1948
    %2841 = vmatpush1.msra.mxu0 %v1947
    %2842 = vmatprep.subr.mxu0 %v1946
    %2843 = vmatpush1.msra.mxu0 %v1945
    %2844 = vmatprep.subr.mxu0 %v1944
    %2845 = vmatpush1.msra.mxu0 %v1943
    %2846 = vmatprep.subr.mxu0 %v1942
    %2847 = vmatpush1.msra.mxu0 %v1941
    %2848 = vmatprep.subr.mxu0 %v1940
    %2849 = vmatpush1.msra.mxu0 %v1939
    %2850 = vmatprep.subr.mxu0 %v1938
    %2851 = vmatpush1.msra.mxu0 %v1937
    %2852 = vmatprep.subr.mxu0 %v1936
    %2853 = vmatpush1.msra.mxu0 %v1935
    %2854 = vmatprep.subr.mxu0 %v1934
    %2855 = vmatpush1.msra.mxu0 %v1933
    %2856 = vmatprep.subr.mxu0 0.0
    %2857 = vmatpush2.msra.mxu0 0.0
    %2858 = vmatprep.subr.mxu0 0.0
    %2859 = vmatpush2.msra.mxu0 0.0
    %2860 = vmatprep.subr.mxu0 0.0
    %2861 = vmatpush2.msra.mxu0 0.0
    %2862 = vmatprep.subr.mxu0 0.0
    %2863 = vmatpush2.msra.mxu0 0.0
    %2864 = vmatprep.subr.mxu0 0.0
    %2865 = vmatpush2.msra.mxu0 0.0
    %2866 = vmatprep.subr.mxu0 0.0
    %2867 = vmatpush2.msra.mxu0 0.0
    %2868 = vmatprep.subr.mxu0 0.0
    %2869 = vmatpush2.msra.mxu0 0.0
    %2870 = vmatprep.subr.mxu0 0.0
    %2871 = vmatpush2.msra.mxu0 0.0
    %2872 = vmatprep.subr.mxu0 0.0
    %2873 = vmatpush2.msra.mxu0 0.0
    %2874 = vmatprep.subr.mxu0 0.0
    %2875 = vmatpush2.msra.mxu0 0.0
    %2876 = vmatprep.subr.mxu0 0.0
    %2877 = vmatpush2.msra.mxu0 0.0
    %2878 = vmatprep.subr.mxu0 0.0
    %2879 = vmatpush2.msra.mxu0 0.0
    %2880 = vmatprep.subr.mxu0 0.0
    %2881 = vmatpush2.msra.mxu0 0.0
    %2882 = vmatprep.subr.mxu0 0.0
    %2883 = vmatpush2.msra.mxu0 0.0
    %2884 = vmatprep.subr.mxu0 0.0
    %2885 = vmatpush2.msra.mxu0 0.0
    %2886 = vmatprep.subr.mxu0 0.0
    %2887 = vmatpush2.msra.mxu0 0.0
    %2888 = vmatprep.mubr.f32.mxu0 0.0
    %2889 = vmatmul.mubr.f32.gmra.mxu0 %v2719
    %v2890 = vpop.f32.mrf.mxu0
    %v2891 = vadd.f32 %v1913, %v2890
    %v2892 = vpop.f32.mrf.mxu0
    %v2893 = vadd.f32 %v1917, %v2892
    %2894 = vdwg.mxu0
    %v2895 = vxor.u32 %v2891, 2147483648
    %v2896 = vxor.u32 %v2893, 2147483648
    %v2897 = vmul.f32 %v2895, 1.442695
    %v2898 = vpow.pop %v2897
    %v2899 = vmul.f32 %v2896, 1.442695
    %v2900 = vpow.pop %v2899
    %v2901 = vadd.f32 %v2898, 1.0
    %v2902 = vadd.f32 %v2900, 1.0
    %v2903 = vrcp.pop %v2901
    %v2904 = vmul.f32 1.0, %v2903
    %v2905 = vrcp.pop %v2902
    %v2906 = vmul.f32 1.0, %v2905
    %v2907 = vtanh.pop %v2893
    %v2908 = vmul.f32 %v2904, %v2637
    %2910 = vrot.lane.b32.xlu0 %v2907, 64
    %v2911 = vpop.permute.xlu0 %2910
    %v2913 = vmul.f32 %v2904, %v2911
    %2915 = vrot.lane.b32.xlu0 %v2913, 64
    %v2916 = vpop.permute.xlu0 %2915
    %v2918 = vadd.f32 %v2908, %v2916
    %v2919 = vtanh.pop %v2918
    %2921 = vrot.lane.b32.xlu0 %v2919, 64
    %v2922 = vpop.permute.xlu0 %2921
    %v2924 = vmul.f32 %v2906, %v2922
    %v2926 = vsel %vm56, %v2823, 0
    %2928 = vmatprep.subr.mxu0 0.0
    %2929 = vmatpush1.msra.mxu0 0.0
    %2930 = vmatprep.subr.mxu0 0.0
    %2931 = vmatpush1.msra.mxu0 0.0
    %2932 = vmatprep.subr.mxu0 0.0
    %2933 = vmatpush1.msra.mxu0 0.0
    %2934 = vmatprep.subr.mxu0 0.0
    %2935 = vmatpush1.msra.mxu0 0.0
    %2936 = vmatprep.subr.mxu0 0.0
    %2937 = vmatpush1.msra.mxu0 0.0
    %2938 = vmatprep.subr.mxu0 0.0
    %2939 = vmatpush1.msra.mxu0 0.0
    %2940 = vmatprep.subr.mxu0 0.0
    %2941 = vmatpush1.msra.mxu0 0.0
    %2942 = vmatprep.subr.mxu0 0.0
    %2943 = vmatpush1.msra.mxu0 0.0
    %2944 = vmatprep.subr.mxu0 %v2084
    %2945 = vmatpush1.msra.mxu0 %v2083
    %2946 = vmatprep.subr.mxu0 %v2082
    %2947 = vmatpush1.msra.mxu0 %v2081
    %2948 = vmatprep.subr.mxu0 %v2080
    %2949 = vmatpush1.msra.mxu0 %v2079
    %2950 = vmatprep.subr.mxu0 %v2078
    %2951 = vmatpush1.msra.mxu0 %v2077
    %2952 = vmatprep.subr.mxu0 %v2076
    %2953 = vmatpush1.msra.mxu0 %v2075
    %2954 = vmatprep.subr.mxu0 %v2074
    %2955 = vmatpush1.msra.mxu0 %v2073
    %2956 = vmatprep.subr.mxu0 %v2072
    %2957 = vmatpush1.msra.mxu0 %v2071
    %2958 = vmatprep.subr.mxu0 %v2070
    %2959 = vmatpush1.msra.mxu0 %v2069
    %2960 = vmatprep.subr.mxu0 0.0
    %2961 = vmatpush2.msra.mxu0 0.0
    %2962 = vmatprep.subr.mxu0 0.0
    %2963 = vmatpush2.msra.mxu0 0.0
    %2964 = vmatprep.subr.mxu0 0.0
    %2965 = vmatpush2.msra.mxu0 0.0
    %2966 = vmatprep.subr.mxu0 0.0
    %2967 = vmatpush2.msra.mxu0 0.0
    %2968 = vmatprep.subr.mxu0 0.0
    %2969 = vmatpush2.msra.mxu0 0.0
    %2970 = vmatprep.subr.mxu0 0.0
    %2971 = vmatpush2.msra.mxu0 0.0
    %2972 = vmatprep.subr.mxu0 0.0
    %2973 = vmatpush2.msra.mxu0 0.0
    %2974 = vmatprep.subr.mxu0 0.0
    %2975 = vmatpush2.msra.mxu0 0.0
    %2976 = vmatprep.subr.mxu0 0.0
    %2977 = vmatpush2.msra.mxu0 0.0
    %2978 = vmatprep.subr.mxu0 0.0
    %2979 = vmatpush2.msra.mxu0 0.0
    %2980 = vmatprep.subr.mxu0 0.0
    %2981 = vmatpush2.msra.mxu0 0.0
    %2982 = vmatprep.subr.mxu0 0.0
    %2983 = vmatpush2.msra.mxu0 0.0
    %2984 = vmatprep.subr.mxu0 0.0
    %2985 = vmatpush2.msra.mxu0 0.0
    %2986 = vmatprep.subr.mxu0 0.0
    %2987 = vmatpush2.msra.mxu0 0.0
    %2988 = vmatprep.subr.mxu0 0.0
    %2989 = vmatpush2.msra.mxu0 0.0
    %2990 = vmatprep.subr.mxu0 0.0
    %2991 = vmatpush2.msra.mxu0 0.0
    %2992 = vmatprep.mubr.f32.mxu0 0.0
    %2993 = vmatmul.mubr.f32.gmra.mxu0 %v2926
    %v2994 = vpop.f32.mrf.mxu0
    %v2995 = vadd.f32 0.0, %v2994
    %v2996 = vpop.f32.mrf.mxu0
    %v2997 = vadd.f32 0.0, %v2996
    %2998 = vdwg.mxu0
    %v3000 = vsel %vm56, %v2924, 0
    %3002 = vmatprep.subr.mxu0 0.0
    %3003 = vmatpush1.msra.mxu0 0.0
    %3004 = vmatprep.subr.mxu0 0.0
    %3005 = vmatpush1.msra.mxu0 0.0
    %3006 = vmatprep.subr.mxu0 0.0
    %3007 = vmatpush1.msra.mxu0 0.0
    %3008 = vmatprep.subr.mxu0 0.0
    %3009 = vmatpush1.msra.mxu0 0.0
    %3010 = vmatprep.subr.mxu0 0.0
    %3011 = vmatpush1.msra.mxu0 0.0
    %3012 = vmatprep.subr.mxu0 0.0
    %3013 = vmatpush1.msra.mxu0 0.0
    %3014 = vmatprep.subr.mxu0 0.0
    %3015 = vmatpush1.msra.mxu0 0.0
    %3016 = vmatprep.subr.mxu0 0.0
    %3017 = vmatpush1.msra.mxu0 0.0
    %3018 = vmatprep.subr.mxu0 %v2068
    %3019 = vmatpush1.msra.mxu0 %v2067
    %3020 = vmatprep.subr.mxu0 %v2066
    %3021 = vmatpush1.msra.mxu0 %v2065
    %3022 = vmatprep.subr.mxu0 %v2064
    %3023 = vmatpush1.msra.mxu0 %v2063
    %3024 = vmatprep.subr.mxu0 %v2062
    %3025 = vmatpush1.msra.mxu0 %v2061
    %3026 = vmatprep.subr.mxu0 %v2060
    %3027 = vmatpush1.msra.mxu0 %v2059
    %3028 = vmatprep.subr.mxu0 %v2058
    %3029 = vmatpush1.msra.mxu0 %v2057
    %3030 = vmatprep.subr.mxu0 %v2056
    %3031 = vmatpush1.msra.mxu0 %v2055
    %3032 = vmatprep.subr.mxu0 %v2054
    %3033 = vmatpush1.msra.mxu0 %v2053
    %3034 = vmatprep.subr.mxu0 0.0
    %3035 = vmatpush2.msra.mxu0 0.0
    %3036 = vmatprep.subr.mxu0 0.0
    %3037 = vmatpush2.msra.mxu0 0.0
    %3038 = vmatprep.subr.mxu0 0.0
    %3039 = vmatpush2.msra.mxu0 0.0
    %3040 = vmatprep.subr.mxu0 0.0
    %3041 = vmatpush2.msra.mxu0 0.0
    %3042 = vmatprep.subr.mxu0 0.0
    %3043 = vmatpush2.msra.mxu0 0.0
    %3044 = vmatprep.subr.mxu0 0.0
    %3045 = vmatpush2.msra.mxu0 0.0
    %3046 = vmatprep.subr.mxu0 0.0
    %3047 = vmatpush2.msra.mxu0 0.0
    %3048 = vmatprep.subr.mxu0 0.0
    %3049 = vmatpush2.msra.mxu0 0.0
    %3050 = vmatprep.subr.mxu0 0.0
    %3051 = vmatpush2.msra.mxu0 0.0
    %3052 = vmatprep.subr.mxu0 0.0
    %3053 = vmatpush2.msra.mxu0 0.0
    %3054 = vmatprep.subr.mxu0 0.0
    %3055 = vmatpush2.msra.mxu0 0.0
    %3056 = vmatprep.subr.mxu0 0.0
    %3057 = vmatpush2.msra.mxu0 0.0
    %3058 = vmatprep.subr.mxu0 0.0
    %3059 = vmatpush2.msra.mxu0 0.0
    %3060 = vmatprep.subr.mxu0 0.0
    %3061 = vmatpush2.msra.mxu0 0.0
    %3062 = vmatprep.subr.mxu0 0.0
    %3063 = vmatpush2.msra.mxu0 0.0
    %3064 = vmatprep.subr.mxu0 0.0
    %3065 = vmatpush2.msra.mxu0 0.0
    %3066 = vmatprep.mubr.f32.mxu0 0.0
    %3067 = vmatmul.mubr.f32.gmra.mxu0 %v3000
    %v3068 = vpop.f32.mrf.mxu0
    %v3069 = vadd.f32 %v2995, %v3068
    %v3070 = vpop.f32.mrf.mxu0
    %v3071 = vadd.f32 %v2997, %v3070
    %3072 = vdwg.mxu0
    %v3073 = vadd.f32 %v3069, %v1926
    %v3074 = vadd.f32 %v3071, %v1930
    %v3075 = vxor.u32 %v3073, 2147483648
    %v3076 = vxor.u32 %v3074, 2147483648
    %v3077 = vmul.f32 %v3075, 1.442695
    %v3078 = vpow.pop %v3077
    %v3079 = vmul.f32 %v3076, 1.442695
    %v3080 = vpow.pop %v3079
    %v3081 = vadd.f32 %v3078, 1.0
    %v3082 = vadd.f32 %v3080, 1.0
    %v3083 = vrcp.pop %v3081
    %v3084 = vmul.f32 1.0, %v3083
    %v3085 = vrcp.pop %v3082
    %v3086 = vmul.f32 1.0, %v3085
    %v3087 = vtanh.pop %v3074
    %v3088 = vmul.f32 %v3084, %v2817
    %3090 = vrot.lane.b32.xlu0 %v3087, 64
    %v3091 = vpop.permute.xlu0 %3090
    %v3093 = vmul.f32 %v3084, %v3091
    %3095 = vrot.lane.b32.xlu0 %v3093, 64
    %v3096 = vpop.permute.xlu0 %3095
    %v3098 = vadd.f32 %v3088, %v3096
    %v3099 = vtanh.pop %v3098
    %3101 = vrot.lane.b32.xlu0 %v3099, 64
    %v3102 = vpop.permute.xlu0 %3101
    %v3104 = vmul.f32 %v3086, %v3102
    %3105 = vmatprep.subr.mxu0 0.0
    %3106 = vmatpush1.msra.mxu0 0.0
    %3107 = vmatprep.subr.mxu0 0.0
    %3108 = vmatpush1.msra.mxu0 0.0
    %3109 = vmatprep.subr.mxu0 0.0
    %3110 = vmatpush1.msra.mxu0 0.0
    %3111 = vmatprep.subr.mxu0 0.0
    %3112 = vmatpush1.msra.mxu0 0.0
    %3113 = vmatprep.subr.mxu0 0.0
    %3114 = vmatpush1.msra.mxu0 0.0
    %3115 = vmatprep.subr.mxu0 0.0
    %3116 = vmatpush1.msra.mxu0 0.0
    %3117 = vmatprep.subr.mxu0 0.0
    %3118 = vmatpush1.msra.mxu0 0.0
    %3119 = vmatprep.subr.mxu0 0.0
    %3120 = vmatpush1.msra.mxu0 0.0
    %3121 = vmatprep.subr.mxu0 %v1948
    %3122 = vmatpush1.msra.mxu0 %v1947
    %3123 = vmatprep.subr.mxu0 %v1946
    %3124 = vmatpush1.msra.mxu0 %v1945
    %3125 = vmatprep.subr.mxu0 %v1944
    %3126 = vmatpush1.msra.mxu0 %v1943
    %3127 = vmatprep.subr.mxu0 %v1942
    %3128 = vmatpush1.msra.mxu0 %v1941
    %3129 = vmatprep.subr.mxu0 %v1940
    %3130 = vmatpush1.msra.mxu0 %v1939
    %3131 = vmatprep.subr.mxu0 %v1938
    %3132 = vmatpush1.msra.mxu0 %v1937
    %3133 = vmatprep.subr.mxu0 %v1936
    %3134 = vmatpush1.msra.mxu0 %v1935
    %3135 = vmatprep.subr.mxu0 %v1934
    %3136 = vmatpush1.msra.mxu0 %v1933
    %3137 = vmatprep.subr.mxu0 0.0
    %3138 = vmatpush2.msra.mxu0 0.0
    %3139 = vmatprep.subr.mxu0 0.0
    %3140 = vmatpush2.msra.mxu0 0.0
    %3141 = vmatprep.subr.mxu0 0.0
    %3142 = vmatpush2.msra.mxu0 0.0
    %3143 = vmatprep.subr.mxu0 0.0
    %3144 = vmatpush2.msra.mxu0 0.0
    %3145 = vmatprep.subr.mxu0 0.0
    %3146 = vmatpush2.msra.mxu0 0.0
    %3147 = vmatprep.subr.mxu0 0.0
    %3148 = vmatpush2.msra.mxu0 0.0
    %3149 = vmatprep.subr.mxu0 0.0
    %3150 = vmatpush2.msra.mxu0 0.0
    %3151 = vmatprep.subr.mxu0 0.0
    %3152 = vmatpush2.msra.mxu0 0.0
    %3153 = vmatprep.subr.mxu0 0.0
    %3154 = vmatpush2.msra.mxu0 0.0
    %3155 = vmatprep.subr.mxu0 0.0
    %3156 = vmatpush2.msra.mxu0 0.0
    %3157 = vmatprep.subr.mxu0 0.0
    %3158 = vmatpush2.msra.mxu0 0.0
    %3159 = vmatprep.subr.mxu0 0.0
    %3160 = vmatpush2.msra.mxu0 0.0
    %3161 = vmatprep.subr.mxu0 0.0
    %3162 = vmatpush2.msra.mxu0 0.0
    %3163 = vmatprep.subr.mxu0 0.0
    %3164 = vmatpush2.msra.mxu0 0.0
    %3165 = vmatprep.subr.mxu0 0.0
    %3166 = vmatpush2.msra.mxu0 0.0
    %3167 = vmatprep.subr.mxu0 0.0
    %3168 = vmatpush2.msra.mxu0 0.0
    %3169 = vmatprep.mubr.f32.mxu0 0.0
    %3170 = vmatmul.mubr.f32.gmra.mxu0 %v3000
    %v3171 = vpop.f32.mrf.mxu0
    %v3172 = vadd.f32 %v1913, %v3171
    %v3173 = vpop.f32.mrf.mxu0
    %v3174 = vadd.f32 %v1917, %v3173
    %3175 = vdwg.mxu0
    %v3176 = vxor.u32 %v3172, 2147483648
    %v3177 = vxor.u32 %v3174, 2147483648
    %v3178 = vmul.f32 %v3176, 1.442695
    %v3179 = vpow.pop %v3178
    %v3180 = vmul.f32 %v3177, 1.442695
    %v3181 = vpow.pop %v3180
    %v3182 = vadd.f32 %v3179, 1.0
    %v3183 = vadd.f32 %v3181, 1.0
    %v3184 = vrcp.pop %v3182
    %v3185 = vmul.f32 1.0, %v3184
    %v3186 = vrcp.pop %v3183
    %v3187 = vmul.f32 1.0, %v3186
    %v3188 = vtanh.pop %v3174
    %v3189 = vmul.f32 %v3185, %v2918
    %3191 = vrot.lane.b32.xlu0 %v3188, 64
    %v3192 = vpop.permute.xlu0 %3191
    %v3194 = vmul.f32 %v3185, %v3192
    %3196 = vrot.lane.b32.xlu0 %v3194, 64
    %v3197 = vpop.permute.xlu0 %3196
    %v3199 = vadd.f32 %v3189, %v3197
    %v3200 = vtanh.pop %v3199
    %3202 = vrot.lane.b32.xlu0 %v3200, 64
    %v3203 = vpop.permute.xlu0 %3202
    %v3205 = vmul.f32 %v3187, %v3203
    %v3207 = vsel %vm56, %v3104, 0
    %3209 = vmatprep.subr.mxu0 0.0
    %3210 = vmatpush1.msra.mxu0 0.0
    %3211 = vmatprep.subr.mxu0 0.0
    %3212 = vmatpush1.msra.mxu0 0.0
    %3213 = vmatprep.subr.mxu0 0.0
    %3214 = vmatpush1.msra.mxu0 0.0
    %3215 = vmatprep.subr.mxu0 0.0
    %3216 = vmatpush1.msra.mxu0 0.0
    %3217 = vmatprep.subr.mxu0 0.0
    %3218 = vmatpush1.msra.mxu0 0.0
    %3219 = vmatprep.subr.mxu0 0.0
    %3220 = vmatpush1.msra.mxu0 0.0
    %3221 = vmatprep.subr.mxu0 0.0
    %3222 = vmatpush1.msra.mxu0 0.0
    %3223 = vmatprep.subr.mxu0 0.0
    %3224 = vmatpush1.msra.mxu0 0.0
    %3225 = vmatprep.subr.mxu0 %v2084
    %3226 = vmatpush1.msra.mxu0 %v2083
    %3227 = vmatprep.subr.mxu0 %v2082
    %3228 = vmatpush1.msra.mxu0 %v2081
    %3229 = vmatprep.subr.mxu0 %v2080
    %3230 = vmatpush1.msra.mxu0 %v2079
    %3231 = vmatprep.subr.mxu0 %v2078
    %3232 = vmatpush1.msra.mxu0 %v2077
    %3233 = vmatprep.subr.mxu0 %v2076
    %3234 = vmatpush1.msra.mxu0 %v2075
    %3235 = vmatprep.subr.mxu0 %v2074
    %3236 = vmatpush1.msra.mxu0 %v2073
    %3237 = vmatprep.subr.mxu0 %v2072
    %3238 = vmatpush1.msra.mxu0 %v2071
    %3239 = vmatprep.subr.mxu0 %v2070
    %3240 = vmatpush1.msra.mxu0 %v2069
    %3241 = vmatprep.subr.mxu0 0.0
    %3242 = vmatpush2.msra.mxu0 0.0
    %3243 = vmatprep.subr.mxu0 0.0
    %3244 = vmatpush2.msra.mxu0 0.0
    %3245 = vmatprep.subr.mxu0 0.0
    %3246 = vmatpush2.msra.mxu0 0.0
    %3247 = vmatprep.subr.mxu0 0.0
    %3248 = vmatpush2.msra.mxu0 0.0
    %3249 = vmatprep.subr.mxu0 0.0
    %3250 = vmatpush2.msra.mxu0 0.0
    %3251 = vmatprep.subr.mxu0 0.0
    %3252 = vmatpush2.msra.mxu0 0.0
    %3253 = vmatprep.subr.mxu0 0.0
    %3254 = vmatpush2.msra.mxu0 0.0
    %3255 = vmatprep.subr.mxu0 0.0
    %3256 = vmatpush2.msra.mxu0 0.0
    %3257 = vmatprep.subr.mxu0 0.0
    %3258 = vmatpush2.msra.mxu0 0.0
    %3259 = vmatprep.subr.mxu0 0.0
    %3260 = vmatpush2.msra.mxu0 0.0
    %3261 = vmatprep.subr.mxu0 0.0
    %3262 = vmatpush2.msra.mxu0 0.0
    %3263 = vmatprep.subr.mxu0 0.0
    %3264 = vmatpush2.msra.mxu0 0.0
    %3265 = vmatprep.subr.mxu0 0.0
    %3266 = vmatpush2.msra.mxu0 0.0
    %3267 = vmatprep.subr.mxu0 0.0
    %3268 = vmatpush2.msra.mxu0 0.0
    %3269 = vmatprep.subr.mxu0 0.0
    %3270 = vmatpush2.msra.mxu0 0.0
    %3271 = vmatprep.subr.mxu0 0.0
    %3272 = vmatpush2.msra.mxu0 0.0
    %3273 = vmatprep.mubr.f32.mxu0 0.0
    %3274 = vmatmul.mubr.f32.gmra.mxu0 %v3207
    %v3275 = vpop.f32.mrf.mxu0
    %v3276 = vadd.f32 0.0, %v3275
    %v3277 = vpop.f32.mrf.mxu0
    %v3278 = vadd.f32 0.0, %v3277
    %3279 = vdwg.mxu0
    %v3281 = vsel %vm56, %v3205, 0
    %3283 = vmatprep.subr.mxu0 0.0
    %3284 = vmatpush1.msra.mxu0 0.0
    %3285 = vmatprep.subr.mxu0 0.0
    %3286 = vmatpush1.msra.mxu0 0.0
    %3287 = vmatprep.subr.mxu0 0.0
    %3288 = vmatpush1.msra.mxu0 0.0
    %3289 = vmatprep.subr.mxu0 0.0
    %3290 = vmatpush1.msra.mxu0 0.0
    %3291 = vmatprep.subr.mxu0 0.0
    %3292 = vmatpush1.msra.mxu0 0.0
    %3293 = vmatprep.subr.mxu0 0.0
    %3294 = vmatpush1.msra.mxu0 0.0
    %3295 = vmatprep.subr.mxu0 0.0
    %3296 = vmatpush1.msra.mxu0 0.0
    %3297 = vmatprep.subr.mxu0 0.0
    %3298 = vmatpush1.msra.mxu0 0.0
    %3299 = vmatprep.subr.mxu0 %v2068
    %3300 = vmatpush1.msra.mxu0 %v2067
    %3301 = vmatprep.subr.mxu0 %v2066
    %3302 = vmatpush1.msra.mxu0 %v2065
    %3303 = vmatprep.subr.mxu0 %v2064
    %3304 = vmatpush1.msra.mxu0 %v2063
    %3305 = vmatprep.subr.mxu0 %v2062
    %3306 = vmatpush1.msra.mxu0 %v2061
    %3307 = vmatprep.subr.mxu0 %v2060
    %3308 = vmatpush1.msra.mxu0 %v2059
    %3309 = vmatprep.subr.mxu0 %v2058
    %3310 = vmatpush1.msra.mxu0 %v2057
    %3311 = vmatprep.subr.mxu0 %v2056
    %3312 = vmatpush1.msra.mxu0 %v2055
    %3313 = vmatprep.subr.mxu0 %v2054
    %3314 = vmatpush1.msra.mxu0 %v2053
    %3315 = vmatprep.subr.mxu0 0.0
    %3316 = vmatpush2.msra.mxu0 0.0
    %3317 = vmatprep.subr.mxu0 0.0
    %3318 = vmatpush2.msra.mxu0 0.0
    %3319 = vmatprep.subr.mxu0 0.0
    %3320 = vmatpush2.msra.mxu0 0.0
    %3321 = vmatprep.subr.mxu0 0.0
    %3322 = vmatpush2.msra.mxu0 0.0
    %3323 = vmatprep.subr.mxu0 0.0
    %3324 = vmatpush2.msra.mxu0 0.0
    %3325 = vmatprep.subr.mxu0 0.0
    %3326 = vmatpush2.msra.mxu0 0.0
    %3327 = vmatprep.subr.mxu0 0.0
    %3328 = vmatpush2.msra.mxu0 0.0
    %3329 = vmatprep.subr.mxu0 0.0
    %3330 = vmatpush2.msra.mxu0 0.0
    %3331 = vmatprep.subr.mxu0 0.0
    %3332 = vmatpush2.msra.mxu0 0.0
    %3333 = vmatprep.subr.mxu0 0.0
    %3334 = vmatpush2.msra.mxu0 0.0
    %3335 = vmatprep.subr.mxu0 0.0
    %3336 = vmatpush2.msra.mxu0 0.0
    %3337 = vmatprep.subr.mxu0 0.0
    %3338 = vmatpush2.msra.mxu0 0.0
    %3339 = vmatprep.subr.mxu0 0.0
    %3340 = vmatpush2.msra.mxu0 0.0
    %3341 = vmatprep.subr.mxu0 0.0
    %3342 = vmatpush2.msra.mxu0 0.0
    %3343 = vmatprep.subr.mxu0 0.0
    %3344 = vmatpush2.msra.mxu0 0.0
    %3345 = vmatprep.subr.mxu0 0.0
    %3346 = vmatpush2.msra.mxu0 0.0
    %3347 = vmatprep.mubr.f32.mxu0 0.0
    %3348 = vmatmul.mubr.f32.gmra.mxu0 %v3281
    %v3349 = vpop.f32.mrf.mxu0
    %v3350 = vadd.f32 %v3276, %v3349
    %v3351 = vpop.f32.mrf.mxu0
    %v3352 = vadd.f32 %v3278, %v3351
    %3353 = vdwg.mxu0
    %v3354 = vadd.f32 %v3350, %v1926
    %v3355 = vadd.f32 %v3352, %v1930
    %v3356 = vxor.u32 %v3354, 2147483648
    %v3357 = vxor.u32 %v3355, 2147483648
    %v3358 = vmul.f32 %v3356, 1.442695
    %v3359 = vpow.pop %v3358
    %v3360 = vmul.f32 %v3357, 1.442695
    %v3361 = vpow.pop %v3360
    %v3362 = vadd.f32 %v3359, 1.0
    %v3363 = vadd.f32 %v3361, 1.0
    %v3364 = vrcp.pop %v3362
    %v3365 = vmul.f32 1.0, %v3364
    %v3366 = vrcp.pop %v3363
    %v3367 = vmul.f32 1.0, %v3366
    %v3368 = vtanh.pop %v3355
    %v3369 = vmul.f32 %v3365, %v3098
    %3371 = vrot.lane.b32.xlu0 %v3368, 64
    %v3372 = vpop.permute.xlu0 %3371
    %v3374 = vmul.f32 %v3365, %v3372
    %3376 = vrot.lane.b32.xlu0 %v3374, 64
    %v3377 = vpop.permute.xlu0 %3376
    %v3379 = vadd.f32 %v3369, %v3377
    %v3380 = vtanh.pop %v3379
    %3382 = vrot.lane.b32.xlu0 %v3380, 64
    %v3383 = vpop.permute.xlu0 %3382
    %v3385 = vmul.f32 %v3367, %v3383
    %v3386 = vrot.slane %v2542, 6
    %v3388 = vrot.slane %v2823, 4
    %v3390 = vrot.slane %v3104, 2
    %vm3392 = vcmask 1041408
    %v3393 = vsel %vm3392, %v2261, %v3386
    %vm3394 = vcmask 1043456
    %v3395 = vsel %vm3394, %v3393, %v3388
    %vm3396 = vcmask 1045504
    %v3397 = vsel %vm3396, %v3395, %v3390
    %v3398 = vld [vmem:[#allocation2 + $0x600] sm:$0xff]
    %v3399 = vld [vmem:[#allocation2 + $0x610] sm:$0xff]
    %v3400 = vld [vmem:[#allocation2 + $0x620] sm:$0xff]
    %v3401 = vld [vmem:[#allocation2 + $0x630] sm:$0xff]
    %v3402 = vld [vmem:[#allocation2 + $0x640] sm:$0xff]
    %v3403 = vld [vmem:[#allocation2 + $0x650] sm:$0xff]
    %v3404 = vld [vmem:[#allocation2 + $0x660] sm:$0xff]
    %v3405 = vld [vmem:[#allocation2 + $0x670] sm:$0xff]
    %v3406 = vld [vmem:[#allocation2 + $0x6f0] ss:$0 sm:$0xff]
    %v3408 = vsel %vm56, %v3397, 0
    %v3411 = vsel %vm56, %v3385, 0
    %3413 = vmatprep.subr.mxu0 0.0
    %3414 = vmatpush1.msra.mxu0 0.0
    %3415 = vmatprep.subr.mxu0 0.0
    %3416 = vmatpush1.msra.mxu0 0.0
    %3417 = vmatprep.subr.mxu0 0.0
    %3418 = vmatpush1.msra.mxu0 0.0
    %3419 = vmatprep.subr.mxu0 0.0
    %3420 = vmatpush1.msra.mxu0 0.0
    %3421 = vmatprep.subr.mxu0 0.0
    %3422 = vmatpush1.msra.mxu0 0.0
    %3423 = vmatprep.subr.mxu0 0.0
    %3424 = vmatpush1.msra.mxu0 0.0
    %3425 = vmatprep.subr.mxu0 0.0
    %3426 = vmatpush1.msra.mxu0 0.0
    %3427 = vmatprep.subr.mxu0 0.0
    %3428 = vmatpush1.msra.mxu0 0.0
    %3429 = vmatprep.subr.mxu0 0.0
    %3430 = vmatpush1.msra.mxu0 %v3405
    %3431 = vmatprep.subr.mxu0 0.0
    %3432 = vmatpush1.msra.mxu0 %v3404
    %3433 = vmatprep.subr.mxu0 0.0
    %3434 = vmatpush1.msra.mxu0 %v3403
    %3435 = vmatprep.subr.mxu0 0.0
    %3436 = vmatpush1.msra.mxu0 %v3402
    %3437 = vmatprep.subr.mxu0 0.0
    %3438 = vmatpush1.msra.mxu0 %v3401
    %3439 = vmatprep.subr.mxu0 0.0
    %3440 = vmatpush1.msra.mxu0 %v3400
    %3441 = vmatprep.subr.mxu0 0.0
    %3442 = vmatpush1.msra.mxu0 %v3399
    %3443 = vmatprep.subr.mxu0 0.0
    %3444 = vmatpush1.msra.mxu0 %v3398
    %3445 = vmatprep.subr.mxu0 0.0
    %3446 = vmatpush2.msra.mxu0 0.0
    %3447 = vmatprep.subr.mxu0 0.0
    %3448 = vmatpush2.msra.mxu0 0.0
    %3449 = vmatprep.subr.mxu0 0.0
    %3450 = vmatpush2.msra.mxu0 0.0
    %3451 = vmatprep.subr.mxu0 0.0
    %3452 = vmatpush2.msra.mxu0 0.0
    %3453 = vmatprep.subr.mxu0 0.0
    %3454 = vmatpush2.msra.mxu0 0.0
    %3455 = vmatprep.subr.mxu0 0.0
    %3456 = vmatpush2.msra.mxu0 0.0
    %3457 = vmatprep.subr.mxu0 0.0
    %3458 = vmatpush2.msra.mxu0 0.0
    %3459 = vmatprep.subr.mxu0 0.0
    %3460 = vmatpush2.msra.mxu0 0.0
    %3461 = vmatprep.subr.mxu0 0.0
    %3462 = vmatpush2.msra.mxu0 0.0
    %3463 = vmatprep.subr.mxu0 0.0
    %3464 = vmatpush2.msra.mxu0 0.0
    %3465 = vmatprep.subr.mxu0 0.0
    %3466 = vmatpush2.msra.mxu0 0.0
    %3467 = vmatprep.subr.mxu0 0.0
    %3468 = vmatpush2.msra.mxu0 0.0
    %3469 = vmatprep.subr.mxu0 0.0
    %3470 = vmatpush2.msra.mxu0 0.0
    %3471 = vmatprep.subr.mxu0 0.0
    %3472 = vmatpush2.msra.mxu0 0.0
    %3473 = vmatprep.subr.mxu0 0.0
    %3474 = vmatpush2.msra.mxu0 0.0
    %3475 = vmatprep.subr.mxu0 0.0
    %3476 = vmatpush2.msra.mxu0 0.0
    %3477 = vmatprep.mubr.f32.mxu0 0.0
    %3478 = vmatmul.mubr.f32.gmra.mxu0 %v3408
    %v3479 = vpop.f32.mrf.mxu0
    %v3480 = vadd.f32 %v3406, %v3479
    %v3481 = vpop.f32.mrf.mxu0
    %3482 = vmatprep.mubr.f32.mxu0 0.0
    %3483 = vmatmul.mubr.f32.gmra.mxu0 %v3411
    %v3484 = vpop.f32.mrf.mxu0
    %v3485 = vadd.f32 %v3406, %v3484
    %v3486 = vpop.f32.mrf.mxu0
    %3487 = vdwg.mxu0
    %3488 = vst [vmem:[%s2] sm:$0xff] %v3480
    %3489 = vst [vmem:[%s2 + $0x8] sm:$0x3] %v3485
    // Predicated region
    $region14: #{lstm_autoencoder_forward.1} parent=1 // pred_check
      _
    $region15: #{lstm_autoencoder_forward.1} parent=1 // pred_check_branch
      %3491 = sbr.rel (0) target = $region17
    $region16: #{lstm_autoencoder_forward.1} parent=1 // pred_region
      _
    $region17: #{lstm_autoencoder_forward.1} parent=1 // pred_fallthru
      _
    // Predicated region
    $region18: #{lstm_autoencoder_forward.1} parent=1 // pred_check
      _
    $region19: #{lstm_autoencoder_forward.1} parent=1 // pred_check_branch
      %3493 = sbr.rel (0) target = $region21
    $region20: #{lstm_autoencoder_forward.1} parent=1 // pred_region
      _
    $region21: #{lstm_autoencoder_forward.1} parent=1 // pred_fallthru
      _
    %3494 = vsyncpa [#allocation3], 1

</llo_original>
